<compile_context>
chip_gen: v7x
topology: tpu7x:2x2x1
jax: 0.10.0
libtpu: 0.0.40
codegen_flags: <defaults>
</compile_context>

<pallas_src>
import math
from functools import partial

import jax
import jax.numpy as jnp
from jax import lax
from jax.experimental import pallas as pl
from jax.experimental.pallas import tpu as pltpu


# ----------------------------- in-kernel helpers -----------------------------

def _layer_norm(x, gamma, beta, eps=1e-5):
    mu = jnp.mean(x, axis=-1, keepdims=True)
    var = jnp.mean((x - mu) ** 2, axis=-1, keepdims=True)
    return (x - mu) * lax.rsqrt(var + eps) * gamma + beta


def _gelu(x):
    # Exact erf-based GELU (matches torch nn.GELU / activation='gelu').
    return 0.5 * x * (1.0 + lax.erf(x * 0.7071067811865475))


def _bf16(x):
    return x.astype(jnp.bfloat16)


# --------------------------------- fused kernel --------------------------------

def _fused_vit_kernel(B, S, nhead,
                      x_ref, w_in_ref, bpe_ref, mask_ref,
                      wqkv_ref, bqkv_ref, wo_ref, bo_ref,
                      g1_ref, be1_ref, w1_ref, b1_ref, w2_ref, b2_ref,
                      g2_ref, be2_ref,
                      cls_g_ref, cls_b_ref, wc1_ref, bc1_ref, wc2_ref, bc2_ref,
                      logits_ref, attnw_ref, h_ref):
    f32 = jnp.float32
    D = w_in_ref.shape[1]
    hd = D // nhead
    BS = B * S
    layer = pl.program_id(0)

    # ---- grid step 0: input projection + positional encoding into VMEM carry ----
    @pl.when(layer == 0)
    def _():
        h0 = jnp.dot(x_ref[...], w_in_ref[...], preferred_element_type=f32)   # (BS, D)
        # bpe = b_in + pe[:S] pre-summed at pack time; broadcast over batch slabs.
        h_ref[...] = (h0.reshape(B, S, D) + bpe_ref[...]).reshape(BS, D)

    h = h_ref[...]                                        # (BS, D) f32 residual carry

    # ---- multi-head self-attention: fused QKV, block-masked softmax ----
    xb = _bf16(h)
    qkv = jnp.dot(xb, wqkv_ref[0], preferred_element_type=f32) + bqkv_ref[0]  # (BS, 3D)
    mask = mask_ref[...]                                  # (BS, BS) block-diag additive mask

    oh = []
    for hh in range(nhead):
        # 1/sqrt(hd) scale is folded into the Q slice of wqkv/bqkv at pack time.
        q = _bf16(qkv[:, hh * hd:(hh + 1) * hd])
        k = _bf16(qkv[:, D + hh * hd:D + (hh + 1) * hd])
        v = _bf16(qkv[:, 2 * D + hh * hd:2 * D + (hh + 1) * hd])
        s = lax.dot_general(q, k, (((1,), (1,)), ((), ())),
                            preferred_element_type=f32) + mask        # (BS, BS)
        s = s - jnp.max(s, axis=-1, keepdims=True)
        p = jnp.exp(s)
        p = p * pl.reciprocal(jnp.sum(p, axis=-1, keepdims=True), approx=True)
        oh.append(jnp.dot(_bf16(p), v, preferred_element_type=f32))   # (BS, hd)
    o_cat = jnp.concatenate(oh, axis=-1)                  # (BS, D): lane concat of heads
    attn = jnp.dot(_bf16(o_cat), wo_ref[0], preferred_element_type=f32) + bo_ref[0]

    # residual + LayerNorm1 (fp32)
    x1 = _layer_norm(h + attn, g1_ref[0], be1_ref[0])

    # feed-forward (GELU), bf16 operands / fp32 accumulate
    hid = _gelu(jnp.dot(_bf16(x1), w1_ref[0], preferred_element_type=f32) + b1_ref[0])
    ffn = jnp.dot(_bf16(hid), w2_ref[0], preferred_element_type=f32) + b2_ref[0]

    # residual + LayerNorm2 (fp32) -> carry to next layer
    h_new = _layer_norm(x1 + ffn, g2_ref[0], be2_ref[0])
    h_ref[...] = h_new

    # ---- last grid step: mean pool over sequence + classifier head ----
    @pl.when(layer == pl.num_programs(0) - 1)
    def _():
        pooled = jnp.mean(h_new.reshape(B, S, D), axis=1)             # (B, D)
        attnw_ref[...] = pooled                                       # torch.mean(encoded, dim=1)
        y = _layer_norm(pooled, cls_g_ref[...], cls_b_ref[...])
        hc = _gelu(jnp.dot(_bf16(y), wc1_ref[...], preferred_element_type=f32) + bc1_ref[...])
        logits_ref[...] = jnp.dot(_bf16(hc), wc2_ref[...], preferred_element_type=f32) + bc2_ref[...]


# ------------------------------ pallas wrapper ---------------------------------

@partial(jax.jit, static_argnames=("nhead",))
def gesture_vit_forward(packed, x, *, nhead):
    """x: (B, S, input_dim) f32. Returns (logits_padded (B, C_pad), attn_weights (B, D))."""
    B, S, Din = x.shape
    D = packed["w_in"].shape[1]
    Din_pad = packed["w_in"].shape[0]
    L = packed["wqkv"].shape[0]
    Dff = packed["w1"].shape[2]
    Dh = packed["wc1"].shape[1]
    C_pad = packed["wc2"].shape[1]
    BS = B * S
    assert S <= packed["bpe"].shape[0], "sequence longer than positional-encoding table"

    # fold batch into matmul rows, zero-pad features to lane width, bf16 operands
    x2 = jnp.zeros((BS, Din_pad), jnp.bfloat16)
    x2 = x2.at[:, :Din].set(x.reshape(BS, Din).astype(jnp.bfloat16))

    bpe = packed["bpe"][:S]                                           # (S, D) f32
    # block-diagonal additive mask: each batch attends only within itself
    row = jnp.arange(BS, dtype=jnp.int32) // S
    mask = jnp.where(row[:, None] == row[None, :], 0.0, -1e9).astype(jnp.float32)

    args = [x2, packed["w_in"], bpe, mask,
            packed["wqkv"], packed["bqkv"], packed["wo"], packed["bo"],
            packed["g1"], packed["be1"], packed["w1"], packed["b1"],
            packed["w2"], packed["b2"], packed["g2"], packed["be2"],
            packed["cls_g"], packed["cls_b"],
            packed["wc1"], packed["bc1"], packed["wc2"], packed["bc2"]]

    per_layer = lambda l: (l, 0, 0)
    fixed2 = lambda l: (0, 0)

    grid_spec = pltpu.PrefetchScalarGridSpec(
        num_scalar_prefetch=0,
        grid=(L,),
        in_specs=[
            pl.BlockSpec((BS, Din_pad), fixed2),          # x2
            pl.BlockSpec((Din_pad, D), fixed2),           # w_in
            pl.BlockSpec((S, D), fixed2),                 # b_in + pe
            pl.BlockSpec((BS, BS), fixed2),               # block-diag mask
            pl.BlockSpec((1, D, 3 * D), per_layer),       # wqkv
            pl.BlockSpec((1, 1, 3 * D), per_layer),       # bqkv
            pl.BlockSpec((1, D, D), per_layer),           # wo
            pl.BlockSpec((1, 1, D), per_layer),           # bo
            pl.BlockSpec((1, 1, D), per_layer),           # ln1 gamma
            pl.BlockSpec((1, 1, D), per_layer),           # ln1 beta
            pl.BlockSpec((1, D, Dff), per_layer),         # ffn w1
            pl.BlockSpec((1, 1, Dff), per_layer),         # ffn b1
            pl.BlockSpec((1, Dff, D), per_layer),         # ffn w2
            pl.BlockSpec((1, 1, D), per_layer),           # ffn b2
            pl.BlockSpec((1, 1, D), per_layer),           # ln2 gamma
            pl.BlockSpec((1, 1, D), per_layer),           # ln2 beta
            pl.BlockSpec((1, D), fixed2),                 # classifier LN gamma
            pl.BlockSpec((1, D), fixed2),                 # classifier LN beta
            pl.BlockSpec((D, Dh), fixed2),                # classifier w1
            pl.BlockSpec((1, Dh), fixed2),                # classifier b1
            pl.BlockSpec((Dh, C_pad), fixed2),            # classifier w2 (lane-padded)
            pl.BlockSpec((1, C_pad), fixed2),             # classifier b2 (lane-padded)
        ],
        out_specs=(pl.BlockSpec((B, C_pad), fixed2),
                   pl.BlockSpec((B, D), fixed2)),
        scratch_shapes=[pltpu.VMEM((BS, D), jnp.float32)],  # residual carry across layers
    )

    logits_pad, attnw = pl.pallas_call(
        partial(_fused_vit_kernel, B, S, nhead),
        out_shape=(jax.ShapeDtypeStruct((B, C_pad), jnp.float32),
                   jax.ShapeDtypeStruct((B, D), jnp.float32)),
        grid_spec=grid_spec,
        compiler_params=pltpu.CompilerParams(
            dimension_semantics=("arbitrary",),
            vmem_limit_bytes=32 * 1024 * 1024),
    )(*args)
    return logits_pad, attnw


# ------------------------- params: init + packing -------------------------------

def init_params(key, input_dim, d_model, nhead, num_layers, num_classes, max_len):
    keys = jax.random.split(key, num_layers + 2)

    def lin(k, fan_in, fan_out):
        k1, k2 = jax.random.split(k)
        w = jax.random.normal(k1, (fan_in, fan_out), jnp.float32) * 0.02
        b = jax.random.normal(k2, (1, fan_out), jnp.float32) * 0.01
        return w, b

    params = {}
    params["w_in"], params["b_in"] = lin(keys[0], input_dim, d_model)

    # positional-encoding buffer (sin/cos interleaved), shape (max_len, d_model)
    pos = jnp.arange(max_len, dtype=jnp.float32)[:, None]
    div = jnp.exp(jnp.arange(0, d_model, 2, dtype=jnp.float32)
                  * (-math.log(10000.0) / d_model))
    pe = jnp.zeros((max_len, d_model), jnp.float32)
    pe = pe.at[:, 0::2].set(jnp.sin(pos * div))
    pe = pe.at[:, 1::2].set(jnp.cos(pos * div))
    params["pe"] = pe

    layers = []
    for l in range(num_layers):
        ks = jax.random.split(keys[1 + l], 4)
        wqkv, bqkv = lin(ks[0], d_model, 3 * d_model)
        wo, bo = lin(ks[1], d_model, d_model)
        w1, b1 = lin(ks[2], d_model, 4 * d_model)
        w2, b2 = lin(ks[3], 4 * d_model, d_model)
        layers.append(dict(
            wqkv=wqkv, bqkv=bqkv, wo=wo, bo=bo,
            g1=jnp.ones((1, d_model), jnp.float32), be1=jnp.zeros((1, d_model), jnp.float32),
            w1=w1, b1=b1, w2=w2, b2=b2,
            g2=jnp.ones((1, d_model), jnp.float32), be2=jnp.zeros((1, d_model), jnp.float32),
        ))
    params["layers"] = layers

    kc1, kc2 = jax.random.split(keys[num_layers + 1])
    params["cls_g"] = jnp.ones((1, d_model), jnp.float32)
    params["cls_b"] = jnp.zeros((1, d_model), jnp.float32)
    params["wc1"], params["bc1"] = lin(kc1, d_model, d_model // 2)
    params["wc2"], params["bc2"] = lin(kc2, d_model // 2, num_classes)
    return params


def pack_params(params, nhead, lane=128):
    """Plain-JAX repacking: fused QKV kept stacked, scale folded into Q, layer
    stacking for the layer grid, bf16 weights, lane padding."""
    D = params["w_in"].shape[1]
    hd = D // nhead
    Din = params["w_in"].shape[0]
    Din_pad = lane * pl.cdiv(Din, lane)
    scale = 1.0 / math.sqrt(hd)

    w_in = jnp.zeros((Din_pad, D), jnp.float32).at[:Din, :].set(params["w_in"])
    # pre-sum input-projection bias with the positional-encoding table: (max_len, D)
    bpe = params["b_in"] + params["pe"]

    wqkv, bqkv, wo, bo = [], [], [], []
    g1, be1, w1, b1, w2, b2, g2, be2 = [], [], [], [], [], [], [], []
    for lp in params["layers"]:
        # fold 1/sqrt(hd) attention scale into the Q third of the fused projection
        wqkv.append(lp["wqkv"].at[:, :D].multiply(scale))
        bqkv.append(lp["bqkv"].at[:, :D].multiply(scale))
        wo.append(lp["wo"]); bo.append(lp["bo"])
        g1.append(lp["g1"]); be1.append(lp["be1"])
        w1.append(lp["w1"]); b1.append(lp["b1"])
        w2.append(lp["w2"]); b2.append(lp["b2"])
        g2.append(lp["g2"]); be2.append(lp["be2"])

    nc = params["wc2"].shape[1]
    C_pad = lane * pl.cdiv(nc, lane)
    wc2 = jnp.zeros((params["wc2"].shape[0], C_pad), jnp.float32).at[:, :nc].set(params["wc2"])
    bc2 = jnp.zeros((1, C_pad), jnp.float32).at[:, :nc].set(params["bc2"])

    bf = lambda a: a.astype(jnp.bfloat16)
    st = jnp.stack
    return dict(
        w_in=bf(w_in), bpe=bpe,
        wqkv=bf(st(wqkv)), bqkv=st(bqkv),            # (L, D, 3D) bf16, (L, 1, 3D) f32
        wo=bf(st(wo)), bo=st(bo),                    # (L, D, D) bf16, (L, 1, D) f32
        g1=st(g1), be1=st(be1),
        w1=bf(st(w1)), b1=st(b1), w2=bf(st(w2)), b2=st(b2),
        g2=st(g2), be2=st(be2),
        cls_g=params["cls_g"], cls_b=params["cls_b"],
        wc1=bf(params["wc1"]), bc1=params["bc1"],
        wc2=bf(wc2), bc2=bc2,
    )


# ----------------------------------- main --------------------------------------

if __name__ == "__main__":
    # small but shape-consistent config
    B, S = 2, 8
    INPUT_DIM = 21
    D_MODEL = 128
    NHEAD = 4
    NUM_LAYERS = 2
    NUM_CLASSES = 16
    MAX_LEN = 32

    key = jax.random.PRNGKey(0)
    kx, kp = jax.random.split(key)
    x = jax.random.normal(kx, (B, S, INPUT_DIM), jnp.float32)

    params = init_params(kp, INPUT_DIM, D_MODEL, NHEAD, NUM_LAYERS, NUM_CLASSES, MAX_LEN)
    packed = pack_params(params, NHEAD)

    logits_pad, attn_w = gesture_vit_forward(packed, x, nhead=NHEAD)
    jax.block_until_ready((logits_pad, attn_w))

    logits = logits_pad[:, :NUM_CLASSES]
    assert logits.shape == (B, NUM_CLASSES)
    assert attn_w.shape == (B, D_MODEL)
    assert bool(jnp.all(jnp.isfinite(logits))) and bool(jnp.all(jnp.isfinite(attn_w)))
    print("KERNEL_OK")
</pallas_src>

<mosaic_0001>
module attributes {stable_mosaic.version = 11 : i64} {
  func.func @_fused_vit_kernel(%arg0: i32, %arg1: memref<16x128xbf16, #tpu.memory_space<vmem>>, %arg2: memref<128x128xbf16, #tpu.memory_space<vmem>>, %arg3: memref<8x128xf32, #tpu.memory_space<vmem>>, %arg4: memref<16x16xf32, #tpu.memory_space<vmem>>, %arg5: memref<1x128x384xbf16, #tpu.memory_space<vmem>>, %arg6: memref<1x1x384xf32, #tpu.memory_space<vmem>>, %arg7: memref<1x128x128xbf16, #tpu.memory_space<vmem>>, %arg8: memref<1x1x128xf32, #tpu.memory_space<vmem>>, %arg9: memref<1x1x128xf32, #tpu.memory_space<vmem>>, %arg10: memref<1x1x128xf32, #tpu.memory_space<vmem>>, %arg11: memref<1x128x512xbf16, #tpu.memory_space<vmem>>, %arg12: memref<1x1x512xf32, #tpu.memory_space<vmem>>, %arg13: memref<1x512x128xbf16, #tpu.memory_space<vmem>>, %arg14: memref<1x1x128xf32, #tpu.memory_space<vmem>>, %arg15: memref<1x1x128xf32, #tpu.memory_space<vmem>>, %arg16: memref<1x1x128xf32, #tpu.memory_space<vmem>>, %arg17: memref<1x128xf32, #tpu.memory_space<vmem>>, %arg18: memref<1x128xf32, #tpu.memory_space<vmem>>, %arg19: memref<128x64xbf16, #tpu.memory_space<vmem>>, %arg20: memref<1x64xf32, #tpu.memory_space<vmem>>, %arg21: memref<64x128xbf16, #tpu.memory_space<vmem>>, %arg22: memref<1x128xf32, #tpu.memory_space<vmem>>, %arg23: memref<2x128xf32, #tpu.memory_space<vmem>>, %arg24: memref<2x128xf32, #tpu.memory_space<vmem>>, %arg25: memref<16x128xf32, #tpu.memory_space<vmem>>) attributes {dimension_semantics = [#tpu.dimension_semantics<arbitrary>], iteration_bounds = array<i64: 2>, scalar_prefetch = 0 : i64, scratch_operands = 1 : i64, tpu.core_type = #tpu.core_type<tc>, window_params = [{pipeline_mode = #tpu.pipeline_mode<synchronous>, transform_indices = @transform_0, window_bounds = array<i64: 16, 128>}, {pipeline_mode = #tpu.pipeline_mode<synchronous>, transform_indices = @transform_1, window_bounds = array<i64: 128, 128>}, {pipeline_mode = #tpu.pipeline_mode<synchronous>, transform_indices = @transform_2, window_bounds = array<i64: 8, 128>}, {pipeline_mode = #tpu.pipeline_mode<synchronous>, transform_indices = @transform_3, window_bounds = array<i64: 16, 16>}, {transform_indices = @transform_4, window_bounds = array<i64: 1, 128, 384>}, {transform_indices = @transform_5, window_bounds = array<i64: 1, 1, 384>}, {transform_indices = @transform_6, window_bounds = array<i64: 1, 128, 128>}, {transform_indices = @transform_7, window_bounds = array<i64: 1, 1, 128>}, {transform_indices = @transform_8, window_bounds = array<i64: 1, 1, 128>}, {transform_indices = @transform_9, window_bounds = array<i64: 1, 1, 128>}, {transform_indices = @transform_10, window_bounds = array<i64: 1, 128, 512>}, {transform_indices = @transform_11, window_bounds = array<i64: 1, 1, 512>}, {transform_indices = @transform_12, window_bounds = array<i64: 1, 512, 128>}, {transform_indices = @transform_13, window_bounds = array<i64: 1, 1, 128>}, {transform_indices = @transform_14, window_bounds = array<i64: 1, 1, 128>}, {transform_indices = @transform_15, window_bounds = array<i64: 1, 1, 128>}, {pipeline_mode = #tpu.pipeline_mode<synchronous>, transform_indices = @transform_16, window_bounds = array<i64: 1, 128>}, {pipeline_mode = #tpu.pipeline_mode<synchronous>, transform_indices = @transform_17, window_bounds = array<i64: 1, 128>}, {pipeline_mode = #tpu.pipeline_mode<synchronous>, transform_indices = @transform_18, window_bounds = array<i64: 128, 64>}, {pipeline_mode = #tpu.pipeline_mode<synchronous>, transform_indices = @transform_19, window_bounds = array<i64: 1, 64>}, {pipeline_mode = #tpu.pipeline_mode<synchronous>, transform_indices = @transform_20, window_bounds = array<i64: 64, 128>}, {pipeline_mode = #tpu.pipeline_mode<synchronous>, transform_indices = @transform_21, window_bounds = array<i64: 1, 128>}, {pipeline_mode = #tpu.pipeline_mode<synchronous>, transform_indices = @transform_22, window_bounds = array<i64: 2, 128>}, {pipeline_mode = #tpu.pipeline_mode<synchronous>, transform_indices = @transform_23, window_bounds = array<i64: 2, 128>}]} {
    %c0_i32 = arith.constant 0 : i32
    %0 = arith.cmpi eq, %arg0, %c0_i32 : i32
    %1 = arith.extui %0 : i1 to i32
    %c0_i32_0 = arith.constant 0 : i32
    %2 = arith.cmpi ne, %1, %c0_i32_0 : i32
    scf.if %2 {
      %c0_75 = arith.constant 0 : index
      %c0_76 = arith.constant 0 : index
      %184 = vector.load %arg1[%c0_75, %c0_76] : memref<16x128xbf16, #tpu.memory_space<vmem>>, vector<16x128xbf16>
      %c0_77 = arith.constant 0 : index
      %c0_78 = arith.constant 0 : index
      %185 = vector.load %arg2[%c0_77, %c0_78] : memref<128x128xbf16, #tpu.memory_space<vmem>>, vector<128x128xbf16>
      %cst_79 = arith.constant dense<0.000000e+00> : vector<16x128xf32>
      %186 = tpu.matmul %184, %185, %cst_79 {dimension_numbers = #tpu.dot_dimension_numbers<[1], [0], [0], [1], [0, 0, 1, 1], [], []>} : vector<16x128xbf16>, vector<128x128xbf16>, vector<16x128xf32> -> vector<16x128xf32>
      %187 = vector.shape_cast %186 : vector<16x128xf32> to vector<2x8x128xf32>
      %c0_80 = arith.constant 0 : index
      %c0_81 = arith.constant 0 : index
      %188 = vector.load %arg3[%c0_80, %c0_81] : memref<8x128xf32, #tpu.memory_space<vmem>>, vector<8x128xf32>
      %189 = vector.shape_cast %188 : vector<8x128xf32> to vector<1x8x128xf32>
      %190 = vector.broadcast %189 : vector<1x8x128xf32> to vector<2x8x128xf32>
      %191 = arith.addf %187, %190 : vector<2x8x128xf32>
      %192 = vector.shape_cast %191 : vector<2x8x128xf32> to vector<16x128xf32>
      %c0_82 = arith.constant 0 : index
      %c0_83 = arith.constant 0 : index
      %193 = vector.load %arg25[%c0_82, %c0_83] : memref<16x128xf32, #tpu.memory_space<vmem>>, vector<16x128xf32>
      tpu.vector_store %arg25[%c0_82, %c0_83], %192 {strides = array<i32>} : memref<16x128xf32, #tpu.memory_space<vmem>>, vector<16x128xf32>,
    } else {
    }
    %c0 = arith.constant 0 : index
    %c0_1 = arith.constant 0 : index
    %3 = vector.load %arg25[%c0, %c0_1] : memref<16x128xf32, #tpu.memory_space<vmem>>, vector<16x128xf32>
    %4 = arith.truncf %3 : vector<16x128xf32> to vector<16x128xbf16>
    %c0_2 = arith.constant 0 : index
    %c0_3 = arith.constant 0 : index
    %c0_4 = arith.constant 0 : index
    %5 = vector.load %arg5[%c0_2, %c0_3, %c0_4] : memref<1x128x384xbf16, #tpu.memory_space<vmem>>, vector<1x128x384xbf16>
    %6 = vector.shape_cast %5 : vector<1x128x384xbf16> to vector<128x384xbf16>
    %cst = arith.constant dense<0.000000e+00> : vector<16x384xf32>
    %7 = tpu.matmul %4, %6, %cst {dimension_numbers = #tpu.dot_dimension_numbers<[1], [0], [0], [1], [0, 0, 1, 1], [], []>} : vector<16x128xbf16>, vector<128x384xbf16>, vector<16x384xf32> -> vector<16x384xf32>
    %c0_5 = arith.constant 0 : index
    %c0_6 = arith.constant 0 : index
    %c0_7 = arith.constant 0 : index
    %8 = vector.load %arg6[%c0_5, %c0_6, %c0_7] : memref<1x1x384xf32, #tpu.memory_space<vmem>>, vector<1x1x384xf32>
    %9 = vector.shape_cast %8 : vector<1x1x384xf32> to vector<1x384xf32>
    %10 = vector.broadcast %9 : vector<1x384xf32> to vector<16x384xf32>
    %11 = arith.addf %7, %10 : vector<16x384xf32>
    %c0_8 = arith.constant 0 : index
    %c0_9 = arith.constant 0 : index
    %12 = vector.load %arg4[%c0_8, %c0_9] : memref<16x16xf32, #tpu.memory_space<vmem>>, vector<16x16xf32>
    %13 = vector.extract_strided_slice %11 {offsets = [0, 0], sizes = [16, 32], strides = [1, 1]} : vector<16x384xf32> to vector<16x32xf32>
    %14 = arith.truncf %13 : vector<16x32xf32> to vector<16x32xbf16>
    %15 = vector.extract_strided_slice %11 {offsets = [0, 128], sizes = [16, 32], strides = [1, 1]} : vector<16x384xf32> to vector<16x32xf32>
    %16 = arith.truncf %15 : vector<16x32xf32> to vector<16x32xbf16>
    %17 = vector.extract_strided_slice %11 {offsets = [0, 256], sizes = [16, 32], strides = [1, 1]} : vector<16x384xf32> to vector<16x32xf32>
    %18 = arith.truncf %17 : vector<16x32xf32> to vector<16x32xbf16>
    %cst_10 = arith.constant dense<0.000000e+00> : vector<16x16xf32>
    %19 = tpu.matmul %14, %16, %cst_10 {dimension_numbers = #tpu.dot_dimension_numbers<[1], [1], [0], [0], [0, 0, 1, 0], [], []>} : vector<16x32xbf16>, vector<16x32xbf16>, vector<16x16xf32> -> vector<16x16xf32>
    %20 = arith.addf %19, %12 : vector<16x16xf32>
    %cst_11 = arith.constant dense<0xFF800000> : vector<16xf32>
    %21 = vector.multi_reduction <maximumf>, %20, %cst_11 [1] : vector<16x16xf32> to vector<16xf32>
    %22 = vector.shape_cast %21 : vector<16xf32> to vector<16x1xf32>
    %23 = vector.broadcast %22 : vector<16x1xf32> to vector<16x16xf32>
    %24 = arith.subf %20, %23 : vector<16x16xf32>
    %25 = math.exp %24 : vector<16x16xf32>
    %cst_12 = arith.constant dense<0.000000e+00> : vector<16xf32>
    %26 = vector.multi_reduction <add>, %25, %cst_12 [1] : vector<16x16xf32> to vector<16xf32>
    %27 = vector.shape_cast %26 : vector<16xf32> to vector<16x1xf32>
    %28 = tpu.reciprocal %27 {approx = true} : vector<16x1xf32> -> vector<16x1xf32>
    %29 = vector.broadcast %28 : vector<16x1xf32> to vector<16x16xf32>
    %30 = arith.mulf %25, %29 : vector<16x16xf32>
    %31 = arith.truncf %30 : vector<16x16xf32> to vector<16x16xbf16>
    %cst_13 = arith.constant dense<0.000000e+00> : vector<16x32xf32>
    %32 = tpu.matmul %31, %18, %cst_13 {dimension_numbers = #tpu.dot_dimension_numbers<[1], [0], [0], [1], [0, 0, 1, 1], [], []>} : vector<16x16xbf16>, vector<16x32xbf16>, vector<16x32xf32> -> vector<16x32xf32>
    %33 = vector.extract_strided_slice %11 {offsets = [0, 32], sizes = [16, 32], strides = [1, 1]} : vector<16x384xf32> to vector<16x32xf32>
    %34 = arith.truncf %33 : vector<16x32xf32> to vector<16x32xbf16>
    %35 = vector.extract_strided_slice %11 {offsets = [0, 160], sizes = [16, 32], strides = [1, 1]} : vector<16x384xf32> to vector<16x32xf32>
    %36 = arith.truncf %35 : vector<16x32xf32> to vector<16x32xbf16>
    %37 = vector.extract_strided_slice %11 {offsets = [0, 288], sizes = [16, 32], strides = [1, 1]} : vector<16x384xf32> to vector<16x32xf32>
    %38 = arith.truncf %37 : vector<16x32xf32> to vector<16x32xbf16>
    %cst_14 = arith.constant dense<0.000000e+00> : vector<16x16xf32>
    %39 = tpu.matmul %34, %36, %cst_14 {dimension_numbers = #tpu.dot_dimension_numbers<[1], [1], [0], [0], [0, 0, 1, 0], [], []>} : vector<16x32xbf16>, vector<16x32xbf16>, vector<16x16xf32> -> vector<16x16xf32>
    %40 = arith.addf %39, %12 : vector<16x16xf32>
    %cst_15 = arith.constant dense<0xFF800000> : vector<16xf32>
    %41 = vector.multi_reduction <maximumf>, %40, %cst_15 [1] : vector<16x16xf32> to vector<16xf32>
    %42 = vector.shape_cast %41 : vector<16xf32> to vector<16x1xf32>
    %43 = vector.broadcast %42 : vector<16x1xf32> to vector<16x16xf32>
    %44 = arith.subf %40, %43 : vector<16x16xf32>
    %45 = math.exp %44 : vector<16x16xf32>
    %cst_16 = arith.constant dense<0.000000e+00> : vector<16xf32>
    %46 = vector.multi_reduction <add>, %45, %cst_16 [1] : vector<16x16xf32> to vector<16xf32>
    %47 = vector.shape_cast %46 : vector<16xf32> to vector<16x1xf32>
    %48 = tpu.reciprocal %47 {approx = true} : vector<16x1xf32> -> vector<16x1xf32>
    %49 = vector.broadcast %48 : vector<16x1xf32> to vector<16x16xf32>
    %50 = arith.mulf %45, %49 : vector<16x16xf32>
    %51 = arith.truncf %50 : vector<16x16xf32> to vector<16x16xbf16>
    %cst_17 = arith.constant dense<0.000000e+00> : vector<16x32xf32>
    %52 = tpu.matmul %51, %38, %cst_17 {dimension_numbers = #tpu.dot_dimension_numbers<[1], [0], [0], [1], [0, 0, 1, 1], [], []>} : vector<16x16xbf16>, vector<16x32xbf16>, vector<16x32xf32> -> vector<16x32xf32>
    %53 = vector.extract_strided_slice %11 {offsets = [0, 64], sizes = [16, 32], strides = [1, 1]} : vector<16x384xf32> to vector<16x32xf32>
    %54 = arith.truncf %53 : vector<16x32xf32> to vector<16x32xbf16>
    %55 = vector.extract_strided_slice %11 {offsets = [0, 192], sizes = [16, 32], strides = [1, 1]} : vector<16x384xf32> to vector<16x32xf32>
    %56 = arith.truncf %55 : vector<16x32xf32> to vector<16x32xbf16>
    %57 = vector.extract_strided_slice %11 {offsets = [0, 320], sizes = [16, 32], strides = [1, 1]} : vector<16x384xf32> to vector<16x32xf32>
    %58 = arith.truncf %57 : vector<16x32xf32> to vector<16x32xbf16>
    %cst_18 = arith.constant dense<0.000000e+00> : vector<16x16xf32>
    %59 = tpu.matmul %54, %56, %cst_18 {dimension_numbers = #tpu.dot_dimension_numbers<[1], [1], [0], [0], [0, 0, 1, 0], [], []>} : vector<16x32xbf16>, vector<16x32xbf16>, vector<16x16xf32> -> vector<16x16xf32>
    %60 = arith.addf %59, %12 : vector<16x16xf32>
    %cst_19 = arith.constant dense<0xFF800000> : vector<16xf32>
    %61 = vector.multi_reduction <maximumf>, %60, %cst_19 [1] : vector<16x16xf32> to vector<16xf32>
    %62 = vector.shape_cast %61 : vector<16xf32> to vector<16x1xf32>
    %63 = vector.broadcast %62 : vector<16x1xf32> to vector<16x16xf32>
    %64 = arith.subf %60, %63 : vector<16x16xf32>
    %65 = math.exp %64 : vector<16x16xf32>
    %cst_20 = arith.constant dense<0.000000e+00> : vector<16xf32>
    %66 = vector.multi_reduction <add>, %65, %cst_20 [1] : vector<16x16xf32> to vector<16xf32>
    %67 = vector.shape_cast %66 : vector<16xf32> to vector<16x1xf32>
    %68 = tpu.reciprocal %67 {approx = true} : vector<16x1xf32> -> vector<16x1xf32>
    %69 = vector.broadcast %68 : vector<16x1xf32> to vector<16x16xf32>
    %70 = arith.mulf %65, %69 : vector<16x16xf32>
    %71 = arith.truncf %70 : vector<16x16xf32> to vector<16x16xbf16>
    %cst_21 = arith.constant dense<0.000000e+00> : vector<16x32xf32>
    %72 = tpu.matmul %71, %58, %cst_21 {dimension_numbers = #tpu.dot_dimension_numbers<[1], [0], [0], [1], [0, 0, 1, 1], [], []>} : vector<16x16xbf16>, vector<16x32xbf16>, vector<16x32xf32> -> vector<16x32xf32>
    %73 = vector.extract_strided_slice %11 {offsets = [0, 96], sizes = [16, 32], strides = [1, 1]} : vector<16x384xf32> to vector<16x32xf32>
    %74 = arith.truncf %73 : vector<16x32xf32> to vector<16x32xbf16>
    %75 = vector.extract_strided_slice %11 {offsets = [0, 224], sizes = [16, 32], strides = [1, 1]} : vector<16x384xf32> to vector<16x32xf32>
    %76 = arith.truncf %75 : vector<16x32xf32> to vector<16x32xbf16>
    %77 = vector.extract_strided_slice %11 {offsets = [0, 352], sizes = [16, 32], strides = [1, 1]} : vector<16x384xf32> to vector<16x32xf32>
    %78 = arith.truncf %77 : vector<16x32xf32> to vector<16x32xbf16>
    %cst_22 = arith.constant dense<0.000000e+00> : vector<16x16xf32>
    %79 = tpu.matmul %74, %76, %cst_22 {dimension_numbers = #tpu.dot_dimension_numbers<[1], [1], [0], [0], [0, 0, 1, 0], [], []>} : vector<16x32xbf16>, vector<16x32xbf16>, vector<16x16xf32> -> vector<16x16xf32>
    %80 = arith.addf %79, %12 : vector<16x16xf32>
    %cst_23 = arith.constant dense<0xFF800000> : vector<16xf32>
    %81 = vector.multi_reduction <maximumf>, %80, %cst_23 [1] : vector<16x16xf32> to vector<16xf32>
    %82 = vector.shape_cast %81 : vector<16xf32> to vector<16x1xf32>
    %83 = vector.broadcast %82 : vector<16x1xf32> to vector<16x16xf32>
    %84 = arith.subf %80, %83 : vector<16x16xf32>
    %85 = math.exp %84 : vector<16x16xf32>
    %cst_24 = arith.constant dense<0.000000e+00> : vector<16xf32>
    %86 = vector.multi_reduction <add>, %85, %cst_24 [1] : vector<16x16xf32> to vector<16xf32>
    %87 = vector.shape_cast %86 : vector<16xf32> to vector<16x1xf32>
    %88 = tpu.reciprocal %87 {approx = true} : vector<16x1xf32> -> vector<16x1xf32>
    %89 = vector.broadcast %88 : vector<16x1xf32> to vector<16x16xf32>
    %90 = arith.mulf %85, %89 : vector<16x16xf32>
    %91 = arith.truncf %90 : vector<16x16xf32> to vector<16x16xbf16>
    %cst_25 = arith.constant dense<0.000000e+00> : vector<16x32xf32>
    %92 = tpu.matmul %91, %78, %cst_25 {dimension_numbers = #tpu.dot_dimension_numbers<[1], [0], [0], [1], [0, 0, 1, 1], [], []>} : vector<16x16xbf16>, vector<16x32xbf16>, vector<16x32xf32> -> vector<16x32xf32>
    %93 = tpu.concatenate %32, %52, %72, %92 in 1 : vector<16x32xf32>, vector<16x32xf32>, vector<16x32xf32>, vector<16x32xf32> -> vector<16x128xf32>
    %94 = arith.truncf %93 : vector<16x128xf32> to vector<16x128xbf16>
    %c0_26 = arith.constant 0 : index
    %c0_27 = arith.constant 0 : index
    %c0_28 = arith.constant 0 : index
    %95 = vector.load %arg7[%c0_26, %c0_27, %c0_28] : memref<1x128x128xbf16, #tpu.memory_space<vmem>>, vector<1x128x128xbf16>
    %96 = vector.shape_cast %95 : vector<1x128x128xbf16> to vector<128x128xbf16>
    %cst_29 = arith.constant dense<0.000000e+00> : vector<16x128xf32>
    %97 = tpu.matmul %94, %96, %cst_29 {dimension_numbers = #tpu.dot_dimension_numbers<[1], [0], [0], [1], [0, 0, 1, 1], [], []>} : vector<16x128xbf16>, vector<128x128xbf16>, vector<16x128xf32> -> vector<16x128xf32>
    %c0_30 = arith.constant 0 : index
    %c0_31 = arith.constant 0 : index
    %c0_32 = arith.constant 0 : index
    %98 = vector.load %arg8[%c0_30, %c0_31, %c0_32] : memref<1x1x128xf32, #tpu.memory_space<vmem>>, vector<1x1x128xf32>
    %99 = vector.shape_cast %98 : vector<1x1x128xf32> to vector<1x128xf32>
    %100 = vector.broadcast %99 : vector<1x128xf32> to vector<16x128xf32>
    %101 = arith.addf %97, %100 : vector<16x128xf32>
    %102 = arith.addf %3, %101 : vector<16x128xf32>
    %c0_33 = arith.constant 0 : index
    %c0_34 = arith.constant 0 : index
    %c0_35 = arith.constant 0 : index
    %103 = vector.load %arg9[%c0_33, %c0_34, %c0_35] : memref<1x1x128xf32, #tpu.memory_space<vmem>>, vector<1x1x128xf32>
    %104 = vector.shape_cast %103 : vector<1x1x128xf32> to vector<1x128xf32>
    %c0_36 = arith.constant 0 : index
    %c0_37 = arith.constant 0 : index
    %c0_38 = arith.constant 0 : index
    %105 = vector.load %arg10[%c0_36, %c0_37, %c0_38] : memref<1x1x128xf32, #tpu.memory_space<vmem>>, vector<1x1x128xf32>
    %106 = vector.shape_cast %105 : vector<1x1x128xf32> to vector<1x128xf32>
    %cst_39 = arith.constant dense<0.000000e+00> : vector<16xf32>
    %107 = vector.multi_reduction <add>, %102, %cst_39 [1] : vector<16x128xf32> to vector<16xf32>
    %108 = vector.shape_cast %107 : vector<16xf32> to vector<16x1xf32>
    %cst_40 = arith.constant 1.280000e+02 : f32
    %109 = vector.broadcast %cst_40 : f32 to vector<16x1xf32>
    %110 = arith.divf %108, %109 : vector<16x1xf32>
    %111 = vector.broadcast %110 : vector<16x1xf32> to vector<16x128xf32>
    %112 = arith.subf %102, %111 : vector<16x128xf32>
    %113 = arith.mulf %112, %112 : vector<16x128xf32>
    %cst_41 = arith.constant dense<0.000000e+00> : vector<16xf32>
    %114 = vector.multi_reduction <add>, %113, %cst_41 [1] : vector<16x128xf32> to vector<16xf32>
    %115 = vector.shape_cast %114 : vector<16xf32> to vector<16x1xf32>
    %cst_42 = arith.constant 1.280000e+02 : f32
    %116 = vector.broadcast %cst_42 : f32 to vector<16x1xf32>
    %117 = arith.divf %115, %116 : vector<16x1xf32>
    %118 = vector.broadcast %110 : vector<16x1xf32> to vector<16x128xf32>
    %119 = arith.subf %102, %118 : vector<16x128xf32>
    %cst_43 = arith.constant 9.99999974E-6 : f32
    %120 = vector.broadcast %cst_43 : f32 to vector<16x1xf32>
    %121 = arith.addf %117, %120 : vector<16x1xf32>
    %122 = math.rsqrt %121 : vector<16x1xf32>
    %123 = vector.broadcast %122 : vector<16x1xf32> to vector<16x128xf32>
    %124 = arith.mulf %119, %123 : vector<16x128xf32>
    %125 = vector.broadcast %104 : vector<1x128xf32> to vector<16x128xf32>
    %126 = arith.mulf %124, %125 : vector<16x128xf32>
    %127 = vector.broadcast %106 : vector<1x128xf32> to vector<16x128xf32>
    %128 = arith.addf %126, %127 : vector<16x128xf32>
    %129 = arith.truncf %128 : vector<16x128xf32> to vector<16x128xbf16>
    %c0_44 = arith.constant 0 : index
    %c0_45 = arith.constant 0 : index
    %c0_46 = arith.constant 0 : index
    %130 = vector.load %arg11[%c0_44, %c0_45, %c0_46] : memref<1x128x512xbf16, #tpu.memory_space<vmem>>, vector<1x128x512xbf16>
    %131 = vector.shape_cast %130 : vector<1x128x512xbf16> to vector<128x512xbf16>
    %cst_47 = arith.constant dense<0.000000e+00> : vector<16x512xf32>
    %132 = tpu.matmul %129, %131, %cst_47 {dimension_numbers = #tpu.dot_dimension_numbers<[1], [0], [0], [1], [0, 0, 1, 1], [], []>} : vector<16x128xbf16>, vector<128x512xbf16>, vector<16x512xf32> -> vector<16x512xf32>
    %c0_48 = arith.constant 0 : index
    %c0_49 = arith.constant 0 : index
    %c0_50 = arith.constant 0 : index
    %133 = vector.load %arg12[%c0_48, %c0_49, %c0_50] : memref<1x1x512xf32, #tpu.memory_space<vmem>>, vector<1x1x512xf32>
    %134 = vector.shape_cast %133 : vector<1x1x512xf32> to vector<1x512xf32>
    %135 = vector.broadcast %134 : vector<1x512xf32> to vector<16x512xf32>
    %136 = arith.addf %132, %135 : vector<16x512xf32>
    %cst_51 = arith.constant 5.000000e-01 : f32
    %137 = vector.broadcast %cst_51 : f32 to vector<16x512xf32>
    %138 = arith.mulf %137, %136 : vector<16x512xf32>
    %cst_52 = arith.constant 0.707106769 : f32
    %139 = vector.broadcast %cst_52 : f32 to vector<16x512xf32>
    %140 = arith.mulf %136, %139 : vector<16x512xf32>
    %141 = math.erf %140 : vector<16x512xf32>
    %cst_53 = arith.constant 1.000000e+00 : f32
    %142 = vector.broadcast %cst_53 : f32 to vector<16x512xf32>
    %143 = arith.addf %142, %141 : vector<16x512xf32>
    %144 = arith.mulf %138, %143 : vector<16x512xf32>
    %145 = arith.truncf %144 : vector<16x512xf32> to vector<16x512xbf16>
    %c0_54 = arith.constant 0 : index
    %c0_55 = arith.constant 0 : index
    %c0_56 = arith.constant 0 : index
    %146 = vector.load %arg13[%c0_54, %c0_55, %c0_56] : memref<1x512x128xbf16, #tpu.memory_space<vmem>>, vector<1x512x128xbf16>
    %147 = vector.shape_cast %146 : vector<1x512x128xbf16> to vector<512x128xbf16>
    %cst_57 = arith.constant dense<0.000000e+00> : vector<16x128xf32>
    %148 = tpu.matmul %145, %147, %cst_57 {dimension_numbers = #tpu.dot_dimension_numbers<[1], [0], [0], [1], [0, 0, 1, 1], [], []>} : vector<16x512xbf16>, vector<512x128xbf16>, vector<16x128xf32> -> vector<16x128xf32>
    %c0_58 = arith.constant 0 : index
    %c0_59 = arith.constant 0 : index
    %c0_60 = arith.constant 0 : index
    %149 = vector.load %arg14[%c0_58, %c0_59, %c0_60] : memref<1x1x128xf32, #tpu.memory_space<vmem>>, vector<1x1x128xf32>
    %150 = vector.shape_cast %149 : vector<1x1x128xf32> to vector<1x128xf32>
    %151 = vector.broadcast %150 : vector<1x128xf32> to vector<16x128xf32>
    %152 = arith.addf %148, %151 : vector<16x128xf32>
    %153 = arith.addf %128, %152 : vector<16x128xf32>
    %c0_61 = arith.constant 0 : index
    %c0_62 = arith.constant 0 : index
    %c0_63 = arith.constant 0 : index
    %154 = vector.load %arg15[%c0_61, %c0_62, %c0_63] : memref<1x1x128xf32, #tpu.memory_space<vmem>>, vector<1x1x128xf32>
    %155 = vector.shape_cast %154 : vector<1x1x128xf32> to vector<1x128xf32>
    %c0_64 = arith.constant 0 : index
    %c0_65 = arith.constant 0 : index
    %c0_66 = arith.constant 0 : index
    %156 = vector.load %arg16[%c0_64, %c0_65, %c0_66] : memref<1x1x128xf32, #tpu.memory_space<vmem>>, vector<1x1x128xf32>
    %157 = vector.shape_cast %156 : vector<1x1x128xf32> to vector<1x128xf32>
    %cst_67 = arith.constant dense<0.000000e+00> : vector<16xf32>
    %158 = vector.multi_reduction <add>, %153, %cst_67 [1] : vector<16x128xf32> to vector<16xf32>
    %159 = vector.shape_cast %158 : vector<16xf32> to vector<16x1xf32>
    %cst_68 = arith.constant 1.280000e+02 : f32
    %160 = vector.broadcast %cst_68 : f32 to vector<16x1xf32>
    %161 = arith.divf %159, %160 : vector<16x1xf32>
    %162 = vector.broadcast %161 : vector<16x1xf32> to vector<16x128xf32>
    %163 = arith.subf %153, %162 : vector<16x128xf32>
    %164 = arith.mulf %163, %163 : vector<16x128xf32>
    %cst_69 = arith.constant dense<0.000000e+00> : vector<16xf32>
    %165 = vector.multi_reduction <add>, %164, %cst_69 [1] : vector<16x128xf32> to vector<16xf32>
    %166 = vector.shape_cast %165 : vector<16xf32> to vector<16x1xf32>
    %cst_70 = arith.constant 1.280000e+02 : f32
    %167 = vector.broadcast %cst_70 : f32 to vector<16x1xf32>
    %168 = arith.divf %166, %167 : vector<16x1xf32>
    %169 = vector.broadcast %161 : vector<16x1xf32> to vector<16x128xf32>
    %170 = arith.subf %153, %169 : vector<16x128xf32>
    %cst_71 = arith.constant 9.99999974E-6 : f32
    %171 = vector.broadcast %cst_71 : f32 to vector<16x1xf32>
    %172 = arith.addf %168, %171 : vector<16x1xf32>
    %173 = math.rsqrt %172 : vector<16x1xf32>
    %174 = vector.broadcast %173 : vector<16x1xf32> to vector<16x128xf32>
    %175 = arith.mulf %170, %174 : vector<16x128xf32>
    %176 = vector.broadcast %155 : vector<1x128xf32> to vector<16x128xf32>
    %177 = arith.mulf %175, %176 : vector<16x128xf32>
    %178 = vector.broadcast %157 : vector<1x128xf32> to vector<16x128xf32>
    %179 = arith.addf %177, %178 : vector<16x128xf32>
    %c0_72 = arith.constant 0 : index
    %c0_73 = arith.constant 0 : index
    %180 = vector.load %arg25[%c0_72, %c0_73] : memref<16x128xf32, #tpu.memory_space<vmem>>, vector<16x128xf32>
    tpu.vector_store %arg25[%c0_72, %c0_73], %179 {strides = array<i32>} : memref<16x128xf32, #tpu.memory_space<vmem>>, vector<16x128xf32>,
    %c1_i32 = arith.constant 1 : i32
    %181 = arith.cmpi eq, %arg0, %c1_i32 : i32
    %182 = arith.extui %181 : i1 to i32
    %c0_i32_74 = arith.constant 0 : i32
    %183 = arith.cmpi ne, %182, %c0_i32_74 : i32
    scf.if %183 {
      %184 = vector.shape_cast %179 : vector<16x128xf32> to vector<2x8x128xf32>
      %cst_75 = arith.constant dense<0.000000e+00> : vector<2x128xf32>
      %185 = vector.multi_reduction <add>, %184, %cst_75 [1] : vector<2x8x128xf32> to vector<2x128xf32>
      %cst_76 = arith.constant 8.000000e+00 : f32
      %186 = vector.broadcast %cst_76 : f32 to vector<2x128xf32>
      %187 = arith.divf %185, %186 : vector<2x128xf32>
      %c0_77 = arith.constant 0 : index
      %c0_78 = arith.constant 0 : index
      %188 = vector.load %arg24[%c0_77, %c0_78] : memref<2x128xf32, #tpu.memory_space<vmem>>, vector<2x128xf32>
      tpu.vector_store %arg24[%c0_77, %c0_78], %187 {strides = array<i32>} : memref<2x128xf32, #tpu.memory_space<vmem>>, vector<2x128xf32>,
      %c0_79 = arith.constant 0 : index
      %c0_80 = arith.constant 0 : index
      %189 = vector.load %arg17[%c0_79, %c0_80] : memref<1x128xf32, #tpu.memory_space<vmem>>, vector<1x128xf32>
      %c0_81 = arith.constant 0 : index
      %c0_82 = arith.constant 0 : index
      %190 = vector.load %arg18[%c0_81, %c0_82] : memref<1x128xf32, #tpu.memory_space<vmem>>, vector<1x128xf32>
      %cst_83 = arith.constant dense<0.000000e+00> : vector<2xf32>
      %191 = vector.multi_reduction <add>, %187, %cst_83 [1] : vector<2x128xf32> to vector<2xf32>
      %192 = vector.shape_cast %191 : vector<2xf32> to vector<2x1xf32>
      %cst_84 = arith.constant 1.280000e+02 : f32
      %193 = vector.broadcast %cst_84 : f32 to vector<2x1xf32>
      %194 = arith.divf %192, %193 : vector<2x1xf32>
      %195 = vector.broadcast %194 : vector<2x1xf32> to vector<2x128xf32>
      %196 = arith.subf %187, %195 : vector<2x128xf32>
      %197 = arith.mulf %196, %196 : vector<2x128xf32>
      %cst_85 = arith.constant dense<0.000000e+00> : vector<2xf32>
      %198 = vector.multi_reduction <add>, %197, %cst_85 [1] : vector<2x128xf32> to vector<2xf32>
      %199 = vector.shape_cast %198 : vector<2xf32> to vector<2x1xf32>
      %cst_86 = arith.constant 1.280000e+02 : f32
      %200 = vector.broadcast %cst_86 : f32 to vector<2x1xf32>
      %201 = arith.divf %199, %200 : vector<2x1xf32>
      %202 = vector.broadcast %194 : vector<2x1xf32> to vector<2x128xf32>
      %203 = arith.subf %187, %202 : vector<2x128xf32>
      %cst_87 = arith.constant 9.99999974E-6 : f32
      %204 = vector.broadcast %cst_87 : f32 to vector<2x1xf32>
      %205 = arith.addf %201, %204 : vector<2x1xf32>
      %206 = math.rsqrt %205 : vector<2x1xf32>
      %207 = vector.broadcast %206 : vector<2x1xf32> to vector<2x128xf32>
      %208 = arith.mulf %203, %207 : vector<2x128xf32>
      %209 = vector.broadcast %189 : vector<1x128xf32> to vector<2x128xf32>
      %210 = arith.mulf %208, %209 : vector<2x128xf32>
      %211 = vector.broadcast %190 : vector<1x128xf32> to vector<2x128xf32>
      %212 = arith.addf %210, %211 : vector<2x128xf32>
      %213 = arith.truncf %212 : vector<2x128xf32> to vector<2x128xbf16>
      %c0_88 = arith.constant 0 : index
      %c0_89 = arith.constant 0 : index
      %214 = vector.load %arg19[%c0_88, %c0_89] : memref<128x64xbf16, #tpu.memory_space<vmem>>, vector<128x64xbf16>
      %cst_90 = arith.constant dense<0.000000e+00> : vector<2x64xf32>
      %215 = tpu.matmul %213, %214, %cst_90 {dimension_numbers = #tpu.dot_dimension_numbers<[1], [0], [0], [1], [0, 0, 1, 1], [], []>} : vector<2x128xbf16>, vector<128x64xbf16>, vector<2x64xf32> -> vector<2x64xf32>
      %c0_91 = arith.constant 0 : index
      %c0_92 = arith.constant 0 : index
      %216 = vector.load %arg20[%c0_91, %c0_92] : memref<1x64xf32, #tpu.memory_space<vmem>>, vector<1x64xf32>
      %217 = vector.broadcast %216 : vector<1x64xf32> to vector<2x64xf32>
      %218 = arith.addf %215, %217 : vector<2x64xf32>
      %cst_93 = arith.constant 5.000000e-01 : f32
      %219 = vector.broadcast %cst_93 : f32 to vector<2x64xf32>
      %220 = arith.mulf %219, %218 : vector<2x64xf32>
      %cst_94 = arith.constant 0.707106769 : f32
      %221 = vector.broadcast %cst_94 : f32 to vector<2x64xf32>
      %222 = arith.mulf %218, %221 : vector<2x64xf32>
      %223 = math.erf %222 : vector<2x64xf32>
      %cst_95 = arith.constant 1.000000e+00 : f32
      %224 = vector.broadcast %cst_95 : f32 to vector<2x64xf32>
      %225 = arith.addf %224, %223 : vector<2x64xf32>
      %226 = arith.mulf %220, %225 : vector<2x64xf32>
      %227 = arith.truncf %226 : vector<2x64xf32> to vector<2x64xbf16>
      %c0_96 = arith.constant 0 : index
      %c0_97 = arith.constant 0 : index
      %228 = vector.load %arg21[%c0_96, %c0_97] : memref<64x128xbf16, #tpu.memory_space<vmem>>, vector<64x128xbf16>
      %cst_98 = arith.constant dense<0.000000e+00> : vector<2x128xf32>
      %229 = tpu.matmul %227, %228, %cst_98 {dimension_numbers = #tpu.dot_dimension_numbers<[1], [0], [0], [1], [0, 0, 1, 1], [], []>} : vector<2x64xbf16>, vector<64x128xbf16>, vector<2x128xf32> -> vector<2x128xf32>
      %c0_99 = arith.constant 0 : index
      %c0_100 = arith.constant 0 : index
      %230 = vector.load %arg22[%c0_99, %c0_100] : memref<1x128xf32, #tpu.memory_space<vmem>>, vector<1x128xf32>
      %231 = vector.broadcast %230 : vector<1x128xf32> to vector<2x128xf32>
      %232 = arith.addf %229, %231 : vector<2x128xf32>
      %c0_101 = arith.constant 0 : index
      %c0_102 = arith.constant 0 : index
      %233 = vector.load %arg23[%c0_101, %c0_102] : memref<2x128xf32, #tpu.memory_space<vmem>>, vector<2x128xf32>
      tpu.vector_store %arg23[%c0_101, %c0_102], %232 {strides = array<i32>} : memref<2x128xf32, #tpu.memory_space<vmem>>, vector<2x128xf32>,
    } else {
    }
    return
  }
  func.func @transform_0(%arg0: i32) -> (i32, i32) {
    %c0_i32 = arith.constant 0 : i32
    %c0_i32_0 = arith.constant 0 : i32
    %c0_i32_1 = arith.constant 0 : i32
    return %c0_i32, %c0_i32_0 : i32, i32
  }
  func.func @transform_1(%arg0: i32) -> (i32, i32) {
    %c0_i32 = arith.constant 0 : i32
    %c0_i32_0 = arith.constant 0 : i32
    %c0_i32_1 = arith.constant 0 : i32
    return %c0_i32, %c0_i32_0 : i32, i32
  }
  func.func @transform_2(%arg0: i32) -> (i32, i32) {
    %c0_i32 = arith.constant 0 : i32
    %c0_i32_0 = arith.constant 0 : i32
    %c0_i32_1 = arith.constant 0 : i32
    return %c0_i32, %c0_i32_0 : i32, i32
  }
  func.func @transform_3(%arg0: i32) -> (i32, i32) {
    %c0_i32 = arith.constant 0 : i32
    %c0_i32_0 = arith.constant 0 : i32
    %c0_i32_1 = arith.constant 0 : i32
    return %c0_i32, %c0_i32_0 : i32, i32
  }
  func.func @transform_4(%arg0: i32) -> (i32, i32, i32) {
    %c0_i32 = arith.constant 0 : i32
    %c0_i32_0 = arith.constant 0 : i32
    %c0_i32_1 = arith.constant 0 : i32
    return %arg0, %c0_i32, %c0_i32_0 : i32, i32, i32
  }
  func.func @transform_5(%arg0: i32) -> (i32, i32, i32) {
    %c0_i32 = arith.constant 0 : i32
    %c0_i32_0 = arith.constant 0 : i32
    %c0_i32_1 = arith.constant 0 : i32
    return %arg0, %c0_i32, %c0_i32_0 : i32, i32, i32
  }
  func.func @transform_6(%arg0: i32) -> (i32, i32, i32) {
    %c0_i32 = arith.constant 0 : i32
    %c0_i32_0 = arith.constant 0 : i32
    %c0_i32_1 = arith.constant 0 : i32
    return %arg0, %c0_i32, %c0_i32_0 : i32, i32, i32
  }
  func.func @transform_7(%arg0: i32) -> (i32, i32, i32) {
    %c0_i32 = arith.constant 0 : i32
    %c0_i32_0 = arith.constant 0 : i32
    %c0_i32_1 = arith.constant 0 : i32
    return %arg0, %c0_i32, %c0_i32_0 : i32, i32, i32
  }
  func.func @transform_8(%arg0: i32) -> (i32, i32, i32) {
    %c0_i32 = arith.constant 0 : i32
    %c0_i32_0 = arith.constant 0 : i32
    %c0_i32_1 = arith.constant 0 : i32
    return %arg0, %c0_i32, %c0_i32_0 : i32, i32, i32
  }
  func.func @transform_9(%arg0: i32) -> (i32, i32, i32) {
    %c0_i32 = arith.constant 0 : i32
    %c0_i32_0 = arith.constant 0 : i32
    %c0_i32_1 = arith.constant 0 : i32
    return %arg0, %c0_i32, %c0_i32_0 : i32, i32, i32
  }
  func.func @transform_10(%arg0: i32) -> (i32, i32, i32) {
    %c0_i32 = arith.constant 0 : i32
    %c0_i32_0 = arith.constant 0 : i32
    %c0_i32_1 = arith.constant 0 : i32
    return %arg0, %c0_i32, %c0_i32_0 : i32, i32, i32
  }
  func.func @transform_11(%arg0: i32) -> (i32, i32, i32) {
    %c0_i32 = arith.constant 0 : i32
    %c0_i32_0 = arith.constant 0 : i32
    %c0_i32_1 = arith.constant 0 : i32
    return %arg0, %c0_i32, %c0_i32_0 : i32, i32, i32
  }
  func.func @transform_12(%arg0: i32) -> (i32, i32, i32) {
    %c0_i32 = arith.constant 0 : i32
    %c0_i32_0 = arith.constant 0 : i32
    %c0_i32_1 = arith.constant 0 : i32
    return %arg0, %c0_i32, %c0_i32_0 : i32, i32, i32
  }
  func.func @transform_13(%arg0: i32) -> (i32, i32, i32) {
    %c0_i32 = arith.constant 0 : i32
    %c0_i32_0 = arith.constant 0 : i32
    %c0_i32_1 = arith.constant 0 : i32
    return %arg0, %c0_i32, %c0_i32_0 : i32, i32, i32
  }
  func.func @transform_14(%arg0: i32) -> (i32, i32, i32) {
    %c0_i32 = arith.constant 0 : i32
    %c0_i32_0 = arith.constant 0 : i32
    %c0_i32_1 = arith.constant 0 : i32
    return %arg0, %c0_i32, %c0_i32_0 : i32, i32, i32
  }
  func.func @transform_15(%arg0: i32) -> (i32, i32, i32) {
    %c0_i32 = arith.constant 0 : i32
    %c0_i32_0 = arith.constant 0 : i32
    %c0_i32_1 = arith.constant 0 : i32
    return %arg0, %c0_i32, %c0_i32_0 : i32, i32, i32
  }
  func.func @transform_16(%arg0: i32) -> (i32, i32) {
    %c0_i32 = arith.constant 0 : i32
    %c0_i32_0 = arith.constant 0 : i32
    %c0_i32_1 = arith.constant 0 : i32
    return %c0_i32, %c0_i32_0 : i32, i32
  }
  func.func @transform_17(%arg0: i32) -> (i32, i32) {
    %c0_i32 = arith.constant 0 : i32
    %c0_i32_0 = arith.constant 0 : i32
    %c0_i32_1 = arith.constant 0 : i32
    return %c0_i32, %c0_i32_0 : i32, i32
  }
  func.func @transform_18(%arg0: i32) -> (i32, i32) {
    %c0_i32 = arith.constant 0 : i32
    %c0_i32_0 = arith.constant 0 : i32
    %c0_i32_1 = arith.constant 0 : i32
    return %c0_i32, %c0_i32_0 : i32, i32
  }
  func.func @transform_19(%arg0: i32) -> (i32, i32) {
    %c0_i32 = arith.constant 0 : i32
    %c0_i32_0 = arith.constant 0 : i32
    %c0_i32_1 = arith.constant 0 : i32
    return %c0_i32, %c0_i32_0 : i32, i32
  }
  func.func @transform_20(%arg0: i32) -> (i32, i32) {
    %c0_i32 = arith.constant 0 : i32
    %c0_i32_0 = arith.constant 0 : i32
    %c0_i32_1 = arith.constant 0 : i32
    return %c0_i32, %c0_i32_0 : i32, i32
  }
  func.func @transform_21(%arg0: i32) -> (i32, i32) {
    %c0_i32 = arith.constant 0 : i32
    %c0_i32_0 = arith.constant 0 : i32
    %c0_i32_1 = arith.constant 0 : i32
    return %c0_i32, %c0_i32_0 : i32, i32
  }
  func.func @transform_22(%arg0: i32) -> (i32, i32) {
    %c0_i32 = arith.constant 0 : i32
    %c0_i32_0 = arith.constant 0 : i32
    %c0_i32_1 = arith.constant 0 : i32
    return %c0_i32, %c0_i32_0 : i32, i32
  }
  func.func @transform_23(%arg0: i32) -> (i32, i32) {
    %c0_i32 = arith.constant 0 : i32
    %c0_i32_0 = arith.constant 0 : i32
    %c0_i32_1 = arith.constant 0 : i32
    return %c0_i32, %c0_i32_0 : i32, i32
  }
}

</mosaic_0001>

<llo_original>
// kernel: gesture_vit_forward.1
$region0: #{gesture_vit_forward.1}
  #allocation0 [shape = 'u32[]', space=smem, size = 0x4, offset = 0x4, fixed_abs, tag = 'smem constant byte address 0x4 - core index']
  #allocation1 [shape = 'u32[144,128]{1,0:T(1,128)}', space=vmem, size = 0x12000, scoped, tag = 'internal scratch']
  #allocation2 [shape = 'f32[16,128]{1,0:T(8,128)}', space=vmem, size = 0x2000, scoped, tag = 'scratch operand']
  %s0 = inlined_call_operand.vmem [shape: bf16[16,128], index: 0, kind: input, shape index: {}]
  %s1 = inlined_call_operand.vmem [shape: bf16[128,128], index: 1, kind: input, shape index: {}]
  %s2 = inlined_call_operand.vmem [shape: f32[8,128], index: 2, kind: input, shape index: {}]
  %s3 = inlined_call_operand.vmem [shape: f32[16,16], index: 3, kind: input, shape index: {}]
  %s4 = inlined_call_operand.hbm [shape: bf16[2,128,384], index: 4, kind: input, shape index: {}]
  %s5 = inlined_call_operand.hbm [shape: f32[2,1,384], index: 5, kind: input, shape index: {}]
  %s6 = inlined_call_operand.vmem [shape: bf16[2,128,128], index: 6, kind: input, shape index: {}]
  %s7 = inlined_call_operand.vmem [shape: f32[2,1,128], index: 7, kind: input, shape index: {}]
  %s8 = inlined_call_operand.hbm [shape: f32[2,1,128], index: 8, kind: input, shape index: {}]
  %s9 = inlined_call_operand.hbm [shape: f32[2,1,128], index: 9, kind: input, shape index: {}]
  %s10 = inlined_call_operand.hbm [shape: bf16[2,128,512], index: 10, kind: input, shape index: {}]
  %s11 = inlined_call_operand.hbm [shape: f32[2,1,512], index: 11, kind: input, shape index: {}]
  %s12 = inlined_call_operand.hbm [shape: bf16[2,512,128], index: 12, kind: input, shape index: {}]
  %s13 = inlined_call_operand.hbm [shape: f32[2,1,128], index: 13, kind: input, shape index: {}]
  %s14 = inlined_call_operand.hbm [shape: f32[2,1,128], index: 14, kind: input, shape index: {}]
  %s15 = inlined_call_operand.hbm [shape: f32[2,1,128], index: 15, kind: input, shape index: {}]
  %s16 = inlined_call_operand.vmem [shape: f32[1,128], index: 16, kind: input, shape index: {}]
  %s17 = inlined_call_operand.hbm [shape: f32[1,128], index: 17, kind: input, shape index: {}]
  %s18 = inlined_call_operand.vmem [shape: bf16[128,64], index: 18, kind: input, shape index: {}]
  %s19 = inlined_call_operand.hbm [shape: f32[1,64], index: 19, kind: input, shape index: {}]
  %s20 = inlined_call_operand.vmem [shape: bf16[64,128], index: 20, kind: input, shape index: {}]
  %s21 = inlined_call_operand.hbm [shape: f32[1,128], index: 21, kind: input, shape index: {}]
  %s22 = inlined_call_operand.hbm [shape: f32[2,128], index: 22, kind: output, shape index: {0}]
  %s23 = inlined_call_operand.hbm [shape: f32[2,128], index: 23, kind: output, shape index: {1}]
  %24 = xla_tuple %s22, %s23
  %s25 = sld [smem:[#allocation0]]
  $region189: #{gesture_vit_forward.1} parent=0
    _
  %s27 = ssub.s32 1, %s25
  %s28 = scalar_select 0, %s27, %s25
  $region1: #{gesture_vit_forward.1} parent=0
    #allocation3 [shape = 'u8[196608]{0}', space=vmem, size = 0x30000, scoped, tag = 'input window, operand 4']
    #allocation4 [shape = 's32[2]{0}', space=sflag, size = 0x8, scoped, tag = 'scoped memory for gesture_vit_forward.1']
    #allocation5 [shape = 's32[2]{0}', space=sflag, size = 0x8, scoped, tag = 'scoped memory for gesture_vit_forward.1']
    #allocation6 [shape = 'u8[3072]{0}', space=vmem, size = 0xc00, scoped, tag = 'input window, operand 5']
    #allocation7 [shape = 's32[2]{0}', space=sflag, size = 0x8, scoped, tag = 'scoped memory for gesture_vit_forward.1']
    #allocation8 [shape = 'u8[1024]{0}', space=vmem, size = 0x400, scoped, tag = 'input window, operand 8']
    #allocation9 [shape = 'u8[1024]{0}', space=vmem, size = 0x400, scoped, tag = 'input window, operand 9']
    #allocation10 [shape = 's32[2]{0}', space=sflag, size = 0x8, scoped, tag = 'scoped memory for gesture_vit_forward.1']
    #allocation11 [shape = 'u8[262144]{0}', space=vmem, size = 0x40000, scoped, tag = 'input window, operand 10']
    #allocation12 [shape = 'u8[4096]{0}', space=vmem, size = 0x1000, scoped, tag = 'input window, operand 11']
    #allocation13 [shape = 's32[2]{0}', space=sflag, size = 0x8, scoped, tag = 'scoped memory for gesture_vit_forward.1']
    #allocation14 [shape = 'u8[262144]{0}', space=vmem, size = 0x40000, scoped, tag = 'input window, operand 12']
    #allocation15 [shape = 'u8[1024]{0}', space=vmem, size = 0x400, scoped, tag = 'input window, operand 13']
    #allocation16 [shape = 's32[2]{0}', space=sflag, size = 0x8, scoped, tag = 'scoped memory for gesture_vit_forward.1']
    #allocation17 [shape = 'u8[1024]{0}', space=vmem, size = 0x400, scoped, tag = 'input window, operand 14']
    #allocation18 [shape = 'u8[1024]{0}', space=vmem, size = 0x400, scoped, tag = 'input window, operand 15']
    #allocation19 [shape = 's32[2]{0}', space=sflag, size = 0x8, scoped, tag = 'scoped memory for gesture_vit_forward.1']
    #allocation20 [shape = 'u8[512]{0}', space=vmem, size = 0x400, scoped, tag = 'input window, operand 17, single buffered']
    #allocation21 [shape = 'u8[512]{0}', space=vmem, size = 0x400, scoped, tag = 'input window, operand 19, single buffered']
    #allocation22 [shape = 's32[1]{0}', space=sflag, size = 0x4, scoped, tag = 'scoped memory for gesture_vit_forward.1']
    #allocation23 [shape = 'u8[512]{0}', space=vmem, size = 0x400, scoped, tag = 'input window, operand 21, single buffered']
    #allocation24 [shape = 'u8[1024]{0}', space=vmem, size = 0x400, scoped, tag = 'output window, operand 0, single buffered']
    #allocation25 [shape = 'u8[1024]{0}', space=vmem, size = 0x400, scoped, tag = 'output window, operand 1, single buffered']
    #allocation26 [shape = 's32[1]{0}', space=sflag, size = 0x4, scoped, tag = 'scoped memory for gesture_vit_forward.1']
    %29 = vsyncpa [#allocation4], 0
    %s30 = scalar_lea.sflag [#allocation4], 1
    %31 = vsyncpa %s30, 0
    %32 = vsyncpa [#allocation7], 0
    %s33 = scalar_lea.sflag [#allocation7], 1
    %34 = vsyncpa %s33, 0
    %35 = vsyncpa [#allocation10], 0
    %s36 = scalar_lea.sflag [#allocation10], 1
    %37 = vsyncpa %s36, 0
    %38 = vsyncpa [#allocation13], 0
    %s39 = scalar_lea.sflag [#allocation13], 1
    %40 = vsyncpa %s39, 0
    %41 = vsyncpa [#allocation16], 0
    %s42 = scalar_lea.sflag [#allocation16], 1
    %43 = vsyncpa %s42, 0
    %44 = vsyncpa [#allocation19], 0
    %s45 = scalar_lea.sflag [#allocation19], 1
    %46 = vsyncpa %s45, 0
    %47 = vsyncpa [#allocation22], 0
    %48 = vsyncpa [#allocation5], 0
    %49 = vsyncpa [#allocation26], 0
    loop: start=0, step=1, limit=4
    $region2: #{gesture_vit_forward.1} parent=1 // loop_pre_header
      _
    $region3: #{gesture_vit_forward.1} parent=1 // loop_header
      %s51 = sphi 0, %s55
      %p52 = scmp.ge.s32.totalorder %s51, 4
      %s59 = sphi 0, %s59
      %s61 = sphi 0, %s59
      %s62 = sphi 0, %s61
      %s76 = sphi 0, %s62
      %s80 = sphi 0, %s80
      %s82 = sphi 0, %s80
      %s83 = sphi 0, %s82
      %s97 = sphi 0, %s83
      %s101 = sphi 0, %s101
      %s103 = sphi 0, %s101
      %s104 = sphi 0, %s103
      %s118 = sphi 0, %s104
      %s122 = sphi 0, %s122
      %s124 = sphi 0, %s122
      %s125 = sphi 0, %s124
      %s139 = sphi 0, %s125
      %s145 = sphi 0, %s147
      %s148 = sphi 0, %s145
      %s149 = sphi 0, %s148
      %s165 = sphi 0, %s149
      %s171 = sphi 0, %s173
      %s174 = sphi 0, %s171
      %s175 = sphi 0, %s174
      %s191 = sphi 0, %s175
      %s197 = sphi 0, %s199
      %s200 = sphi 0, %s197
      %s201 = sphi 0, %s200
      %s217 = sphi 0, %s201
      %s223 = sphi 0, %s225
      %s226 = sphi 0, %s223
      %s227 = sphi 0, %s226
      %s243 = sphi 0, %s227
      %s249 = sphi 0, %s251
      %s252 = sphi 0, %s249
      %s253 = sphi 0, %s252
      %s269 = sphi 0, %s253
      %s275 = sphi 0, %s277
      %s278 = sphi 0, %s275
      %s279 = sphi 0, %s278
      %s295 = sphi 0, %s279
      %s301 = sphi 0, %s303
      %s304 = sphi 0, %s301
      %s305 = sphi 0, %s304
      %s321 = sphi 0, %s305
      %s327 = sphi 0, %s329
      %s330 = sphi 0, %s327
      %s331 = sphi 0, %s330
      %s347 = sphi 0, %s331
      %s353 = sphi 0, %s355
      %s356 = sphi 0, %s353
      %s357 = sphi 0, %s356
      %s373 = sphi 0, %s357
      %s379 = sphi 0, %s381
      %s382 = sphi 0, %s379
      %s383 = sphi 0, %s382
      %s399 = sphi 0, %s383
      %s405 = sphi 0, %s407
      %s408 = sphi 0, %s405
      %s409 = sphi 0, %s408
      %s425 = sphi 0, %s409
      %s431 = sphi 0, %s433
      %s434 = sphi 0, %s431
      %s435 = sphi 0, %s434
      %s451 = sphi 0, %s435
      %s455 = sphi 0, %s455
      %s457 = sphi 0, %s455
      %s458 = sphi 0, %s457
      %s472 = sphi 0, %s458
      %s476 = sphi 0, %s476
      %s478 = sphi 0, %s476
      %s479 = sphi 0, %s478
      %s493 = sphi 0, %s479
      %s497 = sphi 0, %s497
      %s499 = sphi 0, %s497
      %s500 = sphi 0, %s499
      %s514 = sphi 0, %s500
      %s518 = sphi 0, %s518
      %s520 = sphi 0, %s518
      %s521 = sphi 0, %s520
      %s535 = sphi 0, %s521
      %s539 = sphi 0, %s539
      %s541 = sphi 0, %s539
      %s542 = sphi 0, %s541
      %s556 = sphi 0, %s542
      %s560 = sphi 0, %s560
      %s562 = sphi 0, %s560
      %s563 = sphi 0, %s562
      %s577 = sphi 0, %s563
      %s581 = sphi 0, %s581
      %s583 = sphi 0, %s581
      %s584 = sphi 0, %s583
      %s598 = sphi 0, %s584
      %s602 = sphi 0, %s602
      %s604 = sphi 0, %s602
      %s605 = sphi 0, %s604
      %s619 = sphi 0, %s605
    $region4: #{gesture_vit_forward.1} parent=1 // loop_header_branch
      %54 = sbr.rel (%p52) target = $region8
    $region5: #{gesture_vit_forward.1} parent=1 // loop_body
      %s56 = ssub.s32 %s51, 1
      %s57 = ssub.s32 %s51, 2
      %s58 = sadd.s32 %s51, 1
      %s60 = sadd.s32 %s59, 1
      %p63 = scmp.eq.s32.totalorder %s51, 1
      %p64 = scmp.ne.s32.totalorder %s59, %s61
      %p65 = scmp.eq.s32.totalorder %s51, 0
      %p66 = por %p64, %p65
      %p67 = scmp.ne.s32.totalorder %s59, %s61
      %p68 = scmp.eq.s32.totalorder %s56, 1
      %p69 = por %p67, %p68
      %p70 = scmp.ne.s32.totalorder %s61, %s62
      %p71 = scmp.eq.s32.totalorder %s56, 0
      %p72 = por %p70, %p71
      %p73 = scmp.ne.s32.totalorder %s61, %s62
      %p74 = scmp.eq.s32.totalorder %s57, 1
      %p75 = por %p73, %p74
      %p77 = scmp.ne.s32.totalorder %s62, %s76
      %p78 = scmp.eq.s32.totalorder %s57, 0
      %p79 = por %p77, %p78
      %s81 = sadd.s32 %s80, 1
      %p84 = scmp.eq.s32.totalorder %s51, 1
      %p85 = scmp.ne.s32.totalorder %s80, %s82
      %p86 = scmp.eq.s32.totalorder %s51, 0
      %p87 = por %p85, %p86
      %p88 = scmp.ne.s32.totalorder %s80, %s82
      %p89 = scmp.eq.s32.totalorder %s56, 1
      %p90 = por %p88, %p89
      %p91 = scmp.ne.s32.totalorder %s82, %s83
      %p92 = scmp.eq.s32.totalorder %s56, 0
      %p93 = por %p91, %p92
      %p94 = scmp.ne.s32.totalorder %s82, %s83
      %p95 = scmp.eq.s32.totalorder %s57, 1
      %p96 = por %p94, %p95
      %p98 = scmp.ne.s32.totalorder %s83, %s97
      %p99 = scmp.eq.s32.totalorder %s57, 0
      %p100 = por %p98, %p99
      %s102 = sadd.s32 %s101, 1
      %p105 = scmp.eq.s32.totalorder %s51, 1
      %p106 = scmp.ne.s32.totalorder %s101, %s103
      %p107 = scmp.eq.s32.totalorder %s51, 0
      %p108 = por %p106, %p107
      %p109 = scmp.ne.s32.totalorder %s101, %s103
      %p110 = scmp.eq.s32.totalorder %s56, 1
      %p111 = por %p109, %p110
      %p112 = scmp.ne.s32.totalorder %s103, %s104
      %p113 = scmp.eq.s32.totalorder %s56, 0
      %p114 = por %p112, %p113
      %p115 = scmp.ne.s32.totalorder %s103, %s104
      %p116 = scmp.eq.s32.totalorder %s57, 1
      %p117 = por %p115, %p116
      %p119 = scmp.ne.s32.totalorder %s104, %s118
      %p120 = scmp.eq.s32.totalorder %s57, 0
      %p121 = por %p119, %p120
      %s123 = sadd.s32 %s122, 1
      %p126 = scmp.eq.s32.totalorder %s51, 1
      %p127 = scmp.ne.s32.totalorder %s122, %s124
      %p128 = scmp.eq.s32.totalorder %s51, 0
      %p129 = por %p127, %p128
      %p130 = scmp.ne.s32.totalorder %s122, %s124
      %p131 = scmp.eq.s32.totalorder %s56, 1
      %p132 = por %p130, %p131
      %p133 = scmp.ne.s32.totalorder %s124, %s125
      %p134 = scmp.eq.s32.totalorder %s56, 0
      %p135 = por %p133, %p134
      %p136 = scmp.ne.s32.totalorder %s124, %s125
      %p137 = scmp.eq.s32.totalorder %s57, 1
      %p138 = por %p136, %p137
      %p140 = scmp.ne.s32.totalorder %s125, %s139
      %p141 = scmp.eq.s32.totalorder %s57, 0
      %p142 = por %p140, %p141
      %s143 = ssub.s32 %s51, %s58
      %p144 = scmp.eq.s32.totalorder %s143, 0
      %s146 = sadd.s32 %s145, 1
      %s147 = scalar_select %p144, %s145, %s146
      %p150 = pneg %p144
      %p151 = scmp.eq.s32.totalorder %s51, 1
      %p152 = por %p150, %p151
      %p153 = scmp.ne.s32.totalorder %s145, %s148
      %p154 = scmp.eq.s32.totalorder %s51, 0
      %p155 = por %p153, %p154
      %p156 = scmp.ne.s32.totalorder %s145, %s148
      %p157 = scmp.eq.s32.totalorder %s56, 1
      %p158 = por %p156, %p157
      %p159 = scmp.ne.s32.totalorder %s148, %s149
      %p160 = scmp.eq.s32.totalorder %s56, 0
      %p161 = por %p159, %p160
      %p162 = scmp.ne.s32.totalorder %s148, %s149
      %p163 = scmp.eq.s32.totalorder %s57, 1
      %p164 = por %p162, %p163
      %p166 = scmp.ne.s32.totalorder %s149, %s165
      %p167 = scmp.eq.s32.totalorder %s57, 0
      %p168 = por %p166, %p167
      %s169 = ssub.s32 %s51, %s58
      %p170 = scmp.eq.s32.totalorder %s169, 0
      %s172 = sadd.s32 %s171, 1
      %s173 = scalar_select %p170, %s171, %s172
      %p176 = pneg %p170
      %p177 = scmp.eq.s32.totalorder %s51, 1
      %p178 = por %p176, %p177
      %p179 = scmp.ne.s32.totalorder %s171, %s174
      %p180 = scmp.eq.s32.totalorder %s51, 0
      %p181 = por %p179, %p180
      %p182 = scmp.ne.s32.totalorder %s171, %s174
      %p183 = scmp.eq.s32.totalorder %s56, 1
      %p184 = por %p182, %p183
      %p185 = scmp.ne.s32.totalorder %s174, %s175
      %p186 = scmp.eq.s32.totalorder %s56, 0
      %p187 = por %p185, %p186
      %p188 = scmp.ne.s32.totalorder %s174, %s175
      %p189 = scmp.eq.s32.totalorder %s57, 1
      %p190 = por %p188, %p189
      %p192 = scmp.ne.s32.totalorder %s175, %s191
      %p193 = scmp.eq.s32.totalorder %s57, 0
      %p194 = por %p192, %p193
      %s195 = ssub.s32 %s51, %s58
      %p196 = scmp.eq.s32.totalorder %s195, 0
      %s198 = sadd.s32 %s197, 1
      %s199 = scalar_select %p196, %s197, %s198
      %p202 = pneg %p196
      %p203 = scmp.eq.s32.totalorder %s51, 1
      %p204 = por %p202, %p203
      %p205 = scmp.ne.s32.totalorder %s197, %s200
      %p206 = scmp.eq.s32.totalorder %s51, 0
      %p207 = por %p205, %p206
      %p208 = scmp.ne.s32.totalorder %s197, %s200
      %p209 = scmp.eq.s32.totalorder %s56, 1
      %p210 = por %p208, %p209
      %p211 = scmp.ne.s32.totalorder %s200, %s201
      %p212 = scmp.eq.s32.totalorder %s56, 0
      %p213 = por %p211, %p212
      %p214 = scmp.ne.s32.totalorder %s200, %s201
      %p215 = scmp.eq.s32.totalorder %s57, 1
      %p216 = por %p214, %p215
      %p218 = scmp.ne.s32.totalorder %s201, %s217
      %p219 = scmp.eq.s32.totalorder %s57, 0
      %p220 = por %p218, %p219
      %s221 = ssub.s32 %s51, %s58
      %p222 = scmp.eq.s32.totalorder %s221, 0
      %s224 = sadd.s32 %s223, 1
      %s225 = scalar_select %p222, %s223, %s224
      %p228 = pneg %p222
      %p229 = scmp.eq.s32.totalorder %s51, 1
      %p230 = por %p228, %p229
      %p231 = scmp.ne.s32.totalorder %s223, %s226
      %p232 = scmp.eq.s32.totalorder %s51, 0
      %p233 = por %p231, %p232
      %p234 = scmp.ne.s32.totalorder %s223, %s226
      %p235 = scmp.eq.s32.totalorder %s56, 1
      %p236 = por %p234, %p235
      %p237 = scmp.ne.s32.totalorder %s226, %s227
      %p238 = scmp.eq.s32.totalorder %s56, 0
      %p239 = por %p237, %p238
      %p240 = scmp.ne.s32.totalorder %s226, %s227
      %p241 = scmp.eq.s32.totalorder %s57, 1
      %p242 = por %p240, %p241
      %p244 = scmp.ne.s32.totalorder %s227, %s243
      %p245 = scmp.eq.s32.totalorder %s57, 0
      %p246 = por %p244, %p245
      %s247 = ssub.s32 %s51, %s58
      %p248 = scmp.eq.s32.totalorder %s247, 0
      %s250 = sadd.s32 %s249, 1
      %s251 = scalar_select %p248, %s249, %s250
      %p254 = pneg %p248
      %p255 = scmp.eq.s32.totalorder %s51, 1
      %p256 = por %p254, %p255
      %p257 = scmp.ne.s32.totalorder %s249, %s252
      %p258 = scmp.eq.s32.totalorder %s51, 0
      %p259 = por %p257, %p258
      %p260 = scmp.ne.s32.totalorder %s249, %s252
      %p261 = scmp.eq.s32.totalorder %s56, 1
      %p262 = por %p260, %p261
      %p263 = scmp.ne.s32.totalorder %s252, %s253
      %p264 = scmp.eq.s32.totalorder %s56, 0
      %p265 = por %p263, %p264
      %p266 = scmp.ne.s32.totalorder %s252, %s253
      %p267 = scmp.eq.s32.totalorder %s57, 1
      %p268 = por %p266, %p267
      %p270 = scmp.ne.s32.totalorder %s253, %s269
      %p271 = scmp.eq.s32.totalorder %s57, 0
      %p272 = por %p270, %p271
      %s273 = ssub.s32 %s51, %s58
      %p274 = scmp.eq.s32.totalorder %s273, 0
      %s276 = sadd.s32 %s275, 1
      %s277 = scalar_select %p274, %s275, %s276
      %p280 = pneg %p274
      %p281 = scmp.eq.s32.totalorder %s51, 1
      %p282 = por %p280, %p281
      %p283 = scmp.ne.s32.totalorder %s275, %s278
      %p284 = scmp.eq.s32.totalorder %s51, 0
      %p285 = por %p283, %p284
      %p286 = scmp.ne.s32.totalorder %s275, %s278
      %p287 = scmp.eq.s32.totalorder %s56, 1
      %p288 = por %p286, %p287
      %p289 = scmp.ne.s32.totalorder %s278, %s279
      %p290 = scmp.eq.s32.totalorder %s56, 0
      %p291 = por %p289, %p290
      %p292 = scmp.ne.s32.totalorder %s278, %s279
      %p293 = scmp.eq.s32.totalorder %s57, 1
      %p294 = por %p292, %p293
      %p296 = scmp.ne.s32.totalorder %s279, %s295
      %p297 = scmp.eq.s32.totalorder %s57, 0
      %p298 = por %p296, %p297
      %s299 = ssub.s32 %s51, %s58
      %p300 = scmp.eq.s32.totalorder %s299, 0
      %s302 = sadd.s32 %s301, 1
      %s303 = scalar_select %p300, %s301, %s302
      %p306 = pneg %p300
      %p307 = scmp.eq.s32.totalorder %s51, 1
      %p308 = por %p306, %p307
      %p309 = scmp.ne.s32.totalorder %s301, %s304
      %p310 = scmp.eq.s32.totalorder %s51, 0
      %p311 = por %p309, %p310
      %p312 = scmp.ne.s32.totalorder %s301, %s304
      %p313 = scmp.eq.s32.totalorder %s56, 1
      %p314 = por %p312, %p313
      %p315 = scmp.ne.s32.totalorder %s304, %s305
      %p316 = scmp.eq.s32.totalorder %s56, 0
      %p317 = por %p315, %p316
      %p318 = scmp.ne.s32.totalorder %s304, %s305
      %p319 = scmp.eq.s32.totalorder %s57, 1
      %p320 = por %p318, %p319
      %p322 = scmp.ne.s32.totalorder %s305, %s321
      %p323 = scmp.eq.s32.totalorder %s57, 0
      %p324 = por %p322, %p323
      %s325 = ssub.s32 %s51, %s58
      %p326 = scmp.eq.s32.totalorder %s325, 0
      %s328 = sadd.s32 %s327, 1
      %s329 = scalar_select %p326, %s327, %s328
      %p332 = pneg %p326
      %p333 = scmp.eq.s32.totalorder %s51, 1
      %p334 = por %p332, %p333
      %p335 = scmp.ne.s32.totalorder %s327, %s330
      %p336 = scmp.eq.s32.totalorder %s51, 0
      %p337 = por %p335, %p336
      %p338 = scmp.ne.s32.totalorder %s327, %s330
      %p339 = scmp.eq.s32.totalorder %s56, 1
      %p340 = por %p338, %p339
      %p341 = scmp.ne.s32.totalorder %s330, %s331
      %p342 = scmp.eq.s32.totalorder %s56, 0
      %p343 = por %p341, %p342
      %p344 = scmp.ne.s32.totalorder %s330, %s331
      %p345 = scmp.eq.s32.totalorder %s57, 1
      %p346 = por %p344, %p345
      %p348 = scmp.ne.s32.totalorder %s331, %s347
      %p349 = scmp.eq.s32.totalorder %s57, 0
      %p350 = por %p348, %p349
      %s351 = ssub.s32 %s51, %s58
      %p352 = scmp.eq.s32.totalorder %s351, 0
      %s354 = sadd.s32 %s353, 1
      %s355 = scalar_select %p352, %s353, %s354
      %p358 = pneg %p352
      %p359 = scmp.eq.s32.totalorder %s51, 1
      %p360 = por %p358, %p359
      %p361 = scmp.ne.s32.totalorder %s353, %s356
      %p362 = scmp.eq.s32.totalorder %s51, 0
      %p363 = por %p361, %p362
      %p364 = scmp.ne.s32.totalorder %s353, %s356
      %p365 = scmp.eq.s32.totalorder %s56, 1
      %p366 = por %p364, %p365
      %p367 = scmp.ne.s32.totalorder %s356, %s357
      %p368 = scmp.eq.s32.totalorder %s56, 0
      %p369 = por %p367, %p368
      %p370 = scmp.ne.s32.totalorder %s356, %s357
      %p371 = scmp.eq.s32.totalorder %s57, 1
      %p372 = por %p370, %p371
      %p374 = scmp.ne.s32.totalorder %s357, %s373
      %p375 = scmp.eq.s32.totalorder %s57, 0
      %p376 = por %p374, %p375
      %s377 = ssub.s32 %s51, %s58
      %p378 = scmp.eq.s32.totalorder %s377, 0
      %s380 = sadd.s32 %s379, 1
      %s381 = scalar_select %p378, %s379, %s380
      %p384 = pneg %p378
      %p385 = scmp.eq.s32.totalorder %s51, 1
      %p386 = por %p384, %p385
      %p387 = scmp.ne.s32.totalorder %s379, %s382
      %p388 = scmp.eq.s32.totalorder %s51, 0
      %p389 = por %p387, %p388
      %p390 = scmp.ne.s32.totalorder %s379, %s382
      %p391 = scmp.eq.s32.totalorder %s56, 1
      %p392 = por %p390, %p391
      %p393 = scmp.ne.s32.totalorder %s382, %s383
      %p394 = scmp.eq.s32.totalorder %s56, 0
      %p395 = por %p393, %p394
      %p396 = scmp.ne.s32.totalorder %s382, %s383
      %p397 = scmp.eq.s32.totalorder %s57, 1
      %p398 = por %p396, %p397
      %p400 = scmp.ne.s32.totalorder %s383, %s399
      %p401 = scmp.eq.s32.totalorder %s57, 0
      %p402 = por %p400, %p401
      %s403 = ssub.s32 %s51, %s58
      %p404 = scmp.eq.s32.totalorder %s403, 0
      %s406 = sadd.s32 %s405, 1
      %s407 = scalar_select %p404, %s405, %s406
      %p410 = pneg %p404
      %p411 = scmp.eq.s32.totalorder %s51, 1
      %p412 = por %p410, %p411
      %p413 = scmp.ne.s32.totalorder %s405, %s408
      %p414 = scmp.eq.s32.totalorder %s51, 0
      %p415 = por %p413, %p414
      %p416 = scmp.ne.s32.totalorder %s405, %s408
      %p417 = scmp.eq.s32.totalorder %s56, 1
      %p418 = por %p416, %p417
      %p419 = scmp.ne.s32.totalorder %s408, %s409
      %p420 = scmp.eq.s32.totalorder %s56, 0
      %p421 = por %p419, %p420
      %p422 = scmp.ne.s32.totalorder %s408, %s409
      %p423 = scmp.eq.s32.totalorder %s57, 1
      %p424 = por %p422, %p423
      %p426 = scmp.ne.s32.totalorder %s409, %s425
      %p427 = scmp.eq.s32.totalorder %s57, 0
      %p428 = por %p426, %p427
      %s429 = ssub.s32 %s51, %s58
      %p430 = scmp.eq.s32.totalorder %s429, 0
      %s432 = sadd.s32 %s431, 1
      %s433 = scalar_select %p430, %s431, %s432
      %p436 = pneg %p430
      %p437 = scmp.eq.s32.totalorder %s51, 1
      %p438 = por %p436, %p437
      %p439 = scmp.ne.s32.totalorder %s431, %s434
      %p440 = scmp.eq.s32.totalorder %s51, 0
      %p441 = por %p439, %p440
      %p442 = scmp.ne.s32.totalorder %s431, %s434
      %p443 = scmp.eq.s32.totalorder %s56, 1
      %p444 = por %p442, %p443
      %p445 = scmp.ne.s32.totalorder %s434, %s435
      %p446 = scmp.eq.s32.totalorder %s56, 0
      %p447 = por %p445, %p446
      %p448 = scmp.ne.s32.totalorder %s434, %s435
      %p449 = scmp.eq.s32.totalorder %s57, 1
      %p450 = por %p448, %p449
      %p452 = scmp.ne.s32.totalorder %s435, %s451
      %p453 = scmp.eq.s32.totalorder %s57, 0
      %p454 = por %p452, %p453
      %s456 = sadd.s32 %s455, 1
      %p459 = scmp.eq.s32.totalorder %s51, 1
      %p460 = scmp.ne.s32.totalorder %s455, %s457
      %p461 = scmp.eq.s32.totalorder %s51, 0
      %p462 = por %p460, %p461
      %p463 = scmp.ne.s32.totalorder %s455, %s457
      %p464 = scmp.eq.s32.totalorder %s56, 1
      %p465 = por %p463, %p464
      %p466 = scmp.ne.s32.totalorder %s457, %s458
      %p467 = scmp.eq.s32.totalorder %s56, 0
      %p468 = por %p466, %p467
      %p469 = scmp.ne.s32.totalorder %s457, %s458
      %p470 = scmp.eq.s32.totalorder %s57, 1
      %p471 = por %p469, %p470
      %p473 = scmp.ne.s32.totalorder %s458, %s472
      %p474 = scmp.eq.s32.totalorder %s57, 0
      %p475 = por %p473, %p474
      %s477 = sadd.s32 %s476, 1
      %p480 = scmp.eq.s32.totalorder %s51, 1
      %p481 = scmp.ne.s32.totalorder %s476, %s478
      %p482 = scmp.eq.s32.totalorder %s51, 0
      %p483 = por %p481, %p482
      %p484 = scmp.ne.s32.totalorder %s476, %s478
      %p485 = scmp.eq.s32.totalorder %s56, 1
      %p486 = por %p484, %p485
      %p487 = scmp.ne.s32.totalorder %s478, %s479
      %p488 = scmp.eq.s32.totalorder %s56, 0
      %p489 = por %p487, %p488
      %p490 = scmp.ne.s32.totalorder %s478, %s479
      %p491 = scmp.eq.s32.totalorder %s57, 1
      %p492 = por %p490, %p491
      %p494 = scmp.ne.s32.totalorder %s479, %s493
      %p495 = scmp.eq.s32.totalorder %s57, 0
      %p496 = por %p494, %p495
      %s498 = sadd.s32 %s497, 1
      %p501 = scmp.eq.s32.totalorder %s51, 1
      %p502 = scmp.ne.s32.totalorder %s497, %s499
      %p503 = scmp.eq.s32.totalorder %s51, 0
      %p504 = por %p502, %p503
      %p505 = scmp.ne.s32.totalorder %s497, %s499
      %p506 = scmp.eq.s32.totalorder %s56, 1
      %p507 = por %p505, %p506
      %p508 = scmp.ne.s32.totalorder %s499, %s500
      %p509 = scmp.eq.s32.totalorder %s56, 0
      %p510 = por %p508, %p509
      %p511 = scmp.ne.s32.totalorder %s499, %s500
      %p512 = scmp.eq.s32.totalorder %s57, 1
      %p513 = por %p511, %p512
      %p515 = scmp.ne.s32.totalorder %s500, %s514
      %p516 = scmp.eq.s32.totalorder %s57, 0
      %p517 = por %p515, %p516
      %s519 = sadd.s32 %s518, 1
      %p522 = scmp.eq.s32.totalorder %s51, 1
      %p523 = scmp.ne.s32.totalorder %s518, %s520
      %p524 = scmp.eq.s32.totalorder %s51, 0
      %p525 = por %p523, %p524
      %p526 = scmp.ne.s32.totalorder %s518, %s520
      %p527 = scmp.eq.s32.totalorder %s56, 1
      %p528 = por %p526, %p527
      %p529 = scmp.ne.s32.totalorder %s520, %s521
      %p530 = scmp.eq.s32.totalorder %s56, 0
      %p531 = por %p529, %p530
      %p532 = scmp.ne.s32.totalorder %s520, %s521
      %p533 = scmp.eq.s32.totalorder %s57, 1
      %p534 = por %p532, %p533
      %p536 = scmp.ne.s32.totalorder %s521, %s535
      %p537 = scmp.eq.s32.totalorder %s57, 0
      %p538 = por %p536, %p537
      %s540 = sadd.s32 %s539, 1
      %p543 = scmp.eq.s32.totalorder %s51, 1
      %p544 = scmp.ne.s32.totalorder %s539, %s541
      %p545 = scmp.eq.s32.totalorder %s51, 0
      %p546 = por %p544, %p545
      %p547 = scmp.ne.s32.totalorder %s539, %s541
      %p548 = scmp.eq.s32.totalorder %s56, 1
      %p549 = por %p547, %p548
      %p550 = scmp.ne.s32.totalorder %s541, %s542
      %p551 = scmp.eq.s32.totalorder %s56, 0
      %p552 = por %p550, %p551
      %p553 = scmp.ne.s32.totalorder %s541, %s542
      %p554 = scmp.eq.s32.totalorder %s57, 1
      %p555 = por %p553, %p554
      %p557 = scmp.ne.s32.totalorder %s542, %s556
      %p558 = scmp.eq.s32.totalorder %s57, 0
      %p559 = por %p557, %p558
      %s561 = sadd.s32 %s560, 1
      %p564 = scmp.eq.s32.totalorder %s51, 1
      %p565 = scmp.ne.s32.totalorder %s560, %s562
      %p566 = scmp.eq.s32.totalorder %s51, 0
      %p567 = por %p565, %p566
      %p568 = scmp.ne.s32.totalorder %s560, %s562
      %p569 = scmp.eq.s32.totalorder %s56, 1
      %p570 = por %p568, %p569
      %p571 = scmp.ne.s32.totalorder %s562, %s563
      %p572 = scmp.eq.s32.totalorder %s56, 0
      %p573 = por %p571, %p572
      %p574 = scmp.ne.s32.totalorder %s562, %s563
      %p575 = scmp.eq.s32.totalorder %s57, 1
      %p576 = por %p574, %p575
      %p578 = scmp.ne.s32.totalorder %s563, %s577
      %p579 = scmp.eq.s32.totalorder %s57, 0
      %p580 = por %p578, %p579
      %s582 = sadd.s32 %s581, 1
      %p585 = scmp.eq.s32.totalorder %s51, 1
      %p586 = scmp.ne.s32.totalorder %s581, %s583
      %p587 = scmp.eq.s32.totalorder %s51, 0
      %p588 = por %p586, %p587
      %p589 = scmp.ne.s32.totalorder %s581, %s583
      %p590 = scmp.eq.s32.totalorder %s56, 1
      %p591 = por %p589, %p590
      %p592 = scmp.ne.s32.totalorder %s583, %s584
      %p593 = scmp.eq.s32.totalorder %s56, 0
      %p594 = por %p592, %p593
      %p595 = scmp.ne.s32.totalorder %s583, %s584
      %p596 = scmp.eq.s32.totalorder %s57, 1
      %p597 = por %p595, %p596
      %p599 = scmp.ne.s32.totalorder %s584, %s598
      %p600 = scmp.eq.s32.totalorder %s57, 0
      %p601 = por %p599, %p600
      %s603 = sadd.s32 %s602, 1
      %p606 = scmp.eq.s32.totalorder %s51, 1
      %p607 = scmp.ne.s32.totalorder %s602, %s604
      %p608 = scmp.eq.s32.totalorder %s51, 0
      %p609 = por %p607, %p608
      %p610 = scmp.ne.s32.totalorder %s602, %s604
      %p611 = scmp.eq.s32.totalorder %s56, 1
      %p612 = por %p610, %p611
      %p613 = scmp.ne.s32.totalorder %s604, %s605
      %p614 = scmp.eq.s32.totalorder %s56, 0
      %p615 = por %p613, %p614
      %p616 = scmp.ne.s32.totalorder %s604, %s605
      %p617 = scmp.eq.s32.totalorder %s57, 1
      %p618 = por %p616, %p617
      %p620 = scmp.ne.s32.totalorder %s605, %s619
      %p621 = scmp.eq.s32.totalorder %s57, 0
      %p622 = por %p620, %p621
      %p623 = scmp.le.s32.totalorder 1, %s51
      %p624 = scmp.lt.s32.totalorder %s51, 3
      %p625 = pnand %p623, %p624
      %p626 = pneg %p625
      // Predicated region
      $region9: #{gesture_vit_forward.1} parent=5 // pred_check
        _
      $region10: #{gesture_vit_forward.1} parent=5 // pred_check_branch
        %628 = sbr.rel (%p625) target = $region12
      $region11: #{gesture_vit_forward.1} parent=5 // pred_region
        %s629 = ssub.s32 %s51, 1
        // Predicated region
        $region13: #{gesture_vit_forward.1} parent=11 // pred_check
          %p630 = pneg %p72
        $region14: #{gesture_vit_forward.1} parent=11 // pred_check_branch
          %632 = sbr.rel (%p630) target = $region16
        $region15: #{gesture_vit_forward.1} parent=11 // pred_region
          _
        $region16: #{gesture_vit_forward.1} parent=11 // pred_fallthru
          _
        // Predicated region
        $region17: #{gesture_vit_forward.1} parent=11 // pred_check
          %p633 = pneg %p93
        $region18: #{gesture_vit_forward.1} parent=11 // pred_check_branch
          %635 = sbr.rel (%p633) target = $region20
        $region19: #{gesture_vit_forward.1} parent=11 // pred_region
          _
        $region20: #{gesture_vit_forward.1} parent=11 // pred_fallthru
          _
        // Predicated region
        $region21: #{gesture_vit_forward.1} parent=11 // pred_check
          %p636 = pneg %p114
        $region22: #{gesture_vit_forward.1} parent=11 // pred_check_branch
          %638 = sbr.rel (%p636) target = $region24
        $region23: #{gesture_vit_forward.1} parent=11 // pred_region
          _
        $region24: #{gesture_vit_forward.1} parent=11 // pred_fallthru
          _
        // Predicated region
        $region25: #{gesture_vit_forward.1} parent=11 // pred_check
          %p639 = pneg %p135
        $region26: #{gesture_vit_forward.1} parent=11 // pred_check_branch
          %641 = sbr.rel (%p639) target = $region28
        $region27: #{gesture_vit_forward.1} parent=11 // pred_region
          _
        $region28: #{gesture_vit_forward.1} parent=11 // pred_fallthru
          _
        // Predicated region
        $region29: #{gesture_vit_forward.1} parent=11 // pred_check
          %p642 = pneg %p468
        $region30: #{gesture_vit_forward.1} parent=11 // pred_check_branch
          %644 = sbr.rel (%p642) target = $region32
        $region31: #{gesture_vit_forward.1} parent=11 // pred_region
          _
        $region32: #{gesture_vit_forward.1} parent=11 // pred_fallthru
          _
        // Predicated region
        $region33: #{gesture_vit_forward.1} parent=11 // pred_check
          %p645 = pneg %p489
        $region34: #{gesture_vit_forward.1} parent=11 // pred_check_branch
          %647 = sbr.rel (%p645) target = $region36
        $region35: #{gesture_vit_forward.1} parent=11 // pred_region
          %s649 = ssub.s32 16, 16
          %650 = vsyncadd [#allocation19], %s649
          %s652 = sshll.u32 [#allocation20], 4
          %s653 = int_to_ptr.vmem [resolvable:$true] %s652
          %655 = dma.hbm_to_vmem [thread:$0]  %s17, 16, %s653, [#allocation19]
        $region36: #{gesture_vit_forward.1} parent=11 // pred_fallthru
          _
        // Predicated region
        $region37: #{gesture_vit_forward.1} parent=11 // pred_check
          %p656 = pneg %p510
        $region38: #{gesture_vit_forward.1} parent=11 // pred_check_branch
          %658 = sbr.rel (%p656) target = $region40
        $region39: #{gesture_vit_forward.1} parent=11 // pred_region
          _
        $region40: #{gesture_vit_forward.1} parent=11 // pred_fallthru
          _
        // Predicated region
        $region41: #{gesture_vit_forward.1} parent=11 // pred_check
          %p659 = pneg %p531
        $region42: #{gesture_vit_forward.1} parent=11 // pred_check_branch
          %661 = sbr.rel (%p659) target = $region44
        $region43: #{gesture_vit_forward.1} parent=11 // pred_region
          %s663 = ssub.s32 16, 16
          %664 = vsyncadd [#allocation22], %s663
          %s666 = sshll.u32 [#allocation21], 4
          %s667 = int_to_ptr.vmem [resolvable:$true] %s666
          %669 = dma.hbm_to_vmem [thread:$0]  %s19, 16, %s667, [#allocation22]
        $region44: #{gesture_vit_forward.1} parent=11 // pred_fallthru
          _
        // Predicated region
        $region45: #{gesture_vit_forward.1} parent=11 // pred_check
          %p670 = pneg %p552
        $region46: #{gesture_vit_forward.1} parent=11 // pred_check_branch
          %672 = sbr.rel (%p670) target = $region48
        $region47: #{gesture_vit_forward.1} parent=11 // pred_region
          _
        $region48: #{gesture_vit_forward.1} parent=11 // pred_fallthru
          _
        // Predicated region
        $region49: #{gesture_vit_forward.1} parent=11 // pred_check
          %p673 = pneg %p573
        $region50: #{gesture_vit_forward.1} parent=11 // pred_check_branch
          %675 = sbr.rel (%p673) target = $region52
        $region51: #{gesture_vit_forward.1} parent=11 // pred_region
          %s677 = ssub.s32 16, 16
          %678 = vsyncadd [#allocation22], %s677
          %s680 = sshll.u32 [#allocation23], 4
          %s681 = int_to_ptr.vmem [resolvable:$true] %s680
          %683 = dma.hbm_to_vmem [thread:$0]  %s21, 16, %s681, [#allocation22]
        $region52: #{gesture_vit_forward.1} parent=11 // pred_fallthru
          _
      $region12: #{gesture_vit_forward.1} parent=5 // pred_fallthru
        _
      %p684 = scmp.lt.s32.totalorder %s51, 2
      // Predicated region
      $region53: #{gesture_vit_forward.1} parent=5 // pred_check
        %p685 = pneg %p684
      $region54: #{gesture_vit_forward.1} parent=5 // pred_check_branch
        %687 = sbr.rel (%p685) target = $region56
      $region55: #{gesture_vit_forward.1} parent=5 // pred_region
        // Predicated region
        $region57: #{gesture_vit_forward.1} parent=55 // pred_check
          %p688 = pneg %p155
        $region58: #{gesture_vit_forward.1} parent=55 // pred_check_branch
          %690 = sbr.rel (%p688) target = $region60
        $region59: #{gesture_vit_forward.1} parent=55 // pred_region
          %s691 = sand.u32 %s145, 1
          %s692 = scalar_lea.sflag [#allocation4], %s691
          %s693 = sand.u32 %s145, 1
          %s694 = smul.addr %s693, 192
          %s695 = scalar_lea.vmem [#allocation3], %s694
          %s697 = ssub.s32 3072, 3072
          %698 = vsyncadd %s692, %s697
          %s699 = smul.addr %s51, 48
          %s700 = smul.addr %s699, 64
          %s701 = scalar_lea.hbm %s4, %s700
          %s702 = sshll.u32 %s695, 4
          %s703 = int_to_ptr.vmem [resolvable:$true] %s702
          %708 = dma.hbm_to_vmem [thread:$0]  %s701, 3072, %s703, %s692, 192, 192, 12
        $region60: #{gesture_vit_forward.1} parent=55 // pred_fallthru
          _
        // Predicated region
        $region61: #{gesture_vit_forward.1} parent=55 // pred_check
          %p709 = pneg %p181
        $region62: #{gesture_vit_forward.1} parent=55 // pred_check_branch
          %711 = sbr.rel (%p709) target = $region64
        $region63: #{gesture_vit_forward.1} parent=55 // pred_region
          %s712 = sand.u32 %s51, 1
          %s713 = scalar_lea.sflag [#allocation7], %s712
          %s714 = sand.u32 %s171, 1
          %s715 = smul.addr %s714, 3
          %s716 = scalar_lea.vmem [#allocation6], %s715
          %s718 = ssub.s32 48, 48
          %719 = vsyncadd %s713, %s718
          %s720 = smul.addr %s51, 3
          %s721 = smul.addr %s720, 16
          %s722 = scalar_lea.hbm %s5, %s721
          %s724 = sshll.u32 %s716, 4
          %s725 = int_to_ptr.vmem [resolvable:$true] %s724
          %727 = dma.hbm_to_vmem [thread:$0]  %s722, 48, %s725, %s713
        $region64: #{gesture_vit_forward.1} parent=55 // pred_fallthru
          _
        // Predicated region
        $region65: #{gesture_vit_forward.1} parent=55 // pred_check
          %p728 = pneg %p207
        $region66: #{gesture_vit_forward.1} parent=55 // pred_check_branch
          %730 = sbr.rel (%p728) target = $region68
        $region67: #{gesture_vit_forward.1} parent=55 // pred_region
          %p731 = scmp.lt.s32.totalorder %s51, 1
          %s732 = scalar_select %p731, %s51, 1
          %s733 = smul.addr %s732, 16
          %s734 = smul.addr %s733, 4
          %s735 = scalar_lea.vmem %s6, %s734
        $region68: #{gesture_vit_forward.1} parent=55 // pred_fallthru
          _
        // Predicated region
        $region69: #{gesture_vit_forward.1} parent=55 // pred_check
          %p736 = pneg %p233
        $region70: #{gesture_vit_forward.1} parent=55 // pred_check_branch
          %738 = sbr.rel (%p736) target = $region72
        $region71: #{gesture_vit_forward.1} parent=55 // pred_region
          %p739 = scmp.lt.s32.totalorder %s51, 1
          %s740 = scalar_select %p739, %s51, 1
          %s741 = scalar_lea.vmem %s7, %s740
        $region72: #{gesture_vit_forward.1} parent=55 // pred_fallthru
          _
        // Predicated region
        $region73: #{gesture_vit_forward.1} parent=55 // pred_check
          %p742 = pneg %p259
        $region74: #{gesture_vit_forward.1} parent=55 // pred_check_branch
          %744 = sbr.rel (%p742) target = $region76
        $region75: #{gesture_vit_forward.1} parent=55 // pred_region
          %s745 = sand.u32 %s51, 1
          %s746 = scalar_lea.sflag [#allocation7], %s745
          %s747 = sand.u32 %s249, 1
          %s748 = scalar_lea.vmem [#allocation8], %s747
          %s750 = ssub.s32 16, 16
          %751 = vsyncadd %s746, %s750
          %s752 = smul.addr %s51, 16
          %s753 = scalar_lea.hbm %s8, %s752
          %s755 = sshll.u32 %s748, 4
          %s756 = int_to_ptr.vmem [resolvable:$true] %s755
          %758 = dma.hbm_to_vmem [thread:$0]  %s753, 16, %s756, %s746
        $region76: #{gesture_vit_forward.1} parent=55 // pred_fallthru
          _
        // Predicated region
        $region77: #{gesture_vit_forward.1} parent=55 // pred_check
          %p759 = pneg %p285
        $region78: #{gesture_vit_forward.1} parent=55 // pred_check_branch
          %761 = sbr.rel (%p759) target = $region80
        $region79: #{gesture_vit_forward.1} parent=55 // pred_region
          %s762 = sand.u32 %s51, 1
          %s763 = scalar_lea.sflag [#allocation10], %s762
          %s764 = sand.u32 %s275, 1
          %s765 = scalar_lea.vmem [#allocation9], %s764
          %s767 = ssub.s32 16, 16
          %768 = vsyncadd %s763, %s767
          %s769 = smul.addr %s51, 16
          %s770 = scalar_lea.hbm %s9, %s769
          %s772 = sshll.u32 %s765, 4
          %s773 = int_to_ptr.vmem [resolvable:$true] %s772
          %775 = dma.hbm_to_vmem [thread:$0]  %s770, 16, %s773, %s763
        $region80: #{gesture_vit_forward.1} parent=55 // pred_fallthru
          _
        // Predicated region
        $region81: #{gesture_vit_forward.1} parent=55 // pred_check
          %p776 = pneg %p311
        $region82: #{gesture_vit_forward.1} parent=55 // pred_check_branch
          %778 = sbr.rel (%p776) target = $region84
        $region83: #{gesture_vit_forward.1} parent=55 // pred_region
          %s779 = sand.u32 %s51, 1
          %s780 = scalar_lea.sflag [#allocation10], %s779
          %s781 = sand.u32 %s301, 1
          %s782 = smul.addr %s781, 256
          %s783 = scalar_lea.vmem [#allocation11], %s782
          %s785 = ssub.s32 4096, 4096
          %786 = vsyncadd %s780, %s785
          %s787 = smul.addr %s51, 64
          %s788 = smul.addr %s787, 64
          %s789 = scalar_lea.hbm %s10, %s788
          %s790 = sshll.u32 %s783, 4
          %s791 = int_to_ptr.vmem [resolvable:$true] %s790
          %796 = dma.hbm_to_vmem [thread:$0]  %s789, 4096, %s791, %s780, 256, 256, 16
        $region84: #{gesture_vit_forward.1} parent=55 // pred_fallthru
          _
        // Predicated region
        $region85: #{gesture_vit_forward.1} parent=55 // pred_check
          %p797 = pneg %p337
        $region86: #{gesture_vit_forward.1} parent=55 // pred_check_branch
          %799 = sbr.rel (%p797) target = $region88
        $region87: #{gesture_vit_forward.1} parent=55 // pred_region
          %s800 = sand.u32 %s51, 1
          %s801 = scalar_lea.sflag [#allocation13], %s800
          %s802 = sand.u32 %s327, 1
          %s803 = smul.addr %s802, 4
          %s804 = scalar_lea.vmem [#allocation12], %s803
          %s806 = ssub.s32 64, 64
          %807 = vsyncadd %s801, %s806
          %s808 = smul.addr %s51, 4
          %s809 = smul.addr %s808, 16
          %s810 = scalar_lea.hbm %s11, %s809
          %s812 = sshll.u32 %s804, 4
          %s813 = int_to_ptr.vmem [resolvable:$true] %s812
          %815 = dma.hbm_to_vmem [thread:$0]  %s810, 64, %s813, %s801
        $region88: #{gesture_vit_forward.1} parent=55 // pred_fallthru
          _
        // Predicated region
        $region89: #{gesture_vit_forward.1} parent=55 // pred_check
          %p816 = pneg %p363
        $region90: #{gesture_vit_forward.1} parent=55 // pred_check_branch
          %818 = sbr.rel (%p816) target = $region92
        $region91: #{gesture_vit_forward.1} parent=55 // pred_region
          %s819 = sand.u32 %s51, 1
          %s820 = scalar_lea.sflag [#allocation13], %s819
          %s821 = sand.u32 %s353, 1
          %s822 = smul.addr %s821, 256
          %s823 = scalar_lea.vmem [#allocation14], %s822
          %s825 = ssub.s32 4096, 4096
          %826 = vsyncadd %s820, %s825
          %s827 = smul.addr %s51, 64
          %s828 = smul.addr %s827, 64
          %s829 = scalar_lea.hbm %s12, %s828
          %s830 = sshll.u32 %s823, 4
          %s831 = int_to_ptr.vmem [resolvable:$true] %s830
          %836 = dma.hbm_to_vmem [thread:$0]  %s829, 4096, %s831, %s820, 64, 64, 4
        $region92: #{gesture_vit_forward.1} parent=55 // pred_fallthru
          _
        // Predicated region
        $region93: #{gesture_vit_forward.1} parent=55 // pred_check
          %p837 = pneg %p389
        $region94: #{gesture_vit_forward.1} parent=55 // pred_check_branch
          %839 = sbr.rel (%p837) target = $region96
        $region95: #{gesture_vit_forward.1} parent=55 // pred_region
          %s840 = sand.u32 %s51, 1
          %s841 = scalar_lea.sflag [#allocation16], %s840
          %s842 = sand.u32 %s379, 1
          %s843 = scalar_lea.vmem [#allocation15], %s842
          %s845 = ssub.s32 16, 16
          %846 = vsyncadd %s841, %s845
          %s847 = smul.addr %s51, 16
          %s848 = scalar_lea.hbm %s13, %s847
          %s850 = sshll.u32 %s843, 4
          %s851 = int_to_ptr.vmem [resolvable:$true] %s850
          %853 = dma.hbm_to_vmem [thread:$0]  %s848, 16, %s851, %s841
        $region96: #{gesture_vit_forward.1} parent=55 // pred_fallthru
          _
        // Predicated region
        $region97: #{gesture_vit_forward.1} parent=55 // pred_check
          %p854 = pneg %p415
        $region98: #{gesture_vit_forward.1} parent=55 // pred_check_branch
          %856 = sbr.rel (%p854) target = $region100
        $region99: #{gesture_vit_forward.1} parent=55 // pred_region
          %s857 = sand.u32 %s51, 1
          %s858 = scalar_lea.sflag [#allocation16], %s857
          %s859 = sand.u32 %s405, 1
          %s860 = scalar_lea.vmem [#allocation17], %s859
          %s862 = ssub.s32 16, 16
          %863 = vsyncadd %s858, %s862
          %s864 = smul.addr %s51, 16
          %s865 = scalar_lea.hbm %s14, %s864
          %s867 = sshll.u32 %s860, 4
          %s868 = int_to_ptr.vmem [resolvable:$true] %s867
          %870 = dma.hbm_to_vmem [thread:$0]  %s865, 16, %s868, %s858
        $region100: #{gesture_vit_forward.1} parent=55 // pred_fallthru
          _
        // Predicated region
        $region101: #{gesture_vit_forward.1} parent=55 // pred_check
          %p871 = pneg %p441
        $region102: #{gesture_vit_forward.1} parent=55 // pred_check_branch
          %873 = sbr.rel (%p871) target = $region104
        $region103: #{gesture_vit_forward.1} parent=55 // pred_region
          %s874 = sand.u32 %s51, 1
          %s875 = scalar_lea.sflag [#allocation19], %s874
          %s876 = sand.u32 %s431, 1
          %s877 = scalar_lea.vmem [#allocation18], %s876
          %s879 = ssub.s32 16, 16
          %880 = vsyncadd %s875, %s879
          %s881 = smul.addr %s51, 16
          %s882 = scalar_lea.hbm %s15, %s881
          %s884 = sshll.u32 %s877, 4
          %s885 = int_to_ptr.vmem [resolvable:$true] %s884
          %887 = dma.hbm_to_vmem [thread:$0]  %s882, 16, %s885, %s875
        $region104: #{gesture_vit_forward.1} parent=55 // pred_fallthru
          _
      $region56: #{gesture_vit_forward.1} parent=5 // pred_fallthru
        _
      %p888 = scmp.le.s32.totalorder 1, %s51
      %p889 = scmp.lt.s32.totalorder %s51, 3
      %p890 = pnand %p888, %p889
      %p891 = pneg %p890
      // Predicated region
      $region105: #{gesture_vit_forward.1} parent=5 // pred_check
        _
      $region106: #{gesture_vit_forward.1} parent=5 // pred_check_branch
        %893 = sbr.rel (%p890) target = $region108
      $region107: #{gesture_vit_forward.1} parent=5 // pred_region
        %s894 = ssub.s32 %s51, 1
        %s895 = sand.u32 %s148, 1
        %s896 = scalar_lea.sflag [#allocation4], %s895
        %s897 = sand.u32 %s148, 1
        %s898 = smul.addr %s897, 192
        %s899 = scalar_lea.vmem [#allocation3], %s898
        // Predicated region
        $region109: #{gesture_vit_forward.1} parent=107 // pred_check
          %p900 = pneg %p161
        $region110: #{gesture_vit_forward.1} parent=107 // pred_check_branch
          %902 = sbr.rel (%p900) target = $region112
        $region111: #{gesture_vit_forward.1} parent=107 // pred_region
          %903 = dma.done %s896, 3072
        $region112: #{gesture_vit_forward.1} parent=107 // pred_fallthru
          _
        %s904 = sand.u32 %s56, 1
        %s905 = scalar_lea.sflag [#allocation7], %s904
        %s906 = sand.u32 %s174, 1
        %s907 = smul.addr %s906, 3
        %s908 = scalar_lea.vmem [#allocation6], %s907
        // Predicated region
        $region113: #{gesture_vit_forward.1} parent=107 // pred_check
          %p909 = pneg %p187
        $region114: #{gesture_vit_forward.1} parent=107 // pred_check_branch
          %911 = sbr.rel (%p909) target = $region116
        $region115: #{gesture_vit_forward.1} parent=107 // pred_region
          %912 = dma.done %s905, 48
        $region116: #{gesture_vit_forward.1} parent=107 // pred_fallthru
          _
        %s913 = sand.u32 %s56, 1
        %s914 = scalar_lea.sflag [#allocation7], %s913
        %s915 = sand.u32 %s252, 1
        %s916 = scalar_lea.vmem [#allocation8], %s915
        // Predicated region
        $region117: #{gesture_vit_forward.1} parent=107 // pred_check
          %p917 = pneg %p265
        $region118: #{gesture_vit_forward.1} parent=107 // pred_check_branch
          %919 = sbr.rel (%p917) target = $region120
        $region119: #{gesture_vit_forward.1} parent=107 // pred_region
          %920 = dma.done %s914, 16
        $region120: #{gesture_vit_forward.1} parent=107 // pred_fallthru
          _
        %s921 = sand.u32 %s56, 1
        %s922 = scalar_lea.sflag [#allocation10], %s921
        %s923 = sand.u32 %s278, 1
        %s924 = scalar_lea.vmem [#allocation9], %s923
        // Predicated region
        $region121: #{gesture_vit_forward.1} parent=107 // pred_check
          %p925 = pneg %p291
        $region122: #{gesture_vit_forward.1} parent=107 // pred_check_branch
          %927 = sbr.rel (%p925) target = $region124
        $region123: #{gesture_vit_forward.1} parent=107 // pred_region
          %928 = dma.done %s922, 16
        $region124: #{gesture_vit_forward.1} parent=107 // pred_fallthru
          _
        %s929 = sand.u32 %s56, 1
        %s930 = scalar_lea.sflag [#allocation10], %s929
        %s931 = sand.u32 %s304, 1
        %s932 = smul.addr %s931, 256
        %s933 = scalar_lea.vmem [#allocation11], %s932
        // Predicated region
        $region125: #{gesture_vit_forward.1} parent=107 // pred_check
          %p934 = pneg %p317
        $region126: #{gesture_vit_forward.1} parent=107 // pred_check_branch
          %936 = sbr.rel (%p934) target = $region128
        $region127: #{gesture_vit_forward.1} parent=107 // pred_region
          %937 = dma.done %s930, 4096
        $region128: #{gesture_vit_forward.1} parent=107 // pred_fallthru
          _
        %s938 = sand.u32 %s56, 1
        %s939 = scalar_lea.sflag [#allocation13], %s938
        %s940 = sand.u32 %s330, 1
        %s941 = smul.addr %s940, 4
        %s942 = scalar_lea.vmem [#allocation12], %s941
        // Predicated region
        $region129: #{gesture_vit_forward.1} parent=107 // pred_check
          %p943 = pneg %p343
        $region130: #{gesture_vit_forward.1} parent=107 // pred_check_branch
          %945 = sbr.rel (%p943) target = $region132
        $region131: #{gesture_vit_forward.1} parent=107 // pred_region
          %946 = dma.done %s939, 64
        $region132: #{gesture_vit_forward.1} parent=107 // pred_fallthru
          _
        %s947 = sand.u32 %s56, 1
        %s948 = scalar_lea.sflag [#allocation13], %s947
        %s949 = sand.u32 %s356, 1
        %s950 = smul.addr %s949, 256
        %s951 = scalar_lea.vmem [#allocation14], %s950
        // Predicated region
        $region133: #{gesture_vit_forward.1} parent=107 // pred_check
          %p952 = pneg %p369
        $region134: #{gesture_vit_forward.1} parent=107 // pred_check_branch
          %954 = sbr.rel (%p952) target = $region136
        $region135: #{gesture_vit_forward.1} parent=107 // pred_region
          %955 = dma.done %s948, 4096
        $region136: #{gesture_vit_forward.1} parent=107 // pred_fallthru
          _
        %s956 = sand.u32 %s56, 1
        %s957 = scalar_lea.sflag [#allocation16], %s956
        %s958 = sand.u32 %s382, 1
        %s959 = scalar_lea.vmem [#allocation15], %s958
        // Predicated region
        $region137: #{gesture_vit_forward.1} parent=107 // pred_check
          %p960 = pneg %p395
        $region138: #{gesture_vit_forward.1} parent=107 // pred_check_branch
          %962 = sbr.rel (%p960) target = $region140
        $region139: #{gesture_vit_forward.1} parent=107 // pred_region
          %963 = dma.done %s957, 16
        $region140: #{gesture_vit_forward.1} parent=107 // pred_fallthru
          _
        %s964 = sand.u32 %s56, 1
        %s965 = scalar_lea.sflag [#allocation16], %s964
        %s966 = sand.u32 %s408, 1
        %s967 = scalar_lea.vmem [#allocation17], %s966
        // Predicated region
        $region141: #{gesture_vit_forward.1} parent=107 // pred_check
          %p968 = pneg %p421
        $region142: #{gesture_vit_forward.1} parent=107 // pred_check_branch
          %970 = sbr.rel (%p968) target = $region144
        $region143: #{gesture_vit_forward.1} parent=107 // pred_region
          %971 = dma.done %s965, 16
        $region144: #{gesture_vit_forward.1} parent=107 // pred_fallthru
          _
        %s972 = sand.u32 %s56, 1
        %s973 = scalar_lea.sflag [#allocation19], %s972
        %s974 = sand.u32 %s434, 1
        %s975 = scalar_lea.vmem [#allocation18], %s974
        // Predicated region
        $region145: #{gesture_vit_forward.1} parent=107 // pred_check
          %p976 = pneg %p447
        $region146: #{gesture_vit_forward.1} parent=107 // pred_check_branch
          %978 = sbr.rel (%p976) target = $region148
        $region147: #{gesture_vit_forward.1} parent=107 // pred_region
          %979 = dma.done %s973, 16
        $region148: #{gesture_vit_forward.1} parent=107 // pred_fallthru
          _
        // Predicated region
        $region149: #{gesture_vit_forward.1} parent=107 // pred_check
          %p980 = pneg %p489
        $region150: #{gesture_vit_forward.1} parent=107 // pred_check_branch
          %982 = sbr.rel (%p980) target = $region152
        $region151: #{gesture_vit_forward.1} parent=107 // pred_region
          %983 = dma.done [#allocation19], 16
        $region152: #{gesture_vit_forward.1} parent=107 // pred_fallthru
          _
        // Predicated region
        $region153: #{gesture_vit_forward.1} parent=107 // pred_check
          %p984 = pneg %p531
        $region154: #{gesture_vit_forward.1} parent=107 // pred_check_branch
          %986 = sbr.rel (%p984) target = $region156
        $region155: #{gesture_vit_forward.1} parent=107 // pred_region
          %987 = dma.done [#allocation22], 16
        $region156: #{gesture_vit_forward.1} parent=107 // pred_fallthru
          _
        // Predicated region
        $region157: #{gesture_vit_forward.1} parent=107 // pred_check
          %p988 = pneg %p573
        $region158: #{gesture_vit_forward.1} parent=107 // pred_check_branch
          %990 = sbr.rel (%p988) target = $region160
        $region159: #{gesture_vit_forward.1} parent=107 // pred_region
          %991 = dma.done [#allocation22], 16
        $region160: #{gesture_vit_forward.1} parent=107 // pred_fallthru
          _
        %p992 = pneg %p72
        %p993 = pneg %p69
        %p994 = pneg %p93
        %p995 = pneg %p90
        %p996 = pneg %p114
        %p997 = pneg %p111
        %p998 = pneg %p135
        %p999 = pneg %p132
        %s1000 = sand.u32 %s148, 1
        %s1001 = scalar_lea.sflag [#allocation4], %s1000
        %s1002 = sand.u32 %s148, 1
        %s1003 = smul.addr %s1002, 192
        %s1004 = scalar_lea.vmem [#allocation3], %s1003
        %p1005 = pneg %p161
        %p1006 = pneg %p158
        %s1007 = sand.u32 %s56, 1
        %s1008 = scalar_lea.sflag [#allocation7], %s1007
        %s1009 = sand.u32 %s174, 1
        %s1010 = smul.addr %s1009, 3
        %s1011 = scalar_lea.vmem [#allocation6], %s1010
        %p1012 = pneg %p187
        %p1013 = pneg %p184
        %p1014 = scmp.lt.s32.totalorder %s56, 1
        %s1015 = scalar_select %p1014, %s56, 1
        %s1016 = smul.addr %s1015, 16
        %s1017 = smul.addr %s1016, 4
        %s1018 = scalar_lea.vmem %s6, %s1017
        %p1019 = pneg %p213
        %p1020 = pneg %p210
        %p1021 = scmp.lt.s32.totalorder %s56, 1
        %s1022 = scalar_select %p1021, %s56, 1
        %s1023 = scalar_lea.vmem %s7, %s1022
        %p1024 = pneg %p239
        %p1025 = pneg %p236
        %s1026 = sand.u32 %s56, 1
        %s1027 = scalar_lea.sflag [#allocation7], %s1026
        %s1028 = sand.u32 %s252, 1
        %s1029 = scalar_lea.vmem [#allocation8], %s1028
        %p1030 = pneg %p265
        %p1031 = pneg %p262
        %s1032 = sand.u32 %s56, 1
        %s1033 = scalar_lea.sflag [#allocation10], %s1032
        %s1034 = sand.u32 %s278, 1
        %s1035 = scalar_lea.vmem [#allocation9], %s1034
        %p1036 = pneg %p291
        %p1037 = pneg %p288
        %s1038 = sand.u32 %s56, 1
        %s1039 = scalar_lea.sflag [#allocation10], %s1038
        %s1040 = sand.u32 %s304, 1
        %s1041 = smul.addr %s1040, 256
        %s1042 = scalar_lea.vmem [#allocation11], %s1041
        %p1043 = pneg %p317
        %p1044 = pneg %p314
        %s1045 = sand.u32 %s56, 1
        %s1046 = scalar_lea.sflag [#allocation13], %s1045
        %s1047 = sand.u32 %s330, 1
        %s1048 = smul.addr %s1047, 4
        %s1049 = scalar_lea.vmem [#allocation12], %s1048
        %p1050 = pneg %p343
        %p1051 = pneg %p340
        %s1052 = sand.u32 %s56, 1
        %s1053 = scalar_lea.sflag [#allocation13], %s1052
        %s1054 = sand.u32 %s356, 1
        %s1055 = smul.addr %s1054, 256
        %s1056 = scalar_lea.vmem [#allocation14], %s1055
        %p1057 = pneg %p369
        %p1058 = pneg %p366
        %s1059 = sand.u32 %s56, 1
        %s1060 = scalar_lea.sflag [#allocation16], %s1059
        %s1061 = sand.u32 %s382, 1
        %s1062 = scalar_lea.vmem [#allocation15], %s1061
        %p1063 = pneg %p395
        %p1064 = pneg %p392
        %s1065 = sand.u32 %s56, 1
        %s1066 = scalar_lea.sflag [#allocation16], %s1065
        %s1067 = sand.u32 %s408, 1
        %s1068 = scalar_lea.vmem [#allocation17], %s1067
        %p1069 = pneg %p421
        %p1070 = pneg %p418
        %s1071 = sand.u32 %s56, 1
        %s1072 = scalar_lea.sflag [#allocation19], %s1071
        %s1073 = sand.u32 %s434, 1
        %s1074 = scalar_lea.vmem [#allocation18], %s1073
        %p1075 = pneg %p447
        %p1076 = pneg %p444
        %p1077 = pneg %p468
        %p1078 = pneg %p465
        %p1079 = pneg %p489
        %p1080 = pneg %p486
        %p1081 = pneg %p510
        %p1082 = pneg %p507
        %p1083 = pneg %p531
        %p1084 = pneg %p528
        %p1085 = pneg %p552
        %p1086 = pneg %p549
        %p1087 = pneg %p573
        %p1088 = pneg %p570
        %p1089 = pneg %p594
        %p1090 = pneg %p591
        %p1091 = pneg %p615
        %p1092 = pneg %p612
        %p1093 = scmp.lt.s32.totalorder %s56, 1
        %s1094 = scalar_select %p1093, %s56, 1
        %s1095 = smul.addr %s1094, 16
        %s1096 = smul.addr %s1095, 4
        %s1097 = scalar_lea.vmem %s6, %s1096
        %p1098 = scmp.lt.s32.totalorder %s56, 1
        %s1099 = scalar_select %p1098, %s56, 1
        %s1100 = scalar_lea.vmem %s7, %s1099
        %p1102 = scmp.eq.s32.totalorder %s56, 0
        // Predicated region
        $region161: #{gesture_vit_forward.1} parent=107 // pred_check
          %p1103 = pneg %p1102
        $region162: #{gesture_vit_forward.1} parent=107 // pred_check_branch
          %1105 = sbr.rel (%p1103) target = $region164
        $region163: #{gesture_vit_forward.1} parent=107 // pred_region
          %v1106 = vld [vmem:[%s0] sm:$0xf]
          %v1107 = vld [vmem:[%s0 + $0x4] sm:$0xf]
          %v1108 = vld [vmem:[%s1] sm:$0xf]
          %v1109 = vld [vmem:[%s1 + $0x4] sm:$0xf]
          %v1110 = vld [vmem:[%s1 + $0x8] sm:$0xf]
          %v1111 = vld [vmem:[%s1 + $0xc] sm:$0xf]
          %v1112 = vld [vmem:[%s1 + $0x10] sm:$0xf]
          %v1113 = vld [vmem:[%s1 + $0x14] sm:$0xf]
          %v1114 = vld [vmem:[%s1 + $0x18] sm:$0xf]
          %v1115 = vld [vmem:[%s1 + $0x1c] sm:$0xf]
          %v1116 = vld [vmem:[%s1 + $0x20] sm:$0xf]
          %v1117 = vld [vmem:[%s1 + $0x24] sm:$0xf]
          %v1118 = vld [vmem:[%s1 + $0x28] sm:$0xf]
          %v1119 = vld [vmem:[%s1 + $0x2c] sm:$0xf]
          %v1120 = vld [vmem:[%s1 + $0x30] sm:$0xf]
          %v1121 = vld [vmem:[%s1 + $0x34] sm:$0xf]
          %v1122 = vld [vmem:[%s1 + $0x38] sm:$0xf]
          %v1123 = vld [vmem:[%s1 + $0x3c] sm:$0xf]
          %v1126 = vunpack.c.l.b16 %v1106
          %v1127 = vunpack.c.l.b16 %v1107
          %v1128 = vpack.c.b16 %v1127, %v1126
          %v1146 = vunpack.c.l.b16 %v1108
          %v1147 = vunpack.c.l.b16 %v1109
          %v1148 = vunpack.c.l.b16 %v1110
          %v1149 = vunpack.c.l.b16 %v1111
          %v1150 = vunpack.c.l.b16 %v1112
          %v1151 = vunpack.c.l.b16 %v1113
          %v1152 = vunpack.c.l.b16 %v1114
          %v1153 = vunpack.c.l.b16 %v1115
          %v1154 = vunpack.c.l.b16 %v1116
          %v1155 = vunpack.c.l.b16 %v1117
          %v1156 = vunpack.c.l.b16 %v1118
          %v1157 = vunpack.c.l.b16 %v1119
          %v1158 = vunpack.c.l.b16 %v1120
          %v1159 = vunpack.c.l.b16 %v1121
          %v1160 = vunpack.c.l.b16 %v1122
          %v1161 = vunpack.c.l.b16 %v1123
          %v1162 = vpack.c.b16 %v1147, %v1146
          %v1163 = vpack.c.b16 %v1149, %v1148
          %v1164 = vpack.c.b16 %v1151, %v1150
          %v1165 = vpack.c.b16 %v1153, %v1152
          %v1166 = vpack.c.b16 %v1155, %v1154
          %v1167 = vpack.c.b16 %v1157, %v1156
          %v1168 = vpack.c.b16 %v1159, %v1158
          %v1169 = vpack.c.b16 %v1161, %v1160
          %1178 = vmatprep.subr.bf16.mxu0 0
          %1179 = vmatpush1.bf16.msra.mxu0 %v1162
          %1180 = vmatprep.subr.bf16.mxu0 0
          %1181 = vmatpush1.bf16.msra.mxu0 %v1163
          %1182 = vmatprep.subr.bf16.mxu0 0
          %1183 = vmatpush1.bf16.msra.mxu0 %v1164
          %1184 = vmatprep.subr.bf16.mxu0 0
          %1185 = vmatpush1.bf16.msra.mxu0 %v1165
          %1186 = vmatprep.subr.bf16.mxu0 0
          %1187 = vmatpush1.bf16.msra.mxu0 %v1166
          %1188 = vmatprep.subr.bf16.mxu0 0
          %1189 = vmatpush1.bf16.msra.mxu0 %v1167
          %1190 = vmatprep.subr.bf16.mxu0 0
          %1191 = vmatpush1.bf16.msra.mxu0 %v1168
          %1192 = vmatprep.subr.bf16.mxu0 0
          %1193 = vmatpush1.bf16.msra.mxu0 %v1169
          %1194 = vmatprep.subr.bf16.mxu0 0
          %1195 = vmatpush1.bf16.msra.mxu0 0
          %1196 = vmatprep.subr.bf16.mxu0 0
          %1197 = vmatpush1.bf16.msra.mxu0 0
          %1198 = vmatprep.subr.bf16.mxu0 0
          %1199 = vmatpush1.bf16.msra.mxu0 0
          %1200 = vmatprep.subr.bf16.mxu0 0
          %1201 = vmatpush1.bf16.msra.mxu0 0
          %1202 = vmatprep.subr.bf16.mxu0 0
          %1203 = vmatpush1.bf16.msra.mxu0 0
          %1204 = vmatprep.subr.bf16.mxu0 0
          %1205 = vmatpush1.bf16.msra.mxu0 0
          %1206 = vmatprep.subr.bf16.mxu0 0
          %1207 = vmatpush1.bf16.msra.mxu0 0
          %1208 = vmatprep.subr.bf16.mxu0 0
          %1209 = vmatpush1.bf16.msra.mxu0 0
          %1210 = vmatprep.mubr.bf16.mxu0 0
          %1211 = vmatmul.mubr.bf16.gmra.mrb[0].mxu0 %v1128
          %v1212 = vpop.f32.mrb[0].mxu0
          %v1213 = vadd.f32 0.0, %v1212
          %v1214 = vpop.f32.mrb[0].mxu0
          %v1215 = vpop.f32.mrb[0].mxu0
          %v1216 = vadd.f32 0.0, %v1215
          %v1217 = vpop.f32.mrb[0].mxu0
          %1218 = vdwg.mxu0
          %v1219 = vld [vmem:[%s2] sm:$0xff]
          %v1220 = vadd.f32 %v1213, %v1219
          %v1221 = vadd.f32 %v1216, %v1219
          %1222 = vst [vmem:[#allocation2] sm:$0xff] %v1220
          %1223 = vst [vmem:[#allocation2 + $0x8] sm:$0xff] %v1221
        $region164: #{gesture_vit_forward.1} parent=107 // pred_fallthru
          _
        %v1224 = vld [vmem:[#allocation2] sm:$0xff]
        %v1225 = vld [vmem:[#allocation2 + $0x8] sm:$0xff]
        %v1226 = vpack.c.bf16 %v1225, %v1224
        %v1227 = vld [vmem:[%s899] sm:$0xff]
        %v1228 = vld [vmem:[%s899 + $0x8] sm:$0xf]
        %v1229 = vld [vmem:[%s899 + $0xc] sm:$0xff]
        %v1230 = vld [vmem:[%s899 + $0x14] sm:$0xf]
        %v1231 = vld [vmem:[%s899 + $0x18] sm:$0xff]
        %v1232 = vld [vmem:[%s899 + $0x20] sm:$0xf]
        %v1233 = vld [vmem:[%s899 + $0x24] sm:$0xff]
        %v1234 = vld [vmem:[%s899 + $0x2c] sm:$0xf]
        %v1235 = vld [vmem:[%s899 + $0x30] sm:$0xff]
        %v1236 = vld [vmem:[%s899 + $0x38] sm:$0xf]
        %v1237 = vld [vmem:[%s899 + $0x3c] sm:$0xff]
        %v1238 = vld [vmem:[%s899 + $0x44] sm:$0xf]
        %v1239 = vld [vmem:[%s899 + $0x48] sm:$0xff]
        %v1240 = vld [vmem:[%s899 + $0x50] sm:$0xf]
        %v1241 = vld [vmem:[%s899 + $0x54] sm:$0xff]
        %v1242 = vld [vmem:[%s899 + $0x5c] sm:$0xf]
        %v1243 = vld [vmem:[%s899 + $0x60] sm:$0xff]
        %v1244 = vld [vmem:[%s899 + $0x68] sm:$0xf]
        %v1245 = vld [vmem:[%s899 + $0x6c] sm:$0xff]
        %v1246 = vld [vmem:[%s899 + $0x74] sm:$0xf]
        %v1247 = vld [vmem:[%s899 + $0x78] sm:$0xff]
        %v1248 = vld [vmem:[%s899 + $0x80] sm:$0xf]
        %v1249 = vld [vmem:[%s899 + $0x84] sm:$0xff]
        %v1250 = vld [vmem:[%s899 + $0x8c] sm:$0xf]
        %v1251 = vld [vmem:[%s899 + $0x90] sm:$0xff]
        %v1252 = vld [vmem:[%s899 + $0x98] sm:$0xf]
        %v1253 = vld [vmem:[%s899 + $0x9c] sm:$0xff]
        %v1254 = vld [vmem:[%s899 + $0xa4] sm:$0xf]
        %v1255 = vld [vmem:[%s899 + $0xa8] sm:$0xff]
        %v1256 = vld [vmem:[%s899 + $0xb0] sm:$0xf]
        %v1257 = vld [vmem:[%s899 + $0xb4] sm:$0xff]
        %v1258 = vld [vmem:[%s899 + $0xbc] sm:$0xf]
        %v1259 = vld [vmem:[%s908] sm:$0x7]
        %v1261 = vlaneseq
        %v1262 = vshrl.u32 %v1261, 7
        %v1263 = vsub.s32 0, %v1262
        %v1264 = vrot.slane %v1259, %v1263
        %v1265 = vlaneseq
        %v1266 = vshrl.u32 %v1265, 7
        %v1267 = vsub.s32 1, %v1266
        %v1268 = vrot.slane %v1259, %v1267
        %v1269 = vlaneseq
        %v1270 = vshrl.u32 %v1269, 7
        %v1271 = vsub.s32 2, %v1270
        %v1272 = vrot.slane %v1259, %v1271
        %v1308 = vunpack.c.l.b16 %v1227
        %v1309 = vunpack.c.h.b16 %v1227
        %v1310 = vunpack.c.l.b16 %v1228
        %v1311 = vunpack.c.l.b16 %v1229
        %v1312 = vunpack.c.h.b16 %v1229
        %v1313 = vunpack.c.l.b16 %v1230
        %v1314 = vunpack.c.l.b16 %v1231
        %v1315 = vunpack.c.h.b16 %v1231
        %v1316 = vunpack.c.l.b16 %v1232
        %v1317 = vunpack.c.l.b16 %v1233
        %v1318 = vunpack.c.h.b16 %v1233
        %v1319 = vunpack.c.l.b16 %v1234
        %v1320 = vunpack.c.l.b16 %v1235
        %v1321 = vunpack.c.h.b16 %v1235
        %v1322 = vunpack.c.l.b16 %v1236
        %v1323 = vunpack.c.l.b16 %v1237
        %v1324 = vunpack.c.h.b16 %v1237
        %v1325 = vunpack.c.l.b16 %v1238
        %v1326 = vunpack.c.l.b16 %v1239
        %v1327 = vunpack.c.h.b16 %v1239
        %v1328 = vunpack.c.l.b16 %v1240
        %v1329 = vunpack.c.l.b16 %v1241
        %v1330 = vunpack.c.h.b16 %v1241
        %v1331 = vunpack.c.l.b16 %v1242
        %v1332 = vunpack.c.l.b16 %v1243
        %v1333 = vunpack.c.h.b16 %v1243
        %v1334 = vunpack.c.l.b16 %v1244
        %v1335 = vunpack.c.l.b16 %v1245
        %v1336 = vunpack.c.h.b16 %v1245
        %v1337 = vunpack.c.l.b16 %v1246
        %v1338 = vunpack.c.l.b16 %v1247
        %v1339 = vunpack.c.h.b16 %v1247
        %v1340 = vunpack.c.l.b16 %v1248
        %v1341 = vunpack.c.l.b16 %v1249
        %v1342 = vunpack.c.h.b16 %v1249
        %v1343 = vunpack.c.l.b16 %v1250
        %v1344 = vunpack.c.l.b16 %v1251
        %v1345 = vunpack.c.h.b16 %v1251
        %v1346 = vunpack.c.l.b16 %v1252
        %v1347 = vunpack.c.l.b16 %v1253
        %v1348 = vunpack.c.h.b16 %v1253
        %v1349 = vunpack.c.l.b16 %v1254
        %v1350 = vunpack.c.l.b16 %v1255
        %v1351 = vunpack.c.h.b16 %v1255
        %v1352 = vunpack.c.l.b16 %v1256
        %v1353 = vunpack.c.l.b16 %v1257
        %v1354 = vunpack.c.h.b16 %v1257
        %v1355 = vunpack.c.l.b16 %v1258
        %v1356 = vpack.c.b16 %v1311, %v1308
        %v1357 = vpack.c.b16 %v1312, %v1309
        %v1358 = vpack.c.b16 %v1313, %v1310
        %v1359 = vpack.c.b16 %v1317, %v1314
        %v1360 = vpack.c.b16 %v1318, %v1315
        %v1361 = vpack.c.b16 %v1319, %v1316
        %v1362 = vpack.c.b16 %v1323, %v1320
        %v1363 = vpack.c.b16 %v1324, %v1321
        %v1364 = vpack.c.b16 %v1325, %v1322
        %v1365 = vpack.c.b16 %v1329, %v1326
        %v1366 = vpack.c.b16 %v1330, %v1327
        %v1367 = vpack.c.b16 %v1331, %v1328
        %v1368 = vpack.c.b16 %v1335, %v1332
        %v1369 = vpack.c.b16 %v1336, %v1333
        %v1370 = vpack.c.b16 %v1337, %v1334
        %v1371 = vpack.c.b16 %v1341, %v1338
        %v1372 = vpack.c.b16 %v1342, %v1339
        %v1373 = vpack.c.b16 %v1343, %v1340
        %v1374 = vpack.c.b16 %v1347, %v1344
        %v1375 = vpack.c.b16 %v1348, %v1345
        %v1376 = vpack.c.b16 %v1349, %v1346
        %v1377 = vpack.c.b16 %v1353, %v1350
        %v1378 = vpack.c.b16 %v1354, %v1351
        %v1379 = vpack.c.b16 %v1355, %v1352
        %1404 = vmatprep.subr.bf16.mxu0 %v1357
        %1405 = vmatpush1.bf16.msra.mxu0 %v1356
        %1406 = vmatprep.subr.bf16.mxu0 %v1360
        %1407 = vmatpush1.bf16.msra.mxu0 %v1359
        %1408 = vmatprep.subr.bf16.mxu0 %v1363
        %1409 = vmatpush1.bf16.msra.mxu0 %v1362
        %1410 = vmatprep.subr.bf16.mxu0 %v1366
        %1411 = vmatpush1.bf16.msra.mxu0 %v1365
        %1412 = vmatprep.subr.bf16.mxu0 %v1369
        %1413 = vmatpush1.bf16.msra.mxu0 %v1368
        %1414 = vmatprep.subr.bf16.mxu0 %v1372
        %1415 = vmatpush1.bf16.msra.mxu0 %v1371
        %1416 = vmatprep.subr.bf16.mxu0 %v1375
        %1417 = vmatpush1.bf16.msra.mxu0 %v1374
        %1418 = vmatprep.subr.bf16.mxu0 %v1378
        %1419 = vmatpush1.bf16.msra.mxu0 %v1377
        %1420 = vmatprep.subr.bf16.mxu0 0
        %1421 = vmatpush1.bf16.msra.mxu0 0
        %1422 = vmatprep.subr.bf16.mxu0 0
        %1423 = vmatpush1.bf16.msra.mxu0 0
        %1424 = vmatprep.subr.bf16.mxu0 0
        %1425 = vmatpush1.bf16.msra.mxu0 0
        %1426 = vmatprep.subr.bf16.mxu0 0
        %1427 = vmatpush1.bf16.msra.mxu0 0
        %1428 = vmatprep.subr.bf16.mxu0 0
        %1429 = vmatpush1.bf16.msra.mxu0 0
        %1430 = vmatprep.subr.bf16.mxu0 0
        %1431 = vmatpush1.bf16.msra.mxu0 0
        %1432 = vmatprep.subr.bf16.mxu0 0
        %1433 = vmatpush1.bf16.msra.mxu0 0
        %1434 = vmatprep.subr.bf16.mxu0 0
        %1435 = vmatpush1.bf16.msra.mxu0 0
        %1436 = vmatprep.mubr.bf16.mxu0 0
        %1437 = vmatmul.mubr.bf16.gmra.mrb[0].mxu0 %v1226
        %v1438 = vpop.f32.mrb[0].mxu0
        %v1439 = vadd.f32 %v1264, %v1438
        %v1440 = vpop.f32.mrb[0].mxu0
        %v1441 = vadd.f32 %v1268, %v1440
        %v1442 = vpop.f32.mrb[0].mxu0
        %v1443 = vadd.f32 %v1264, %v1442
        %v1444 = vpop.f32.mrb[0].mxu0
        %v1445 = vadd.f32 %v1268, %v1444
        %1446 = vdwg.mxu0
        %1447 = vmatprep.subr.bf16.mxu0 0
        %1448 = vmatpush1.bf16.msra.mxu0 %v1358
        %1449 = vmatprep.subr.bf16.mxu0 0
        %1450 = vmatpush1.bf16.msra.mxu0 %v1361
        %1451 = vmatprep.subr.bf16.mxu0 0
        %1452 = vmatpush1.bf16.msra.mxu0 %v1364
        %1453 = vmatprep.subr.bf16.mxu0 0
        %1454 = vmatpush1.bf16.msra.mxu0 %v1367
        %1455 = vmatprep.subr.bf16.mxu0 0
        %1456 = vmatpush1.bf16.msra.mxu0 %v1370
        %1457 = vmatprep.subr.bf16.mxu0 0
        %1458 = vmatpush1.bf16.msra.mxu0 %v1373
        %1459 = vmatprep.subr.bf16.mxu0 0
        %1460 = vmatpush1.bf16.msra.mxu0 %v1376
        %1461 = vmatprep.subr.bf16.mxu0 0
        %1462 = vmatpush1.bf16.msra.mxu0 %v1379
        %1463 = vmatprep.subr.bf16.mxu0 0
        %1464 = vmatpush1.bf16.msra.mxu0 0
        %1465 = vmatprep.subr.bf16.mxu0 0
        %1466 = vmatpush1.bf16.msra.mxu0 0
        %1467 = vmatprep.subr.bf16.mxu0 0
        %1468 = vmatpush1.bf16.msra.mxu0 0
        %1469 = vmatprep.subr.bf16.mxu0 0
        %1470 = vmatpush1.bf16.msra.mxu0 0
        %1471 = vmatprep.subr.bf16.mxu0 0
        %1472 = vmatpush1.bf16.msra.mxu0 0
        %1473 = vmatprep.subr.bf16.mxu0 0
        %1474 = vmatpush1.bf16.msra.mxu0 0
        %1475 = vmatprep.subr.bf16.mxu0 0
        %1476 = vmatpush1.bf16.msra.mxu0 0
        %1477 = vmatprep.subr.bf16.mxu0 0
        %1478 = vmatpush1.bf16.msra.mxu0 0
        %1479 = vmatprep.mubr.bf16.mxu0 0
        %1480 = vmatmul.mubr.bf16.gmra.mrb[0].mxu0 %v1226
        %v1481 = vpop.f32.mrb[0].mxu0
        %v1482 = vadd.f32 %v1272, %v1481
        %v1483 = vpop.f32.mrb[0].mxu0
        %v1484 = vpop.f32.mrb[0].mxu0
        %v1485 = vadd.f32 %v1272, %v1484
        %v1486 = vpop.f32.mrb[0].mxu0
        %1487 = vdwg.mxu0
        %v1488 = vld [vmem:[%s3] sm:$0xff]
        %v1489 = vld [vmem:[%s3 + $0x8] sm:$0xff]
        %v1490 = vpack.c.bf16 %v1443, %v1439
        %v1491 = vpack.c.bf16 %v1445, %v1441
        %v1492 = vpack.c.bf16 %v1485, %v1482
        %vm1493 = vcmask 261120
        %v1495 = vsel %vm1493, %v1490, 0
        %v1498 = vsel %vm1493, %v1491, 0
        %1500 = vmatprep.subr.bf16.mxu0 0
        %1501 = vmatpush1.bf16.xpose.msra.mxu0 %v1498
        %1502 = vmatprep.subr.bf16.mxu0 0
        %1503 = vmatpush1.bf16.xpose.msra.mxu0 0
        %1504 = vmatprep.subr.bf16.mxu0 0
        %1505 = vmatpush1.bf16.xpose.msra.mxu0 0
        %1506 = vmatprep.subr.bf16.mxu0 0
        %1507 = vmatpush1.bf16.xpose.msra.mxu0 0
        %1508 = vmatprep.subr.bf16.mxu0 0
        %1509 = vmatpush1.bf16.xpose.msra.mxu0 0
        %1510 = vmatprep.subr.bf16.mxu0 0
        %1511 = vmatpush1.bf16.xpose.msra.mxu0 0
        %1512 = vmatprep.subr.bf16.mxu0 0
        %1513 = vmatpush1.bf16.xpose.msra.mxu0 0
        %1514 = vmatprep.subr.bf16.mxu0 0
        %1515 = vmatpush1.bf16.xpose.msra.mxu0 0
        %1516 = vmatprep.subr.bf16.mxu0 0
        %1517 = vmatpush1.bf16.xpose.msra.mxu0 0
        %1518 = vmatprep.subr.bf16.mxu0 0
        %1519 = vmatpush1.bf16.xpose.msra.mxu0 0
        %1520 = vmatprep.subr.bf16.mxu0 0
        %1521 = vmatpush1.bf16.xpose.msra.mxu0 0
        %1522 = vmatprep.subr.bf16.mxu0 0
        %1523 = vmatpush1.bf16.xpose.msra.mxu0 0
        %1524 = vmatprep.subr.bf16.mxu0 0
        %1525 = vmatpush1.bf16.xpose.msra.mxu0 0
        %1526 = vmatprep.subr.bf16.mxu0 0
        %1527 = vmatpush1.bf16.xpose.msra.mxu0 0
        %1528 = vmatprep.subr.bf16.mxu0 0
        %1529 = vmatpush1.bf16.xpose.msra.mxu0 0
        %1530 = vmatprep.subr.bf16.mxu0 0
        %1531 = vmatpush1.bf16.xpose.msra.mxu0 0
        %1532 = vmatprep.mubr.bf16.mxu0 0
        %1533 = vmatmul.mubr.bf16.gmra.mrb[0].mxu0 %v1495
        %v1534 = vpop.f32.mrb[0].mxu0
        %v1535 = vadd.f32 %v1488, %v1534
        %v1536 = vpop.f32.mrb[0].mxu0
        %v1537 = vpop.f32.mrb[0].mxu0
        %v1538 = vadd.f32 %v1489, %v1537
        %v1539 = vpop.f32.mrb[0].mxu0
        %1540 = vdwg.mxu0
        %vm1541 = vcmask 130048
        %v1542 = vsel %vm1541, %v1535, -inf
        %1543 = vmax.xlane.f32.xlu0 %v1542
        %v1544 = vpop.xlane.xlu0 %1543
        %v1545 = vsel %vm1541, %v1538, -inf
        %1546 = vmax.xlane.f32.xlu0 %v1545
        %v1547 = vpop.xlane.xlu0 %1546
        %v1548 = vsub.f32 %v1535, %v1544
        %v1549 = vsub.f32 %v1538, %v1547
        %v1550 = vmul.f32 %v1548, 1.442695
        %v1551 = vpow.pop %v1550
        %v1552 = vmul.f32 %v1549, 1.442695
        %v1553 = vpow.pop %v1552
        %v1554 = vsel %vm1541, %v1551, 0.0
        %1555 = vadd.xlane.f32.xlu0 %v1554
        %v1556 = vpop.xlane.xlu0 %1555
        %v1557 = vsel %vm1541, %v1553, 0.0
        %1558 = vadd.xlane.f32.xlu0 %v1557
        %v1559 = vpop.xlane.xlu0 %1558
        %v1560 = vrcp.pop %v1556
        %v1561 = vrcp.pop %v1559
        %v1562 = vmul.f32 %v1551, %v1560
        %v1563 = vmul.f32 %v1553, %v1561
        %v1564 = vpack.c.bf16 %v1563, %v1562
        %v1566 = vsel %vm1541, %v1564, 0
        %1568 = vmatprep.subr.bf16.mxu0 0
        %1569 = vmatpush1.bf16.msra.mxu0 %v1492
        %1570 = vmatprep.subr.bf16.mxu0 0
        %1571 = vmatpush1.bf16.msra.mxu0 0
        %1572 = vmatprep.subr.bf16.mxu0 0
        %1573 = vmatpush1.bf16.msra.mxu0 0
        %1574 = vmatprep.subr.bf16.mxu0 0
        %1575 = vmatpush1.bf16.msra.mxu0 0
        %1576 = vmatprep.subr.bf16.mxu0 0
        %1577 = vmatpush1.bf16.msra.mxu0 0
        %1578 = vmatprep.subr.bf16.mxu0 0
        %1579 = vmatpush1.bf16.msra.mxu0 0
        %1580 = vmatprep.subr.bf16.mxu0 0
        %1581 = vmatpush1.bf16.msra.mxu0 0
        %1582 = vmatprep.subr.bf16.mxu0 0
        %1583 = vmatpush1.bf16.msra.mxu0 0
        %1584 = vmatprep.subr.bf16.mxu0 0
        %1585 = vmatpush1.bf16.msra.mxu0 0
        %1586 = vmatprep.subr.bf16.mxu0 0
        %1587 = vmatpush1.bf16.msra.mxu0 0
        %1588 = vmatprep.subr.bf16.mxu0 0
        %1589 = vmatpush1.bf16.msra.mxu0 0
        %1590 = vmatprep.subr.bf16.mxu0 0
        %1591 = vmatpush1.bf16.msra.mxu0 0
        %1592 = vmatprep.subr.bf16.mxu0 0
        %1593 = vmatpush1.bf16.msra.mxu0 0
        %1594 = vmatprep.subr.bf16.mxu0 0
        %1595 = vmatpush1.bf16.msra.mxu0 0
        %1596 = vmatprep.subr.bf16.mxu0 0
        %1597 = vmatpush1.bf16.msra.mxu0 0
        %1598 = vmatprep.subr.bf16.mxu0 0
        %1599 = vmatpush1.bf16.msra.mxu0 0
        %1600 = vmatprep.mubr.bf16.mxu0 0
        %1601 = vmatmul.mubr.bf16.gmra.mrb[0].mxu0 %v1566
        %v1602 = vpop.f32.mrb[0].mxu0
        %v1603 = vadd.f32 0.0, %v1602
        %v1604 = vpop.f32.mrb[0].mxu0
        %v1605 = vpop.f32.mrb[0].mxu0
        %v1606 = vadd.f32 0.0, %v1605
        %v1607 = vpop.f32.mrb[0].mxu0
        %1608 = vdwg.mxu0
        %1610 = vrot.lane.b32.xlu0 %v1490, 96
        %v1611 = vpop.permute.xlu0 %1610
        %1613 = vrot.lane.b32.xlu0 %v1491, 96
        %v1614 = vpop.permute.xlu0 %1613
        %v1616 = vsel %vm1493, %v1611, 0
        %v1619 = vsel %vm1493, %v1614, 0
        %1621 = vmatprep.subr.bf16.mxu0 0
        %1622 = vmatpush1.bf16.xpose.msra.mxu0 %v1619
        %1623 = vmatprep.subr.bf16.mxu0 0
        %1624 = vmatpush1.bf16.xpose.msra.mxu0 0
        %1625 = vmatprep.subr.bf16.mxu0 0
        %1626 = vmatpush1.bf16.xpose.msra.mxu0 0
        %1627 = vmatprep.subr.bf16.mxu0 0
        %1628 = vmatpush1.bf16.xpose.msra.mxu0 0
        %1629 = vmatprep.subr.bf16.mxu0 0
        %1630 = vmatpush1.bf16.xpose.msra.mxu0 0
        %1631 = vmatprep.subr.bf16.mxu0 0
        %1632 = vmatpush1.bf16.xpose.msra.mxu0 0
        %1633 = vmatprep.subr.bf16.mxu0 0
        %1634 = vmatpush1.bf16.xpose.msra.mxu0 0
        %1635 = vmatprep.subr.bf16.mxu0 0
        %1636 = vmatpush1.bf16.xpose.msra.mxu0 0
        %1637 = vmatprep.subr.bf16.mxu0 0
        %1638 = vmatpush1.bf16.xpose.msra.mxu0 0
        %1639 = vmatprep.subr.bf16.mxu0 0
        %1640 = vmatpush1.bf16.xpose.msra.mxu0 0
        %1641 = vmatprep.subr.bf16.mxu0 0
        %1642 = vmatpush1.bf16.xpose.msra.mxu0 0
        %1643 = vmatprep.subr.bf16.mxu0 0
        %1644 = vmatpush1.bf16.xpose.msra.mxu0 0
        %1645 = vmatprep.subr.bf16.mxu0 0
        %1646 = vmatpush1.bf16.xpose.msra.mxu0 0
        %1647 = vmatprep.subr.bf16.mxu0 0
        %1648 = vmatpush1.bf16.xpose.msra.mxu0 0
        %1649 = vmatprep.subr.bf16.mxu0 0
        %1650 = vmatpush1.bf16.xpose.msra.mxu0 0
        %1651 = vmatprep.subr.bf16.mxu0 0
        %1652 = vmatpush1.bf16.xpose.msra.mxu0 0
        %1653 = vmatprep.mubr.bf16.mxu0 0
        %1654 = vmatmul.mubr.bf16.gmra.mrb[0].mxu0 %v1616
        %v1655 = vpop.f32.mrb[0].mxu0
        %v1656 = vadd.f32 %v1488, %v1655
        %v1657 = vpop.f32.mrb[0].mxu0
        %v1658 = vpop.f32.mrb[0].mxu0
        %v1659 = vadd.f32 %v1489, %v1658
        %v1660 = vpop.f32.mrb[0].mxu0
        %1661 = vdwg.mxu0
        %v1662 = vsel %vm1541, %v1656, -inf
        %1663 = vmax.xlane.f32.xlu0 %v1662
        %v1664 = vpop.xlane.xlu0 %1663
        %v1665 = vsel %vm1541, %v1659, -inf
        %1666 = vmax.xlane.f32.xlu0 %v1665
        %v1667 = vpop.xlane.xlu0 %1666
        %v1668 = vsub.f32 %v1656, %v1664
        %v1669 = vsub.f32 %v1659, %v1667
        %v1670 = vmul.f32 %v1668, 1.442695
        %v1671 = vpow.pop %v1670
        %v1672 = vmul.f32 %v1669, 1.442695
        %v1673 = vpow.pop %v1672
        %v1674 = vsel %vm1541, %v1671, 0.0
        %1675 = vadd.xlane.f32.xlu0 %v1674
        %v1676 = vpop.xlane.xlu0 %1675
        %v1677 = vsel %vm1541, %v1673, 0.0
        %1678 = vadd.xlane.f32.xlu0 %v1677
        %v1679 = vpop.xlane.xlu0 %1678
        %v1680 = vrcp.pop %v1676
        %v1681 = vrcp.pop %v1679
        %v1682 = vmul.f32 %v1671, %v1680
        %v1683 = vmul.f32 %v1673, %v1681
        %v1684 = vpack.c.bf16 %v1683, %v1682
        %1686 = vrot.lane.b32.xlu0 %v1492, 96
        %v1687 = vpop.permute.xlu0 %1686
        %v1690 = vsel %vm1541, %v1684, 0
        %1692 = vmatprep.subr.bf16.mxu0 0
        %1693 = vmatpush1.bf16.msra.mxu0 %v1687
        %1694 = vmatprep.subr.bf16.mxu0 0
        %1695 = vmatpush1.bf16.msra.mxu0 0
        %1696 = vmatprep.subr.bf16.mxu0 0
        %1697 = vmatpush1.bf16.msra.mxu0 0
        %1698 = vmatprep.subr.bf16.mxu0 0
        %1699 = vmatpush1.bf16.msra.mxu0 0
        %1700 = vmatprep.subr.bf16.mxu0 0
        %1701 = vmatpush1.bf16.msra.mxu0 0
        %1702 = vmatprep.subr.bf16.mxu0 0
        %1703 = vmatpush1.bf16.msra.mxu0 0
        %1704 = vmatprep.subr.bf16.mxu0 0
        %1705 = vmatpush1.bf16.msra.mxu0 0
        %1706 = vmatprep.subr.bf16.mxu0 0
        %1707 = vmatpush1.bf16.msra.mxu0 0
        %1708 = vmatprep.subr.bf16.mxu0 0
        %1709 = vmatpush1.bf16.msra.mxu0 0
        %1710 = vmatprep.subr.bf16.mxu0 0
        %1711 = vmatpush1.bf16.msra.mxu0 0
        %1712 = vmatprep.subr.bf16.mxu0 0
        %1713 = vmatpush1.bf16.msra.mxu0 0
        %1714 = vmatprep.subr.bf16.mxu0 0
        %1715 = vmatpush1.bf16.msra.mxu0 0
        %1716 = vmatprep.subr.bf16.mxu0 0
        %1717 = vmatpush1.bf16.msra.mxu0 0
        %1718 = vmatprep.subr.bf16.mxu0 0
        %1719 = vmatpush1.bf16.msra.mxu0 0
        %1720 = vmatprep.subr.bf16.mxu0 0
        %1721 = vmatpush1.bf16.msra.mxu0 0
        %1722 = vmatprep.subr.bf16.mxu0 0
        %1723 = vmatpush1.bf16.msra.mxu0 0
        %1724 = vmatprep.mubr.bf16.mxu0 0
        %1725 = vmatmul.mubr.bf16.gmra.mrb[0].mxu0 %v1690
        %v1726 = vpop.f32.mrb[0].mxu0
        %v1727 = vadd.f32 0.0, %v1726
        %v1728 = vpop.f32.mrb[0].mxu0
        %v1729 = vpop.f32.mrb[0].mxu0
        %v1730 = vadd.f32 0.0, %v1729
        %v1731 = vpop.f32.mrb[0].mxu0
        %1732 = vdwg.mxu0
        %1733 = vrot.lane.b32.xlu0 %v1490, 64
        %v1734 = vpop.permute.xlu0 %1733
        %1735 = vrot.lane.b32.xlu0 %v1491, 64
        %v1736 = vpop.permute.xlu0 %1735
        %v1738 = vsel %vm1493, %v1734, 0
        %v1741 = vsel %vm1493, %v1736, 0
        %1743 = vmatprep.subr.bf16.mxu0 0
        %1744 = vmatpush1.bf16.xpose.msra.mxu0 %v1741
        %1745 = vmatprep.subr.bf16.mxu0 0
        %1746 = vmatpush1.bf16.xpose.msra.mxu0 0
        %1747 = vmatprep.subr.bf16.mxu0 0
        %1748 = vmatpush1.bf16.xpose.msra.mxu0 0
        %1749 = vmatprep.subr.bf16.mxu0 0
        %1750 = vmatpush1.bf16.xpose.msra.mxu0 0
        %1751 = vmatprep.subr.bf16.mxu0 0
        %1752 = vmatpush1.bf16.xpose.msra.mxu0 0
        %1753 = vmatprep.subr.bf16.mxu0 0
        %1754 = vmatpush1.bf16.xpose.msra.mxu0 0
        %1755 = vmatprep.subr.bf16.mxu0 0
        %1756 = vmatpush1.bf16.xpose.msra.mxu0 0
        %1757 = vmatprep.subr.bf16.mxu0 0
        %1758 = vmatpush1.bf16.xpose.msra.mxu0 0
        %1759 = vmatprep.subr.bf16.mxu0 0
        %1760 = vmatpush1.bf16.xpose.msra.mxu0 0
        %1761 = vmatprep.subr.bf16.mxu0 0
        %1762 = vmatpush1.bf16.xpose.msra.mxu0 0
        %1763 = vmatprep.subr.bf16.mxu0 0
        %1764 = vmatpush1.bf16.xpose.msra.mxu0 0
        %1765 = vmatprep.subr.bf16.mxu0 0
        %1766 = vmatpush1.bf16.xpose.msra.mxu0 0
        %1767 = vmatprep.subr.bf16.mxu0 0
        %1768 = vmatpush1.bf16.xpose.msra.mxu0 0
        %1769 = vmatprep.subr.bf16.mxu0 0
        %1770 = vmatpush1.bf16.xpose.msra.mxu0 0
        %1771 = vmatprep.subr.bf16.mxu0 0
        %1772 = vmatpush1.bf16.xpose.msra.mxu0 0
        %1773 = vmatprep.subr.bf16.mxu0 0
        %1774 = vmatpush1.bf16.xpose.msra.mxu0 0
        %1775 = vmatprep.mubr.bf16.mxu0 0
        %1776 = vmatmul.mubr.bf16.gmra.mrb[0].mxu0 %v1738
        %v1777 = vpop.f32.mrb[0].mxu0
        %v1778 = vadd.f32 %v1488, %v1777
        %v1779 = vpop.f32.mrb[0].mxu0
        %v1780 = vpop.f32.mrb[0].mxu0
        %v1781 = vadd.f32 %v1489, %v1780
        %v1782 = vpop.f32.mrb[0].mxu0
        %1783 = vdwg.mxu0
        %v1784 = vsel %vm1541, %v1778, -inf
        %1785 = vmax.xlane.f32.xlu0 %v1784
        %v1786 = vpop.xlane.xlu0 %1785
        %v1787 = vsel %vm1541, %v1781, -inf
        %1788 = vmax.xlane.f32.xlu0 %v1787
        %v1789 = vpop.xlane.xlu0 %1788
        %v1790 = vsub.f32 %v1778, %v1786
        %v1791 = vsub.f32 %v1781, %v1789
        %v1792 = vmul.f32 %v1790, 1.442695
        %v1793 = vpow.pop %v1792
        %v1794 = vmul.f32 %v1791, 1.442695
        %v1795 = vpow.pop %v1794
        %v1796 = vsel %vm1541, %v1793, 0.0
        %1797 = vadd.xlane.f32.xlu0 %v1796
        %v1798 = vpop.xlane.xlu0 %1797
        %v1799 = vsel %vm1541, %v1795, 0.0
        %1800 = vadd.xlane.f32.xlu0 %v1799
        %v1801 = vpop.xlane.xlu0 %1800
        %v1802 = vrcp.pop %v1798
        %v1803 = vrcp.pop %v1801
        %v1804 = vmul.f32 %v1793, %v1802
        %v1805 = vmul.f32 %v1795, %v1803
        %v1806 = vpack.c.bf16 %v1805, %v1804
        %1807 = vrot.lane.b32.xlu0 %v1492, 64
        %v1808 = vpop.permute.xlu0 %1807
        %v1811 = vsel %vm1541, %v1806, 0
        %1813 = vmatprep.subr.bf16.mxu0 0
        %1814 = vmatpush1.bf16.msra.mxu0 %v1808
        %1815 = vmatprep.subr.bf16.mxu0 0
        %1816 = vmatpush1.bf16.msra.mxu0 0
        %1817 = vmatprep.subr.bf16.mxu0 0
        %1818 = vmatpush1.bf16.msra.mxu0 0
        %1819 = vmatprep.subr.bf16.mxu0 0
        %1820 = vmatpush1.bf16.msra.mxu0 0
        %1821 = vmatprep.subr.bf16.mxu0 0
        %1822 = vmatpush1.bf16.msra.mxu0 0
        %1823 = vmatprep.subr.bf16.mxu0 0
        %1824 = vmatpush1.bf16.msra.mxu0 0
        %1825 = vmatprep.subr.bf16.mxu0 0
        %1826 = vmatpush1.bf16.msra.mxu0 0
        %1827 = vmatprep.subr.bf16.mxu0 0
        %1828 = vmatpush1.bf16.msra.mxu0 0
        %1829 = vmatprep.subr.bf16.mxu0 0
        %1830 = vmatpush1.bf16.msra.mxu0 0
        %1831 = vmatprep.subr.bf16.mxu0 0
        %1832 = vmatpush1.bf16.msra.mxu0 0
        %1833 = vmatprep.subr.bf16.mxu0 0
        %1834 = vmatpush1.bf16.msra.mxu0 0
        %1835 = vmatprep.subr.bf16.mxu0 0
        %1836 = vmatpush1.bf16.msra.mxu0 0
        %1837 = vmatprep.subr.bf16.mxu0 0
        %1838 = vmatpush1.bf16.msra.mxu0 0
        %1839 = vmatprep.subr.bf16.mxu0 0
        %1840 = vmatpush1.bf16.msra.mxu0 0
        %1841 = vmatprep.subr.bf16.mxu0 0
        %1842 = vmatpush1.bf16.msra.mxu0 0
        %1843 = vmatprep.subr.bf16.mxu0 0
        %1844 = vmatpush1.bf16.msra.mxu0 0
        %1845 = vmatprep.mubr.bf16.mxu0 0
        %1846 = vmatmul.mubr.bf16.gmra.mrb[0].mxu0 %v1811
        %v1847 = vpop.f32.mrb[0].mxu0
        %v1848 = vadd.f32 0.0, %v1847
        %v1849 = vpop.f32.mrb[0].mxu0
        %v1850 = vpop.f32.mrb[0].mxu0
        %v1851 = vadd.f32 0.0, %v1850
        %v1852 = vpop.f32.mrb[0].mxu0
        %1853 = vdwg.mxu0
        %1854 = vrot.lane.b32.xlu0 %v1490, 32
        %v1855 = vpop.permute.xlu0 %1854
        %1856 = vrot.lane.b32.xlu0 %v1491, 32
        %v1857 = vpop.permute.xlu0 %1856
        %v1859 = vsel %vm1493, %v1855, 0
        %v1862 = vsel %vm1493, %v1857, 0
        %1864 = vmatprep.subr.bf16.mxu0 0
        %1865 = vmatpush1.bf16.xpose.msra.mxu0 %v1862
        %1866 = vmatprep.subr.bf16.mxu0 0
        %1867 = vmatpush1.bf16.xpose.msra.mxu0 0
        %1868 = vmatprep.subr.bf16.mxu0 0
        %1869 = vmatpush1.bf16.xpose.msra.mxu0 0
        %1870 = vmatprep.subr.bf16.mxu0 0
        %1871 = vmatpush1.bf16.xpose.msra.mxu0 0
        %1872 = vmatprep.subr.bf16.mxu0 0
        %1873 = vmatpush1.bf16.xpose.msra.mxu0 0
        %1874 = vmatprep.subr.bf16.mxu0 0
        %1875 = vmatpush1.bf16.xpose.msra.mxu0 0
        %1876 = vmatprep.subr.bf16.mxu0 0
        %1877 = vmatpush1.bf16.xpose.msra.mxu0 0
        %1878 = vmatprep.subr.bf16.mxu0 0
        %1879 = vmatpush1.bf16.xpose.msra.mxu0 0
        %1880 = vmatprep.subr.bf16.mxu0 0
        %1881 = vmatpush1.bf16.xpose.msra.mxu0 0
        %1882 = vmatprep.subr.bf16.mxu0 0
        %1883 = vmatpush1.bf16.xpose.msra.mxu0 0
        %1884 = vmatprep.subr.bf16.mxu0 0
        %1885 = vmatpush1.bf16.xpose.msra.mxu0 0
        %1886 = vmatprep.subr.bf16.mxu0 0
        %1887 = vmatpush1.bf16.xpose.msra.mxu0 0
        %1888 = vmatprep.subr.bf16.mxu0 0
        %1889 = vmatpush1.bf16.xpose.msra.mxu0 0
        %1890 = vmatprep.subr.bf16.mxu0 0
        %1891 = vmatpush1.bf16.xpose.msra.mxu0 0
        %1892 = vmatprep.subr.bf16.mxu0 0
        %1893 = vmatpush1.bf16.xpose.msra.mxu0 0
        %1894 = vmatprep.subr.bf16.mxu0 0
        %1895 = vmatpush1.bf16.xpose.msra.mxu0 0
        %1896 = vmatprep.mubr.bf16.mxu0 0
        %1897 = vmatmul.mubr.bf16.gmra.mrb[0].mxu0 %v1859
        %v1898 = vpop.f32.mrb[0].mxu0
        %v1899 = vadd.f32 %v1488, %v1898
        %v1900 = vpop.f32.mrb[0].mxu0
        %v1901 = vpop.f32.mrb[0].mxu0
        %v1902 = vadd.f32 %v1489, %v1901
        %v1903 = vpop.f32.mrb[0].mxu0
        %1904 = vdwg.mxu0
        %v1905 = vsel %vm1541, %v1899, -inf
        %1906 = vmax.xlane.f32.xlu0 %v1905
        %v1907 = vpop.xlane.xlu0 %1906
        %v1908 = vsel %vm1541, %v1902, -inf
        %1909 = vmax.xlane.f32.xlu0 %v1908
        %v1910 = vpop.xlane.xlu0 %1909
        %v1911 = vsub.f32 %v1899, %v1907
        %v1912 = vsub.f32 %v1902, %v1910
        %v1913 = vmul.f32 %v1911, 1.442695
        %v1914 = vpow.pop %v1913
        %v1915 = vmul.f32 %v1912, 1.442695
        %v1916 = vpow.pop %v1915
        %v1917 = vsel %vm1541, %v1914, 0.0
        %1918 = vadd.xlane.f32.xlu0 %v1917
        %v1919 = vpop.xlane.xlu0 %1918
        %v1920 = vsel %vm1541, %v1916, 0.0
        %1921 = vadd.xlane.f32.xlu0 %v1920
        %v1922 = vpop.xlane.xlu0 %1921
        %v1923 = vrcp.pop %v1919
        %v1924 = vrcp.pop %v1922
        %v1925 = vmul.f32 %v1914, %v1923
        %v1926 = vmul.f32 %v1916, %v1924
        %v1927 = vpack.c.bf16 %v1926, %v1925
        %1928 = vrot.lane.b32.xlu0 %v1492, 32
        %v1929 = vpop.permute.xlu0 %1928
        %v1932 = vsel %vm1541, %v1927, 0
        %1934 = vmatprep.subr.bf16.mxu0 0
        %1935 = vmatpush1.bf16.msra.mxu0 %v1929
        %1936 = vmatprep.subr.bf16.mxu0 0
        %1937 = vmatpush1.bf16.msra.mxu0 0
        %1938 = vmatprep.subr.bf16.mxu0 0
        %1939 = vmatpush1.bf16.msra.mxu0 0
        %1940 = vmatprep.subr.bf16.mxu0 0
        %1941 = vmatpush1.bf16.msra.mxu0 0
        %1942 = vmatprep.subr.bf16.mxu0 0
        %1943 = vmatpush1.bf16.msra.mxu0 0
        %1944 = vmatprep.subr.bf16.mxu0 0
        %1945 = vmatpush1.bf16.msra.mxu0 0
        %1946 = vmatprep.subr.bf16.mxu0 0
        %1947 = vmatpush1.bf16.msra.mxu0 0
        %1948 = vmatprep.subr.bf16.mxu0 0
        %1949 = vmatpush1.bf16.msra.mxu0 0
        %1950 = vmatprep.subr.bf16.mxu0 0
        %1951 = vmatpush1.bf16.msra.mxu0 0
        %1952 = vmatprep.subr.bf16.mxu0 0
        %1953 = vmatpush1.bf16.msra.mxu0 0
        %1954 = vmatprep.subr.bf16.mxu0 0
        %1955 = vmatpush1.bf16.msra.mxu0 0
        %1956 = vmatprep.subr.bf16.mxu0 0
        %1957 = vmatpush1.bf16.msra.mxu0 0
        %1958 = vmatprep.subr.bf16.mxu0 0
        %1959 = vmatpush1.bf16.msra.mxu0 0
        %1960 = vmatprep.subr.bf16.mxu0 0
        %1961 = vmatpush1.bf16.msra.mxu0 0
        %1962 = vmatprep.subr.bf16.mxu0 0
        %1963 = vmatpush1.bf16.msra.mxu0 0
        %1964 = vmatprep.subr.bf16.mxu0 0
        %1965 = vmatpush1.bf16.msra.mxu0 0
        %1966 = vmatprep.mubr.bf16.mxu0 0
        %1967 = vmatmul.mubr.bf16.gmra.mrb[0].mxu0 %v1932
        %v1968 = vpop.f32.mrb[0].mxu0
        %v1969 = vadd.f32 0.0, %v1968
        %v1970 = vpop.f32.mrb[0].mxu0
        %v1971 = vpop.f32.mrb[0].mxu0
        %v1972 = vadd.f32 0.0, %v1971
        %v1973 = vpop.f32.mrb[0].mxu0
        %1974 = vdwg.mxu0
        %1977 = vrot.lane.b32.xlu0 %v1727, 32
        %v1978 = vpop.permute.xlu0 %1977
        %1979 = vrot.lane.b32.xlu0 %v1730, 32
        %v1980 = vpop.permute.xlu0 %1979
        %1985 = vrot.lane.b32.xlu0 %v1848, 64
        %v1986 = vpop.permute.xlu0 %1985
        %1987 = vrot.lane.b32.xlu0 %v1851, 64
        %v1988 = vpop.permute.xlu0 %1987
        %1993 = vrot.lane.b32.xlu0 %v1969, 96
        %v1994 = vpop.permute.xlu0 %1993
        %1995 = vrot.lane.b32.xlu0 %v1972, 96
        %v1996 = vpop.permute.xlu0 %1995
        %v1999 = vsel %vm1493, %v1603, %v1978
        %v2000 = vsel %vm1493, %v1606, %v1980
        %vm2001 = vcmask 523264
        %v2002 = vsel %vm2001, %v1999, %v1986
        %v2003 = vsel %vm2001, %v2000, %v1988
        %vm2004 = vcmask 785408
        %v2005 = vsel %vm2004, %v2002, %v1994
        %v2006 = vsel %vm2004, %v2003, %v1996
        %v2007 = vpack.c.bf16 %v2006, %v2005
        %v2008 = vld [vmem:[%s1097] sm:$0xf]
        %v2009 = vld [vmem:[%s1097 + $0x4] sm:$0xf]
        %v2010 = vld [vmem:[%s1097 + $0x8] sm:$0xf]
        %v2011 = vld [vmem:[%s1097 + $0xc] sm:$0xf]
        %v2012 = vld [vmem:[%s1097 + $0x10] sm:$0xf]
        %v2013 = vld [vmem:[%s1097 + $0x14] sm:$0xf]
        %v2014 = vld [vmem:[%s1097 + $0x18] sm:$0xf]
        %v2015 = vld [vmem:[%s1097 + $0x1c] sm:$0xf]
        %v2016 = vld [vmem:[%s1097 + $0x20] sm:$0xf]
        %v2017 = vld [vmem:[%s1097 + $0x24] sm:$0xf]
        %v2018 = vld [vmem:[%s1097 + $0x28] sm:$0xf]
        %v2019 = vld [vmem:[%s1097 + $0x2c] sm:$0xf]
        %v2020 = vld [vmem:[%s1097 + $0x30] sm:$0xf]
        %v2021 = vld [vmem:[%s1097 + $0x34] sm:$0xf]
        %v2022 = vld [vmem:[%s1097 + $0x38] sm:$0xf]
        %v2023 = vld [vmem:[%s1097 + $0x3c] sm:$0xf]
        %v2024 = vld [vmem:[%s1100] sm:$0x1]
        %v2026 = vlaneseq
        %v2027 = vshrl.u32 %v2026, 7
        %v2028 = vsub.s32 0, %v2027
        %v2029 = vrot.slane %v2024, %v2028
        %v2047 = vunpack.c.l.b16 %v2008
        %v2048 = vunpack.c.l.b16 %v2009
        %v2049 = vunpack.c.l.b16 %v2010
        %v2050 = vunpack.c.l.b16 %v2011
        %v2051 = vunpack.c.l.b16 %v2012
        %v2052 = vunpack.c.l.b16 %v2013
        %v2053 = vunpack.c.l.b16 %v2014
        %v2054 = vunpack.c.l.b16 %v2015
        %v2055 = vunpack.c.l.b16 %v2016
        %v2056 = vunpack.c.l.b16 %v2017
        %v2057 = vunpack.c.l.b16 %v2018
        %v2058 = vunpack.c.l.b16 %v2019
        %v2059 = vunpack.c.l.b16 %v2020
        %v2060 = vunpack.c.l.b16 %v2021
        %v2061 = vunpack.c.l.b16 %v2022
        %v2062 = vunpack.c.l.b16 %v2023
        %v2063 = vpack.c.b16 %v2048, %v2047
        %v2064 = vpack.c.b16 %v2050, %v2049
        %v2065 = vpack.c.b16 %v2052, %v2051
        %v2066 = vpack.c.b16 %v2054, %v2053
        %v2067 = vpack.c.b16 %v2056, %v2055
        %v2068 = vpack.c.b16 %v2058, %v2057
        %v2069 = vpack.c.b16 %v2060, %v2059
        %v2070 = vpack.c.b16 %v2062, %v2061
        %2079 = vmatprep.subr.bf16.mxu0 0
        %2080 = vmatpush1.bf16.msra.mxu0 %v2063
        %2081 = vmatprep.subr.bf16.mxu0 0
        %2082 = vmatpush1.bf16.msra.mxu0 %v2064
        %2083 = vmatprep.subr.bf16.mxu0 0
        %2084 = vmatpush1.bf16.msra.mxu0 %v2065
        %2085 = vmatprep.subr.bf16.mxu0 0
        %2086 = vmatpush1.bf16.msra.mxu0 %v2066
        %2087 = vmatprep.subr.bf16.mxu0 0
        %2088 = vmatpush1.bf16.msra.mxu0 %v2067
        %2089 = vmatprep.subr.bf16.mxu0 0
        %2090 = vmatpush1.bf16.msra.mxu0 %v2068
        %2091 = vmatprep.subr.bf16.mxu0 0
        %2092 = vmatpush1.bf16.msra.mxu0 %v2069
        %2093 = vmatprep.subr.bf16.mxu0 0
        %2094 = vmatpush1.bf16.msra.mxu0 %v2070
        %2095 = vmatprep.subr.bf16.mxu0 0
        %2096 = vmatpush1.bf16.msra.mxu0 0
        %2097 = vmatprep.subr.bf16.mxu0 0
        %2098 = vmatpush1.bf16.msra.mxu0 0
        %2099 = vmatprep.subr.bf16.mxu0 0
        %2100 = vmatpush1.bf16.msra.mxu0 0
        %2101 = vmatprep.subr.bf16.mxu0 0
        %2102 = vmatpush1.bf16.msra.mxu0 0
        %2103 = vmatprep.subr.bf16.mxu0 0
        %2104 = vmatpush1.bf16.msra.mxu0 0
        %2105 = vmatprep.subr.bf16.mxu0 0
        %2106 = vmatpush1.bf16.msra.mxu0 0
        %2107 = vmatprep.subr.bf16.mxu0 0
        %2108 = vmatpush1.bf16.msra.mxu0 0
        %2109 = vmatprep.subr.bf16.mxu0 0
        %2110 = vmatpush1.bf16.msra.mxu0 0
        %2111 = vmatprep.mubr.bf16.mxu0 0
        %2112 = vmatmul.mubr.bf16.gmra.mrb[0].mxu0 %v2007
        %v2113 = vpop.f32.mrb[0].mxu0
        %v2114 = vadd.f32 %v2029, %v2113
        %v2115 = vpop.f32.mrb[0].mxu0
        %v2116 = vpop.f32.mrb[0].mxu0
        %v2117 = vadd.f32 %v2029, %v2116
        %v2118 = vpop.f32.mrb[0].mxu0
        %2119 = vdwg.mxu0
        %v2120 = vadd.f32 %v1224, %v2114
        %v2121 = vadd.f32 %v1225, %v2117
        %v2122 = vld [vmem:[%s916] sm:$0x1]
        %v2123 = vld [vmem:[%s924] sm:$0x1]
        %2124 = vadd.xlane.f32.xlu0 %v2120
        %v2125 = vpop.xlane.xlu0 %2124
        %2126 = vadd.xlane.f32.xlu0 %v2121
        %v2127 = vpop.xlane.xlu0 %2126
        %v2128 = vrcp.pop 128.0
        %v2129 = vmul.f32 %v2125, %v2128
        %v2130 = vmul.f32 %v2127, %v2128
        %v2131 = vsub.f32 %v2120, %v2129
        %v2132 = vsub.f32 %v2121, %v2130
        %v2133 = vmul.f32 %v2131, %v2131
        %v2134 = vmul.f32 %v2132, %v2132
        %2135 = vadd.xlane.f32.xlu0 %v2133
        %v2136 = vpop.xlane.xlu0 %2135
        %2137 = vadd.xlane.f32.xlu0 %v2134
        %v2138 = vpop.xlane.xlu0 %2137
        %v2139 = vmul.f32 %v2136, %v2128
        %v2140 = vmul.f32 %v2138, %v2128
        %v2141 = vadd.f32 %v2139, 1e-05
        %v2142 = vadd.f32 %v2140, 1e-05
        %v2143 = vrsqrt.pop %v2141
        %v2144 = vrsqrt.pop %v2142
        %v2145 = vmul.f32 %v2131, %v2143
        %v2146 = vmul.f32 %v2132, %v2144
        %v2148 = vlaneseq
        %v2149 = vshrl.u32 %v2148, 7
        %v2150 = vsub.s32 0, %v2149
        %v2151 = vrot.slane %v2122, %v2150
        %v2153 = vmul.f32 %v2145, %v2151
        %v2154 = vmul.f32 %v2146, %v2151
        %v2156 = vlaneseq
        %v2157 = vshrl.u32 %v2156, 7
        %v2158 = vsub.s32 0, %v2157
        %v2159 = vrot.slane %v2123, %v2158
        %v2161 = vadd.f32 %v2153, %v2159
        %v2162 = vadd.f32 %v2154, %v2159
        %v2163 = vpack.c.bf16 %v2162, %v2161
        %v2164 = vld [vmem:[%s933] sm:$0xff]
        %v2165 = vld [vmem:[%s933 + $0x8] sm:$0xff]
        %v2166 = vld [vmem:[%s933 + $0x10] sm:$0xff]
        %v2167 = vld [vmem:[%s933 + $0x18] sm:$0xff]
        %v2168 = vld [vmem:[%s933 + $0x20] sm:$0xff]
        %v2169 = vld [vmem:[%s933 + $0x28] sm:$0xff]
        %v2170 = vld [vmem:[%s933 + $0x30] sm:$0xff]
        %v2171 = vld [vmem:[%s933 + $0x38] sm:$0xff]
        %v2172 = vld [vmem:[%s933 + $0x40] sm:$0xff]
        %v2173 = vld [vmem:[%s933 + $0x48] sm:$0xff]
        %v2174 = vld [vmem:[%s933 + $0x50] sm:$0xff]
        %v2175 = vld [vmem:[%s933 + $0x58] sm:$0xff]
        %v2176 = vld [vmem:[%s933 + $0x60] sm:$0xff]
        %v2177 = vld [vmem:[%s933 + $0x68] sm:$0xff]
        %v2178 = vld [vmem:[%s933 + $0x70] sm:$0xff]
        %v2179 = vld [vmem:[%s933 + $0x78] sm:$0xff]
        %v2180 = vld [vmem:[%s933 + $0x80] sm:$0xff]
        %v2181 = vld [vmem:[%s933 + $0x88] sm:$0xff]
        %v2182 = vld [vmem:[%s933 + $0x90] sm:$0xff]
        %v2183 = vld [vmem:[%s933 + $0x98] sm:$0xff]
        %v2184 = vld [vmem:[%s933 + $0xa0] sm:$0xff]
        %v2185 = vld [vmem:[%s933 + $0xa8] sm:$0xff]
        %v2186 = vld [vmem:[%s933 + $0xb0] sm:$0xff]
        %v2187 = vld [vmem:[%s933 + $0xb8] sm:$0xff]
        %v2188 = vld [vmem:[%s933 + $0xc0] sm:$0xff]
        %v2189 = vld [vmem:[%s933 + $0xc8] sm:$0xff]
        %v2190 = vld [vmem:[%s933 + $0xd0] sm:$0xff]
        %v2191 = vld [vmem:[%s933 + $0xd8] sm:$0xff]
        %v2192 = vld [vmem:[%s933 + $0xe0] sm:$0xff]
        %v2193 = vld [vmem:[%s933 + $0xe8] sm:$0xff]
        %v2194 = vld [vmem:[%s933 + $0xf0] sm:$0xff]
        %v2195 = vld [vmem:[%s933 + $0xf8] sm:$0xff]
        %v2196 = vld [vmem:[%s942] sm:$0xf]
        %v2198 = vlaneseq
        %v2199 = vshrl.u32 %v2198, 7
        %v2200 = vsub.s32 0, %v2199
        %v2201 = vrot.slane %v2196, %v2200
        %v2202 = vlaneseq
        %v2203 = vshrl.u32 %v2202, 7
        %v2204 = vsub.s32 1, %v2203
        %v2205 = vrot.slane %v2196, %v2204
        %v2206 = vlaneseq
        %v2207 = vshrl.u32 %v2206, 7
        %v2208 = vsub.s32 2, %v2207
        %v2209 = vrot.slane %v2196, %v2208
        %v2210 = vlaneseq
        %v2211 = vshrl.u32 %v2210, 7
        %v2212 = vsub.s32 3, %v2211
        %v2213 = vrot.slane %v2196, %v2212
        %v2250 = vunpack.c.l.b16 %v2164
        %v2251 = vunpack.c.h.b16 %v2164
        %v2252 = vunpack.c.l.b16 %v2165
        %v2253 = vunpack.c.h.b16 %v2165
        %v2254 = vunpack.c.l.b16 %v2166
        %v2255 = vunpack.c.h.b16 %v2166
        %v2256 = vunpack.c.l.b16 %v2167
        %v2257 = vunpack.c.h.b16 %v2167
        %v2258 = vunpack.c.l.b16 %v2168
        %v2259 = vunpack.c.h.b16 %v2168
        %v2260 = vunpack.c.l.b16 %v2169
        %v2261 = vunpack.c.h.b16 %v2169
        %v2262 = vunpack.c.l.b16 %v2170
        %v2263 = vunpack.c.h.b16 %v2170
        %v2264 = vunpack.c.l.b16 %v2171
        %v2265 = vunpack.c.h.b16 %v2171
        %v2266 = vunpack.c.l.b16 %v2172
        %v2267 = vunpack.c.h.b16 %v2172
        %v2268 = vunpack.c.l.b16 %v2173
        %v2269 = vunpack.c.h.b16 %v2173
        %v2270 = vunpack.c.l.b16 %v2174
        %v2271 = vunpack.c.h.b16 %v2174
        %v2272 = vunpack.c.l.b16 %v2175
        %v2273 = vunpack.c.h.b16 %v2175
        %v2274 = vunpack.c.l.b16 %v2176
        %v2275 = vunpack.c.h.b16 %v2176
        %v2276 = vunpack.c.l.b16 %v2177
        %v2277 = vunpack.c.h.b16 %v2177
        %v2278 = vunpack.c.l.b16 %v2178
        %v2279 = vunpack.c.h.b16 %v2178
        %v2280 = vunpack.c.l.b16 %v2179
        %v2281 = vunpack.c.h.b16 %v2179
        %v2282 = vunpack.c.l.b16 %v2180
        %v2283 = vunpack.c.h.b16 %v2180
        %v2284 = vunpack.c.l.b16 %v2181
        %v2285 = vunpack.c.h.b16 %v2181
        %v2286 = vunpack.c.l.b16 %v2182
        %v2287 = vunpack.c.h.b16 %v2182
        %v2288 = vunpack.c.l.b16 %v2183
        %v2289 = vunpack.c.h.b16 %v2183
        %v2290 = vunpack.c.l.b16 %v2184
        %v2291 = vunpack.c.h.b16 %v2184
        %v2292 = vunpack.c.l.b16 %v2185
        %v2293 = vunpack.c.h.b16 %v2185
        %v2294 = vunpack.c.l.b16 %v2186
        %v2295 = vunpack.c.h.b16 %v2186
        %v2296 = vunpack.c.l.b16 %v2187
        %v2297 = vunpack.c.h.b16 %v2187
        %v2298 = vunpack.c.l.b16 %v2188
        %v2299 = vunpack.c.h.b16 %v2188
        %v2300 = vunpack.c.l.b16 %v2189
        %v2301 = vunpack.c.h.b16 %v2189
        %v2302 = vunpack.c.l.b16 %v2190
        %v2303 = vunpack.c.h.b16 %v2190
        %v2304 = vunpack.c.l.b16 %v2191
        %v2305 = vunpack.c.h.b16 %v2191
        %v2306 = vunpack.c.l.b16 %v2192
        %v2307 = vunpack.c.h.b16 %v2192
        %v2308 = vunpack.c.l.b16 %v2193
        %v2309 = vunpack.c.h.b16 %v2193
        %v2310 = vunpack.c.l.b16 %v2194
        %v2311 = vunpack.c.h.b16 %v2194
        %v2312 = vunpack.c.l.b16 %v2195
        %v2313 = vunpack.c.h.b16 %v2195
        %v2314 = vpack.c.b16 %v2254, %v2250
        %v2315 = vpack.c.b16 %v2255, %v2251
        %v2316 = vpack.c.b16 %v2256, %v2252
        %v2317 = vpack.c.b16 %v2257, %v2253
        %v2318 = vpack.c.b16 %v2262, %v2258
        %v2319 = vpack.c.b16 %v2263, %v2259
        %v2320 = vpack.c.b16 %v2264, %v2260
        %v2321 = vpack.c.b16 %v2265, %v2261
        %v2322 = vpack.c.b16 %v2270, %v2266
        %v2323 = vpack.c.b16 %v2271, %v2267
        %v2324 = vpack.c.b16 %v2272, %v2268
        %v2325 = vpack.c.b16 %v2273, %v2269
        %v2326 = vpack.c.b16 %v2278, %v2274
        %v2327 = vpack.c.b16 %v2279, %v2275
        %v2328 = vpack.c.b16 %v2280, %v2276
        %v2329 = vpack.c.b16 %v2281, %v2277
        %v2330 = vpack.c.b16 %v2286, %v2282
        %v2331 = vpack.c.b16 %v2287, %v2283
        %v2332 = vpack.c.b16 %v2288, %v2284
        %v2333 = vpack.c.b16 %v2289, %v2285
        %v2334 = vpack.c.b16 %v2294, %v2290
        %v2335 = vpack.c.b16 %v2295, %v2291
        %v2336 = vpack.c.b16 %v2296, %v2292
        %v2337 = vpack.c.b16 %v2297, %v2293
        %v2338 = vpack.c.b16 %v2302, %v2298
        %v2339 = vpack.c.b16 %v2303, %v2299
        %v2340 = vpack.c.b16 %v2304, %v2300
        %v2341 = vpack.c.b16 %v2305, %v2301
        %v2342 = vpack.c.b16 %v2310, %v2306
        %v2343 = vpack.c.b16 %v2311, %v2307
        %v2344 = vpack.c.b16 %v2312, %v2308
        %v2345 = vpack.c.b16 %v2313, %v2309
        %2378 = vmatprep.subr.bf16.mxu0 %v2315
        %2379 = vmatpush1.bf16.msra.mxu0 %v2314
        %2380 = vmatprep.subr.bf16.mxu0 %v2319
        %2381 = vmatpush1.bf16.msra.mxu0 %v2318
        %2382 = vmatprep.subr.bf16.mxu0 %v2323
        %2383 = vmatpush1.bf16.msra.mxu0 %v2322
        %2384 = vmatprep.subr.bf16.mxu0 %v2327
        %2385 = vmatpush1.bf16.msra.mxu0 %v2326
        %2386 = vmatprep.subr.bf16.mxu0 %v2331
        %2387 = vmatpush1.bf16.msra.mxu0 %v2330
        %2388 = vmatprep.subr.bf16.mxu0 %v2335
        %2389 = vmatpush1.bf16.msra.mxu0 %v2334
        %2390 = vmatprep.subr.bf16.mxu0 %v2339
        %2391 = vmatpush1.bf16.msra.mxu0 %v2338
        %2392 = vmatprep.subr.bf16.mxu0 %v2343
        %2393 = vmatpush1.bf16.msra.mxu0 %v2342
        %2394 = vmatprep.subr.bf16.mxu0 0
        %2395 = vmatpush1.bf16.msra.mxu0 0
        %2396 = vmatprep.subr.bf16.mxu0 0
        %2397 = vmatpush1.bf16.msra.mxu0 0
        %2398 = vmatprep.subr.bf16.mxu0 0
        %2399 = vmatpush1.bf16.msra.mxu0 0
        %2400 = vmatprep.subr.bf16.mxu0 0
        %2401 = vmatpush1.bf16.msra.mxu0 0
        %2402 = vmatprep.subr.bf16.mxu0 0
        %2403 = vmatpush1.bf16.msra.mxu0 0
        %2404 = vmatprep.subr.bf16.mxu0 0
        %2405 = vmatpush1.bf16.msra.mxu0 0
        %2406 = vmatprep.subr.bf16.mxu0 0
        %2407 = vmatpush1.bf16.msra.mxu0 0
        %2408 = vmatprep.subr.bf16.mxu0 0
        %2409 = vmatpush1.bf16.msra.mxu0 0
        %2410 = vmatprep.mubr.bf16.mxu0 0
        %2411 = vmatmul.mubr.bf16.gmra.mrb[0].mxu0 %v2163
        %v2412 = vpop.f32.mrb[0].mxu0
        %v2413 = vadd.f32 %v2201, %v2412
        %v2414 = vpop.f32.mrb[0].mxu0
        %v2415 = vadd.f32 %v2205, %v2414
        %v2416 = vpop.f32.mrb[0].mxu0
        %v2417 = vadd.f32 %v2201, %v2416
        %v2418 = vpop.f32.mrb[0].mxu0
        %v2419 = vadd.f32 %v2205, %v2418
        %2420 = vdwg.mxu0
        %2421 = vmatprep.subr.bf16.mxu0 %v2317
        %2422 = vmatpush1.bf16.msra.mxu0 %v2316
        %2423 = vmatprep.subr.bf16.mxu0 %v2321
        %2424 = vmatpush1.bf16.msra.mxu0 %v2320
        %2425 = vmatprep.subr.bf16.mxu0 %v2325
        %2426 = vmatpush1.bf16.msra.mxu0 %v2324
        %2427 = vmatprep.subr.bf16.mxu0 %v2329
        %2428 = vmatpush1.bf16.msra.mxu0 %v2328
        %2429 = vmatprep.subr.bf16.mxu0 %v2333
        %2430 = vmatpush1.bf16.msra.mxu0 %v2332
        %2431 = vmatprep.subr.bf16.mxu0 %v2337
        %2432 = vmatpush1.bf16.msra.mxu0 %v2336
        %2433 = vmatprep.subr.bf16.mxu0 %v2341
        %2434 = vmatpush1.bf16.msra.mxu0 %v2340
        %2435 = vmatprep.subr.bf16.mxu0 %v2345
        %2436 = vmatpush1.bf16.msra.mxu0 %v2344
        %2437 = vmatprep.subr.bf16.mxu0 0
        %2438 = vmatpush1.bf16.msra.mxu0 0
        %2439 = vmatprep.subr.bf16.mxu0 0
        %2440 = vmatpush1.bf16.msra.mxu0 0
        %2441 = vmatprep.subr.bf16.mxu0 0
        %2442 = vmatpush1.bf16.msra.mxu0 0
        %2443 = vmatprep.subr.bf16.mxu0 0
        %2444 = vmatpush1.bf16.msra.mxu0 0
        %2445 = vmatprep.subr.bf16.mxu0 0
        %2446 = vmatpush1.bf16.msra.mxu0 0
        %2447 = vmatprep.subr.bf16.mxu0 0
        %2448 = vmatpush1.bf16.msra.mxu0 0
        %2449 = vmatprep.subr.bf16.mxu0 0
        %2450 = vmatpush1.bf16.msra.mxu0 0
        %2451 = vmatprep.subr.bf16.mxu0 0
        %2452 = vmatpush1.bf16.msra.mxu0 0
        %2453 = vmatprep.mubr.bf16.mxu0 0
        %2454 = vmatmul.mubr.bf16.gmra.mrb[0].mxu0 %v2163
        %v2455 = vpop.f32.mrb[0].mxu0
        %v2456 = vadd.f32 %v2209, %v2455
        %v2457 = vpop.f32.mrb[0].mxu0
        %v2458 = vadd.f32 %v2213, %v2457
        %v2459 = vpop.f32.mrb[0].mxu0
        %v2460 = vadd.f32 %v2209, %v2459
        %v2461 = vpop.f32.mrb[0].mxu0
        %v2462 = vadd.f32 %v2213, %v2461
        %2463 = vdwg.mxu0
        %v2464 = vmul.f32 %v2413, 0.5
        %v2465 = vmul.f32 %v2415, 0.5
        %v2466 = vmul.f32 %v2456, 0.5
        %v2467 = vmul.f32 %v2458, 0.5
        %v2468 = vmul.f32 %v2417, 0.5
        %v2469 = vmul.f32 %v2419, 0.5
        %v2470 = vmul.f32 %v2460, 0.5
        %v2471 = vmul.f32 %v2462, 0.5
        %v2472 = vmul.f32 %v2413, 0.70710677
        %v2473 = vmul.f32 %v2415, 0.70710677
        %v2474 = vmul.f32 %v2456, 0.70710677
        %v2475 = vmul.f32 %v2458, 0.70710677
        %v2476 = vmul.f32 %v2417, 0.70710677
        %v2477 = vmul.f32 %v2419, 0.70710677
        %v2478 = vmul.f32 %v2460, 0.70710677
        %v2479 = vmul.f32 %v2462, 0.70710677
        %v2480 = verf.f32.pop %v2472
        %v2481 = verf.f32.pop %v2473
        %v2482 = verf.f32.pop %v2474
        %v2483 = verf.f32.pop %v2475
        %v2484 = verf.f32.pop %v2476
        %v2485 = verf.f32.pop %v2477
        %v2486 = verf.f32.pop %v2478
        %v2487 = verf.f32.pop %v2479
        %v2488 = vadd.f32 %v2480, 1.0
        %v2489 = vadd.f32 %v2481, 1.0
        %v2490 = vadd.f32 %v2482, 1.0
        %v2491 = vadd.f32 %v2483, 1.0
        %v2492 = vadd.f32 %v2484, 1.0
        %v2493 = vadd.f32 %v2485, 1.0
        %v2494 = vadd.f32 %v2486, 1.0
        %v2495 = vadd.f32 %v2487, 1.0
        %v2496 = vmul.f32 %v2464, %v2488
        %v2497 = vmul.f32 %v2465, %v2489
        %v2498 = vmul.f32 %v2466, %v2490
        %v2499 = vmul.f32 %v2467, %v2491
        %v2500 = vmul.f32 %v2468, %v2492
        %v2501 = vmul.f32 %v2469, %v2493
        %v2502 = vmul.f32 %v2470, %v2494
        %v2503 = vmul.f32 %v2471, %v2495
        %v2504 = vpack.c.bf16 %v2500, %v2496
        %v2505 = vpack.c.bf16 %v2501, %v2497
        %v2506 = vpack.c.bf16 %v2502, %v2498
        %v2507 = vpack.c.bf16 %v2503, %v2499
        %v2508 = vld [vmem:[%s951] sm:$0xf]
        %v2509 = vld [vmem:[%s951 + $0x4] sm:$0xf]
        %v2510 = vld [vmem:[%s951 + $0x8] sm:$0xf]
        %v2511 = vld [vmem:[%s951 + $0xc] sm:$0xf]
        %v2512 = vld [vmem:[%s951 + $0x10] sm:$0xf]
        %v2513 = vld [vmem:[%s951 + $0x14] sm:$0xf]
        %v2514 = vld [vmem:[%s951 + $0x18] sm:$0xf]
        %v2515 = vld [vmem:[%s951 + $0x1c] sm:$0xf]
        %v2516 = vld [vmem:[%s951 + $0x20] sm:$0xf]
        %v2517 = vld [vmem:[%s951 + $0x24] sm:$0xf]
        %v2518 = vld [vmem:[%s951 + $0x28] sm:$0xf]
        %v2519 = vld [vmem:[%s951 + $0x2c] sm:$0xf]
        %v2520 = vld [vmem:[%s951 + $0x30] sm:$0xf]
        %v2521 = vld [vmem:[%s951 + $0x34] sm:$0xf]
        %v2522 = vld [vmem:[%s951 + $0x38] sm:$0xf]
        %v2523 = vld [vmem:[%s951 + $0x3c] sm:$0xf]
        %v2524 = vld [vmem:[%s951 + $0x40] sm:$0xf]
        %v2525 = vld [vmem:[%s951 + $0x44] sm:$0xf]
        %v2526 = vld [vmem:[%s951 + $0x48] sm:$0xf]
        %v2527 = vld [vmem:[%s951 + $0x4c] sm:$0xf]
        %v2528 = vld [vmem:[%s951 + $0x50] sm:$0xf]
        %v2529 = vld [vmem:[%s951 + $0x54] sm:$0xf]
        %v2530 = vld [vmem:[%s951 + $0x58] sm:$0xf]
        %v2531 = vld [vmem:[%s951 + $0x5c] sm:$0xf]
        %v2532 = vld [vmem:[%s951 + $0x60] sm:$0xf]
        %v2533 = vld [vmem:[%s951 + $0x64] sm:$0xf]
        %v2534 = vld [vmem:[%s951 + $0x68] sm:$0xf]
        %v2535 = vld [vmem:[%s951 + $0x6c] sm:$0xf]
        %v2536 = vld [vmem:[%s951 + $0x70] sm:$0xf]
        %v2537 = vld [vmem:[%s951 + $0x74] sm:$0xf]
        %v2538 = vld [vmem:[%s951 + $0x78] sm:$0xf]
        %v2539 = vld [vmem:[%s951 + $0x7c] sm:$0xf]
        %v2540 = vld [vmem:[%s951 + $0x80] sm:$0xf]
        %v2541 = vld [vmem:[%s951 + $0x84] sm:$0xf]
        %v2542 = vld [vmem:[%s951 + $0x88] sm:$0xf]
        %v2543 = vld [vmem:[%s951 + $0x8c] sm:$0xf]
        %v2544 = vld [vmem:[%s951 + $0x90] sm:$0xf]
        %v2545 = vld [vmem:[%s951 + $0x94] sm:$0xf]
        %v2546 = vld [vmem:[%s951 + $0x98] sm:$0xf]
        %v2547 = vld [vmem:[%s951 + $0x9c] sm:$0xf]
        %v2548 = vld [vmem:[%s951 + $0xa0] sm:$0xf]
        %v2549 = vld [vmem:[%s951 + $0xa4] sm:$0xf]
        %v2550 = vld [vmem:[%s951 + $0xa8] sm:$0xf]
        %v2551 = vld [vmem:[%s951 + $0xac] sm:$0xf]
        %v2552 = vld [vmem:[%s951 + $0xb0] sm:$0xf]
        %v2553 = vld [vmem:[%s951 + $0xb4] sm:$0xf]
        %v2554 = vld [vmem:[%s951 + $0xb8] sm:$0xf]
        %v2555 = vld [vmem:[%s951 + $0xbc] sm:$0xf]
        %v2556 = vld [vmem:[%s951 + $0xc0] sm:$0xf]
        %v2557 = vld [vmem:[%s951 + $0xc4] sm:$0xf]
        %v2558 = vld [vmem:[%s951 + $0xc8] sm:$0xf]
        %v2559 = vld [vmem:[%s951 + $0xcc] sm:$0xf]
        %v2560 = vld [vmem:[%s951 + $0xd0] sm:$0xf]
        %v2561 = vld [vmem:[%s951 + $0xd4] sm:$0xf]
        %v2562 = vld [vmem:[%s951 + $0xd8] sm:$0xf]
        %v2563 = vld [vmem:[%s951 + $0xdc] sm:$0xf]
        %v2564 = vld [vmem:[%s951 + $0xe0] sm:$0xf]
        %v2565 = vld [vmem:[%s951 + $0xe4] sm:$0xf]
        %v2566 = vld [vmem:[%s951 + $0xe8] sm:$0xf]
        %v2567 = vld [vmem:[%s951 + $0xec] sm:$0xf]
        %v2568 = vld [vmem:[%s951 + $0xf0] sm:$0xf]
        %v2569 = vld [vmem:[%s951 + $0xf4] sm:$0xf]
        %v2570 = vld [vmem:[%s951 + $0xf8] sm:$0xf]
        %v2571 = vld [vmem:[%s951 + $0xfc] sm:$0xf]
        %v2572 = vld [vmem:[%s959] sm:$0x1]
        %v2574 = vlaneseq
        %v2575 = vshrl.u32 %v2574, 7
        %v2576 = vsub.s32 0, %v2575
        %v2577 = vrot.slane %v2572, %v2576
        %v2643 = vunpack.c.l.b16 %v2508
        %v2644 = vunpack.c.l.b16 %v2509
        %v2645 = vunpack.c.l.b16 %v2510
        %v2646 = vunpack.c.l.b16 %v2511
        %v2647 = vunpack.c.l.b16 %v2512
        %v2648 = vunpack.c.l.b16 %v2513
        %v2649 = vunpack.c.l.b16 %v2514
        %v2650 = vunpack.c.l.b16 %v2515
        %v2651 = vunpack.c.l.b16 %v2516
        %v2652 = vunpack.c.l.b16 %v2517
        %v2653 = vunpack.c.l.b16 %v2518
        %v2654 = vunpack.c.l.b16 %v2519
        %v2655 = vunpack.c.l.b16 %v2520
        %v2656 = vunpack.c.l.b16 %v2521
        %v2657 = vunpack.c.l.b16 %v2522
        %v2658 = vunpack.c.l.b16 %v2523
        %v2659 = vunpack.c.l.b16 %v2524
        %v2660 = vunpack.c.l.b16 %v2525
        %v2661 = vunpack.c.l.b16 %v2526
        %v2662 = vunpack.c.l.b16 %v2527
        %v2663 = vunpack.c.l.b16 %v2528
        %v2664 = vunpack.c.l.b16 %v2529
        %v2665 = vunpack.c.l.b16 %v2530
        %v2666 = vunpack.c.l.b16 %v2531
        %v2667 = vunpack.c.l.b16 %v2532
        %v2668 = vunpack.c.l.b16 %v2533
        %v2669 = vunpack.c.l.b16 %v2534
        %v2670 = vunpack.c.l.b16 %v2535
        %v2671 = vunpack.c.l.b16 %v2536
        %v2672 = vunpack.c.l.b16 %v2537
        %v2673 = vunpack.c.l.b16 %v2538
        %v2674 = vunpack.c.l.b16 %v2539
        %v2675 = vunpack.c.l.b16 %v2540
        %v2676 = vunpack.c.l.b16 %v2541
        %v2677 = vunpack.c.l.b16 %v2542
        %v2678 = vunpack.c.l.b16 %v2543
        %v2679 = vunpack.c.l.b16 %v2544
        %v2680 = vunpack.c.l.b16 %v2545
        %v2681 = vunpack.c.l.b16 %v2546
        %v2682 = vunpack.c.l.b16 %v2547
        %v2683 = vunpack.c.l.b16 %v2548
        %v2684 = vunpack.c.l.b16 %v2549
        %v2685 = vunpack.c.l.b16 %v2550
        %v2686 = vunpack.c.l.b16 %v2551
        %v2687 = vunpack.c.l.b16 %v2552
        %v2688 = vunpack.c.l.b16 %v2553
        %v2689 = vunpack.c.l.b16 %v2554
        %v2690 = vunpack.c.l.b16 %v2555
        %v2691 = vunpack.c.l.b16 %v2556
        %v2692 = vunpack.c.l.b16 %v2557
        %v2693 = vunpack.c.l.b16 %v2558
        %v2694 = vunpack.c.l.b16 %v2559
        %v2695 = vunpack.c.l.b16 %v2560
        %v2696 = vunpack.c.l.b16 %v2561
        %v2697 = vunpack.c.l.b16 %v2562
        %v2698 = vunpack.c.l.b16 %v2563
        %v2699 = vunpack.c.l.b16 %v2564
        %v2700 = vunpack.c.l.b16 %v2565
        %v2701 = vunpack.c.l.b16 %v2566
        %v2702 = vunpack.c.l.b16 %v2567
        %v2703 = vunpack.c.l.b16 %v2568
        %v2704 = vunpack.c.l.b16 %v2569
        %v2705 = vunpack.c.l.b16 %v2570
        %v2706 = vunpack.c.l.b16 %v2571
        %v2707 = vpack.c.b16 %v2644, %v2643
        %v2708 = vpack.c.b16 %v2646, %v2645
        %v2709 = vpack.c.b16 %v2648, %v2647
        %v2710 = vpack.c.b16 %v2650, %v2649
        %v2711 = vpack.c.b16 %v2652, %v2651
        %v2712 = vpack.c.b16 %v2654, %v2653
        %v2713 = vpack.c.b16 %v2656, %v2655
        %v2714 = vpack.c.b16 %v2658, %v2657
        %v2715 = vpack.c.b16 %v2660, %v2659
        %v2716 = vpack.c.b16 %v2662, %v2661
        %v2717 = vpack.c.b16 %v2664, %v2663
        %v2718 = vpack.c.b16 %v2666, %v2665
        %v2719 = vpack.c.b16 %v2668, %v2667
        %v2720 = vpack.c.b16 %v2670, %v2669
        %v2721 = vpack.c.b16 %v2672, %v2671
        %v2722 = vpack.c.b16 %v2674, %v2673
        %v2723 = vpack.c.b16 %v2676, %v2675
        %v2724 = vpack.c.b16 %v2678, %v2677
        %v2725 = vpack.c.b16 %v2680, %v2679
        %v2726 = vpack.c.b16 %v2682, %v2681
        %v2727 = vpack.c.b16 %v2684, %v2683
        %v2728 = vpack.c.b16 %v2686, %v2685
        %v2729 = vpack.c.b16 %v2688, %v2687
        %v2730 = vpack.c.b16 %v2690, %v2689
        %v2731 = vpack.c.b16 %v2692, %v2691
        %v2732 = vpack.c.b16 %v2694, %v2693
        %v2733 = vpack.c.b16 %v2696, %v2695
        %v2734 = vpack.c.b16 %v2698, %v2697
        %v2735 = vpack.c.b16 %v2700, %v2699
        %v2736 = vpack.c.b16 %v2702, %v2701
        %v2737 = vpack.c.b16 %v2704, %v2703
        %v2738 = vpack.c.b16 %v2706, %v2705
        %2771 = vmatprep.subr.bf16.mxu0 0
        %2772 = vmatpush1.bf16.msra.mxu0 %v2707
        %2773 = vmatprep.subr.bf16.mxu0 0
        %2774 = vmatpush1.bf16.msra.mxu0 %v2708
        %2775 = vmatprep.subr.bf16.mxu0 0
        %2776 = vmatpush1.bf16.msra.mxu0 %v2709
        %2777 = vmatprep.subr.bf16.mxu0 0
        %2778 = vmatpush1.bf16.msra.mxu0 %v2710
        %2779 = vmatprep.subr.bf16.mxu0 0
        %2780 = vmatpush1.bf16.msra.mxu0 %v2711
        %2781 = vmatprep.subr.bf16.mxu0 0
        %2782 = vmatpush1.bf16.msra.mxu0 %v2712
        %2783 = vmatprep.subr.bf16.mxu0 0
        %2784 = vmatpush1.bf16.msra.mxu0 %v2713
        %2785 = vmatprep.subr.bf16.mxu0 0
        %2786 = vmatpush1.bf16.msra.mxu0 %v2714
        %2787 = vmatprep.subr.bf16.mxu0 0
        %2788 = vmatpush1.bf16.msra.mxu0 %v2715
        %2789 = vmatprep.subr.bf16.mxu0 0
        %2790 = vmatpush1.bf16.msra.mxu0 %v2716
        %2791 = vmatprep.subr.bf16.mxu0 0
        %2792 = vmatpush1.bf16.msra.mxu0 %v2717
        %2793 = vmatprep.subr.bf16.mxu0 0
        %2794 = vmatpush1.bf16.msra.mxu0 %v2718
        %2795 = vmatprep.subr.bf16.mxu0 0
        %2796 = vmatpush1.bf16.msra.mxu0 %v2719
        %2797 = vmatprep.subr.bf16.mxu0 0
        %2798 = vmatpush1.bf16.msra.mxu0 %v2720
        %2799 = vmatprep.subr.bf16.mxu0 0
        %2800 = vmatpush1.bf16.msra.mxu0 %v2721
        %2801 = vmatprep.subr.bf16.mxu0 0
        %2802 = vmatpush1.bf16.msra.mxu0 %v2722
        %2803 = vmatprep.mubr.bf16.mxu0 %v2505
        %2804 = vmatmul.mubr.bf16.gmra.mrb[0].mxu0 %v2504
        %v2805 = vpop.f32.mrb[0].mxu0
        %v2806 = vadd.f32 %v2577, %v2805
        %v2807 = vpop.f32.mrb[0].mxu0
        %v2808 = vpop.f32.mrb[0].mxu0
        %v2809 = vadd.f32 %v2577, %v2808
        %v2810 = vpop.f32.mrb[0].mxu0
        %2811 = vdwg.mxu0
        %2812 = vmatprep.subr.bf16.mxu0 0
        %2813 = vmatpush1.bf16.msra.mxu0 %v2723
        %2814 = vmatprep.subr.bf16.mxu0 0
        %2815 = vmatpush1.bf16.msra.mxu0 %v2724
        %2816 = vmatprep.subr.bf16.mxu0 0
        %2817 = vmatpush1.bf16.msra.mxu0 %v2725
        %2818 = vmatprep.subr.bf16.mxu0 0
        %2819 = vmatpush1.bf16.msra.mxu0 %v2726
        %2820 = vmatprep.subr.bf16.mxu0 0
        %2821 = vmatpush1.bf16.msra.mxu0 %v2727
        %2822 = vmatprep.subr.bf16.mxu0 0
        %2823 = vmatpush1.bf16.msra.mxu0 %v2728
        %2824 = vmatprep.subr.bf16.mxu0 0
        %2825 = vmatpush1.bf16.msra.mxu0 %v2729
        %2826 = vmatprep.subr.bf16.mxu0 0
        %2827 = vmatpush1.bf16.msra.mxu0 %v2730
        %2828 = vmatprep.subr.bf16.mxu0 0
        %2829 = vmatpush1.bf16.msra.mxu0 %v2731
        %2830 = vmatprep.subr.bf16.mxu0 0
        %2831 = vmatpush1.bf16.msra.mxu0 %v2732
        %2832 = vmatprep.subr.bf16.mxu0 0
        %2833 = vmatpush1.bf16.msra.mxu0 %v2733
        %2834 = vmatprep.subr.bf16.mxu0 0
        %2835 = vmatpush1.bf16.msra.mxu0 %v2734
        %2836 = vmatprep.subr.bf16.mxu0 0
        %2837 = vmatpush1.bf16.msra.mxu0 %v2735
        %2838 = vmatprep.subr.bf16.mxu0 0
        %2839 = vmatpush1.bf16.msra.mxu0 %v2736
        %2840 = vmatprep.subr.bf16.mxu0 0
        %2841 = vmatpush1.bf16.msra.mxu0 %v2737
        %2842 = vmatprep.subr.bf16.mxu0 0
        %2843 = vmatpush1.bf16.msra.mxu0 %v2738
        %2844 = vmatprep.mubr.bf16.mxu0 %v2507
        %2845 = vmatmul.mubr.bf16.gmra.mrb[0].mxu0 %v2506
        %v2846 = vpop.f32.mrb[0].mxu0
        %v2847 = vadd.f32 %v2806, %v2846
        %v2848 = vpop.f32.mrb[0].mxu0
        %v2849 = vpop.f32.mrb[0].mxu0
        %v2850 = vadd.f32 %v2809, %v2849
        %v2851 = vpop.f32.mrb[0].mxu0
        %2852 = vdwg.mxu0
        %v2853 = vadd.f32 %v2161, %v2847
        %v2854 = vadd.f32 %v2162, %v2850
        %v2855 = vld [vmem:[%s967] sm:$0x1]
        %v2856 = vld [vmem:[%s975] sm:$0x1]
        %2857 = vadd.xlane.f32.xlu0 %v2853
        %v2858 = vpop.xlane.xlu0 %2857
        %2859 = vadd.xlane.f32.xlu0 %v2854
        %v2860 = vpop.xlane.xlu0 %2859
        %v2861 = vmul.f32 %v2858, %v2128
        %v2862 = vmul.f32 %v2860, %v2128
        %v2863 = vsub.f32 %v2853, %v2861
        %v2864 = vsub.f32 %v2854, %v2862
        %v2865 = vmul.f32 %v2863, %v2863
        %v2866 = vmul.f32 %v2864, %v2864
        %2867 = vadd.xlane.f32.xlu0 %v2865
        %v2868 = vpop.xlane.xlu0 %2867
        %2869 = vadd.xlane.f32.xlu0 %v2866
        %v2870 = vpop.xlane.xlu0 %2869
        %v2871 = vmul.f32 %v2868, %v2128
        %v2872 = vmul.f32 %v2870, %v2128
        %v2873 = vadd.f32 %v2871, 1e-05
        %v2874 = vadd.f32 %v2872, 1e-05
        %v2875 = vrsqrt.pop %v2873
        %v2876 = vrsqrt.pop %v2874
        %v2877 = vmul.f32 %v2863, %v2875
        %v2878 = vmul.f32 %v2864, %v2876
        %v2880 = vlaneseq
        %v2881 = vshrl.u32 %v2880, 7
        %v2882 = vsub.s32 0, %v2881
        %v2883 = vrot.slane %v2855, %v2882
        %v2885 = vmul.f32 %v2877, %v2883
        %v2886 = vmul.f32 %v2878, %v2883
        %v2888 = vlaneseq
        %v2889 = vshrl.u32 %v2888, 7
        %v2890 = vsub.s32 0, %v2889
        %v2891 = vrot.slane %v2856, %v2890
        %v2893 = vadd.f32 %v2885, %v2891
        %v2894 = vadd.f32 %v2886, %v2891
        %2895 = vst [vmem:[#allocation2] sm:$0xff] %v2893
        %2896 = vst [vmem:[#allocation2 + $0x8] sm:$0xff] %v2894
        %p2897 = scmp.eq.s32.totalorder %s56, 1
        // Predicated region
        $region165: #{gesture_vit_forward.1} parent=107 // pred_check
          %p2898 = pneg %p2897
        $region166: #{gesture_vit_forward.1} parent=107 // pred_check_branch
          %2900 = sbr.rel (%p2898) target = $region168
        $region167: #{gesture_vit_forward.1} parent=107 // pred_region
          %v2901 = vrot.slane %v2893, 4
          %v2902 = vadd.f32 %v2893, %v2901
          %v2903 = vrot.slane %v2902, 2
          %v2904 = vadd.f32 %v2902, %v2903
          %v2905 = vrot.slane %v2904, 1
          %v2906 = vadd.f32 %v2904, %v2905
          %v2907 = vrot.slane %v2894, 4
          %v2908 = vadd.f32 %v2894, %v2907
          %v2909 = vrot.slane %v2908, 2
          %v2910 = vadd.f32 %v2908, %v2909
          %v2911 = vrot.slane %v2910, 1
          %v2912 = vadd.f32 %v2910, %v2911
          %v2913 = vrcp.pop 8.0
          %v2914 = vmul.f32 %v2906, %v2913
          %v2915 = vmul.f32 %v2912, %v2913
          %vm2918 = vcmask 1041409
          %v2919 = vsel %vm2918, %v2915, %v2914
          %2921 = vst [vmem:[#allocation25] sm:$0x3] %v2919
          %v2922 = vld [vmem:[%s16] sm:$0x1]
          %v2923 = vld [vmem:[#allocation20] sm:$0x1]
          %vm2924 = vcmask 1041408
          %v2925 = vsel %vm2924, %v2919, 0.0
          %2926 = vadd.xlane.f32.xlu0 %v2925
          %v2927 = vpop.xlane.xlu0 %2926
          %v2928 = vmul.f32 %v2927, %v2128
          %v2930 = vrot.slane %v2928, 1
          %v2933 = vsub.f32 %v2914, %v2928
          %v2934 = vsub.f32 %v2915, %v2930
          %v2935 = vmul.f32 %v2933, %v2933
          %v2936 = vmul.f32 %v2934, %v2934
          %v2939 = vrot.slane %v2936, 7
          %v2940 = vsel %vm2918, %v2939, %v2935
          %v2942 = vsel %vm2924, %v2940, 0.0
          %2943 = vadd.xlane.f32.xlu0 %v2942
          %v2944 = vpop.xlane.xlu0 %2943
          %v2945 = vmul.f32 %v2944, %v2128
          %v2946 = vadd.f32 %v2945, 1e-05
          %v2947 = vrsqrt.pop %v2946
          %v2949 = vrot.slane %v2947, 1
          %v2952 = vmul.f32 %v2933, %v2947
          %v2953 = vmul.f32 %v2934, %v2949
          %v2955 = vlaneseq
          %v2956 = vshrl.u32 %v2955, 7
          %v2957 = vsub.s32 0, %v2956
          %v2958 = vrot.slane %v2922, %v2957
          %v2960 = vmul.f32 %v2952, %v2958
          %v2961 = vmul.f32 %v2953, %v2958
          %v2963 = vlaneseq
          %v2964 = vshrl.u32 %v2963, 7
          %v2965 = vsub.s32 0, %v2964
          %v2966 = vrot.slane %v2923, %v2965
          %v2968 = vadd.f32 %v2960, %v2966
          %v2969 = vadd.f32 %v2961, %v2966
          %v2970 = vpack.c.bf16 %v2968, %v2968
          %v2971 = vpack.c.bf16 %v2969, %v2969
          %v2972 = vld [vmem:[%s18] sm:$0xf]
          %v2973 = vld [vmem:[%s18 + $0x4] sm:$0xf]
          %v2974 = vld [vmem:[%s18 + $0x8] sm:$0xf]
          %v2975 = vld [vmem:[%s18 + $0xc] sm:$0xf]
          %v2976 = vld [vmem:[%s18 + $0x10] sm:$0xf]
          %v2977 = vld [vmem:[%s18 + $0x14] sm:$0xf]
          %v2978 = vld [vmem:[%s18 + $0x18] sm:$0xf]
          %v2979 = vld [vmem:[%s18 + $0x1c] sm:$0xf]
          %v2980 = vld [vmem:[%s18 + $0x20] sm:$0xf]
          %v2981 = vld [vmem:[%s18 + $0x24] sm:$0xf]
          %v2982 = vld [vmem:[%s18 + $0x28] sm:$0xf]
          %v2983 = vld [vmem:[%s18 + $0x2c] sm:$0xf]
          %v2984 = vld [vmem:[%s18 + $0x30] sm:$0xf]
          %v2985 = vld [vmem:[%s18 + $0x34] sm:$0xf]
          %v2986 = vld [vmem:[%s18 + $0x38] sm:$0xf]
          %v2987 = vld [vmem:[%s18 + $0x3c] sm:$0xf]
          %v2988 = vld [vmem:[#allocation21] sm:$0x1]
          %v2990 = vlaneseq
          %v2991 = vshrl.u32 %v2990, 7
          %v2992 = vsub.s32 0, %v2991
          %v2993 = vrot.slane %v2988, %v2992
          %v2997 = vunpack.c.l.b16 %v2970
          %v2998 = vunpack.c.l.b16 %v2971
          %v2999 = vrot.slane %v2998, 7
          %v3000 = vsel %vm2918, %v2999, %v2997
          %v3001 = vpack.c.b16 %v3000, %v3000
          %v3019 = vunpack.c.l.b16 %v2972
          %v3020 = vunpack.c.l.b16 %v2973
          %v3021 = vunpack.c.l.b16 %v2974
          %v3022 = vunpack.c.l.b16 %v2975
          %v3023 = vunpack.c.l.b16 %v2976
          %v3024 = vunpack.c.l.b16 %v2977
          %v3025 = vunpack.c.l.b16 %v2978
          %v3026 = vunpack.c.l.b16 %v2979
          %v3027 = vunpack.c.l.b16 %v2980
          %v3028 = vunpack.c.l.b16 %v2981
          %v3029 = vunpack.c.l.b16 %v2982
          %v3030 = vunpack.c.l.b16 %v2983
          %v3031 = vunpack.c.l.b16 %v2984
          %v3032 = vunpack.c.l.b16 %v2985
          %v3033 = vunpack.c.l.b16 %v2986
          %v3034 = vunpack.c.l.b16 %v2987
          %v3035 = vpack.c.b16 %v3020, %v3019
          %v3036 = vpack.c.b16 %v3022, %v3021
          %v3037 = vpack.c.b16 %v3024, %v3023
          %v3038 = vpack.c.b16 %v3026, %v3025
          %v3039 = vpack.c.b16 %v3028, %v3027
          %v3040 = vpack.c.b16 %v3030, %v3029
          %v3041 = vpack.c.b16 %v3032, %v3031
          %v3042 = vpack.c.b16 %v3034, %v3033
          %3051 = vmatprep.subr.bf16.mxu0 0
          %3052 = vmatpush1.bf16.msra.mxu0 %v3035
          %3053 = vmatprep.subr.bf16.mxu0 0
          %3054 = vmatpush1.bf16.msra.mxu0 %v3036
          %3055 = vmatprep.subr.bf16.mxu0 0
          %3056 = vmatpush1.bf16.msra.mxu0 %v3037
          %3057 = vmatprep.subr.bf16.mxu0 0
          %3058 = vmatpush1.bf16.msra.mxu0 %v3038
          %3059 = vmatprep.subr.bf16.mxu0 0
          %3060 = vmatpush1.bf16.msra.mxu0 %v3039
          %3061 = vmatprep.subr.bf16.mxu0 0
          %3062 = vmatpush1.bf16.msra.mxu0 %v3040
          %3063 = vmatprep.subr.bf16.mxu0 0
          %3064 = vmatpush1.bf16.msra.mxu0 %v3041
          %3065 = vmatprep.subr.bf16.mxu0 0
          %3066 = vmatpush1.bf16.msra.mxu0 %v3042
          %3067 = vmatprep.subr.bf16.mxu0 0
          %3068 = vmatpush1.bf16.msra.mxu0 0
          %3069 = vmatprep.subr.bf16.mxu0 0
          %3070 = vmatpush1.bf16.msra.mxu0 0
          %3071 = vmatprep.subr.bf16.mxu0 0
          %3072 = vmatpush1.bf16.msra.mxu0 0
          %3073 = vmatprep.subr.bf16.mxu0 0
          %3074 = vmatpush1.bf16.msra.mxu0 0
          %3075 = vmatprep.subr.bf16.mxu0 0
          %3076 = vmatpush1.bf16.msra.mxu0 0
          %3077 = vmatprep.subr.bf16.mxu0 0
          %3078 = vmatpush1.bf16.msra.mxu0 0
          %3079 = vmatprep.subr.bf16.mxu0 0
          %3080 = vmatpush1.bf16.msra.mxu0 0
          %3081 = vmatprep.subr.bf16.mxu0 0
          %3082 = vmatpush1.bf16.msra.mxu0 0
          %3083 = vmatprep.mubr.bf16.mxu0 0
          %3084 = vmatmul.mubr.bf16.gmra.mrb[0].mxu0 %v3001
          %v3085 = vpop.f32.mrb[0].mxu0
          %v3086 = vadd.f32 %v2993, %v3085
          %v3087 = vpop.f32.mrb[0].mxu0
          %v3088 = vpop.f32.mrb[0].mxu0
          %v3089 = vpop.f32.mrb[0].mxu0
          %3090 = vdwg.mxu0
          %v3091 = vmul.f32 %v3086, 0.5
          %v3092 = vmul.f32 %v3086, 0.70710677
          %v3093 = verf.f32.pop %v3092
          %v3094 = vadd.f32 %v3093, 1.0
          %v3095 = vmul.f32 %v3091, %v3094
          %v3096 = vpack.c.bf16 %v3095, %v3095
          %v3097 = vld [vmem:[%s20] sm:$0xf]
          %v3098 = vld [vmem:[%s20 + $0x4] sm:$0xf]
          %v3099 = vld [vmem:[%s20 + $0x8] sm:$0xf]
          %v3100 = vld [vmem:[%s20 + $0xc] sm:$0xf]
          %v3101 = vld [vmem:[%s20 + $0x10] sm:$0xf]
          %v3102 = vld [vmem:[%s20 + $0x14] sm:$0xf]
          %v3103 = vld [vmem:[%s20 + $0x18] sm:$0xf]
          %v3104 = vld [vmem:[%s20 + $0x1c] sm:$0xf]
          %v3105 = vld [vmem:[#allocation23] sm:$0x1]
          %v3107 = vlaneseq
          %v3108 = vshrl.u32 %v3107, 7
          %v3109 = vsub.s32 0, %v3108
          %v3110 = vrot.slane %v3105, %v3109
          %v3120 = vunpack.c.l.b16 %v3097
          %v3121 = vunpack.c.l.b16 %v3098
          %v3122 = vunpack.c.l.b16 %v3099
          %v3123 = vunpack.c.l.b16 %v3100
          %v3124 = vunpack.c.l.b16 %v3101
          %v3125 = vunpack.c.l.b16 %v3102
          %v3126 = vunpack.c.l.b16 %v3103
          %v3127 = vunpack.c.l.b16 %v3104
          %v3128 = vpack.c.b16 %v3121, %v3120
          %v3129 = vpack.c.b16 %v3123, %v3122
          %v3130 = vpack.c.b16 %v3125, %v3124
          %v3131 = vpack.c.b16 %v3127, %v3126
          %v3137 = vsel %vm2001, %v3096, 0
          %3139 = vmatprep.subr.bf16.mxu0 0
          %3140 = vmatpush1.bf16.msra.mxu0 %v3128
          %3141 = vmatprep.subr.bf16.mxu0 0
          %3142 = vmatpush1.bf16.msra.mxu0 %v3129
          %3143 = vmatprep.subr.bf16.mxu0 0
          %3144 = vmatpush1.bf16.msra.mxu0 %v3130
          %3145 = vmatprep.subr.bf16.mxu0 0
          %3146 = vmatpush1.bf16.msra.mxu0 %v3131
          %3147 = vmatprep.subr.bf16.mxu0 0
          %3148 = vmatpush1.bf16.msra.mxu0 0
          %3149 = vmatprep.subr.bf16.mxu0 0
          %3150 = vmatpush1.bf16.msra.mxu0 0
          %3151 = vmatprep.subr.bf16.mxu0 0
          %3152 = vmatpush1.bf16.msra.mxu0 0
          %3153 = vmatprep.subr.bf16.mxu0 0
          %3154 = vmatpush1.bf16.msra.mxu0 0
          %3155 = vmatprep.subr.bf16.mxu0 0
          %3156 = vmatpush1.bf16.msra.mxu0 0
          %3157 = vmatprep.subr.bf16.mxu0 0
          %3158 = vmatpush1.bf16.msra.mxu0 0
          %3159 = vmatprep.subr.bf16.mxu0 0
          %3160 = vmatpush1.bf16.msra.mxu0 0
          %3161 = vmatprep.subr.bf16.mxu0 0
          %3162 = vmatpush1.bf16.msra.mxu0 0
          %3163 = vmatprep.subr.bf16.mxu0 0
          %3164 = vmatpush1.bf16.msra.mxu0 0
          %3165 = vmatprep.subr.bf16.mxu0 0
          %3166 = vmatpush1.bf16.msra.mxu0 0
          %3167 = vmatprep.subr.bf16.mxu0 0
          %3168 = vmatpush1.bf16.msra.mxu0 0
          %3169 = vmatprep.subr.bf16.mxu0 0
          %3170 = vmatpush1.bf16.msra.mxu0 0
          %3171 = vmatprep.mubr.bf16.mxu0 0
          %3172 = vmatmul.mubr.bf16.gmra.mrb[0].mxu0 %v3137
          %v3173 = vpop.f32.mrb[0].mxu0
          %v3174 = vadd.f32 %v3110, %v3173
          %v3175 = vpop.f32.mrb[0].mxu0
          %v3176 = vpop.f32.mrb[0].mxu0
          %v3177 = vpop.f32.mrb[0].mxu0
          %3178 = vdwg.mxu0
          %3179 = vst [vmem:[#allocation24] sm:$0x3] %v3174
        $region168: #{gesture_vit_forward.1} parent=107 // pred_fallthru
          _
        // Predicated region
        $region169: #{gesture_vit_forward.1} parent=107 // pred_check
          %p3180 = pneg %p591
        $region170: #{gesture_vit_forward.1} parent=107 // pred_check_branch
          %3182 = sbr.rel (%p3180) target = $region172
        $region171: #{gesture_vit_forward.1} parent=107 // pred_region
          %s3184 = ssub.s32 32, 32
          %3185 = vsyncadd [#allocation5], %s3184
          %s3187 = sshll.u32 [#allocation24], 4
          %s3188 = int_to_ptr.vmem [resolvable:$true] %s3187
          %3190 = dma.vmem_to_hbm [thread:$0]  %s3188, 32, %s22, [#allocation5]
        $region172: #{gesture_vit_forward.1} parent=107 // pred_fallthru
          _
        // Predicated region
        $region173: #{gesture_vit_forward.1} parent=107 // pred_check
          %p3191 = pneg %p612
        $region174: #{gesture_vit_forward.1} parent=107 // pred_check_branch
          %3193 = sbr.rel (%p3191) target = $region176
        $region175: #{gesture_vit_forward.1} parent=107 // pred_region
          %s3195 = ssub.s32 32, 32
          %3196 = vsyncadd [#allocation26], %s3195
          %s3198 = sshll.u32 [#allocation25], 4
          %s3199 = int_to_ptr.vmem [resolvable:$true] %s3198
          %3201 = dma.vmem_to_hbm [thread:$0]  %s3199, 32, %s23, [#allocation26]
        $region176: #{gesture_vit_forward.1} parent=107 // pred_fallthru
          _
        // Predicated region
        $region177: #{gesture_vit_forward.1} parent=107 // pred_check
          %p3202 = pneg %p591
        $region178: #{gesture_vit_forward.1} parent=107 // pred_check_branch
          %3204 = sbr.rel (%p3202) target = $region180
        $region179: #{gesture_vit_forward.1} parent=107 // pred_region
          %3205 = dma.done [#allocation5], 32
        $region180: #{gesture_vit_forward.1} parent=107 // pred_fallthru
          _
        // Predicated region
        $region181: #{gesture_vit_forward.1} parent=107 // pred_check
          %p3206 = pneg %p612
        $region182: #{gesture_vit_forward.1} parent=107 // pred_check_branch
          %3208 = sbr.rel (%p3206) target = $region184
        $region183: #{gesture_vit_forward.1} parent=107 // pred_region
          %3209 = dma.done [#allocation26], 32
        $region184: #{gesture_vit_forward.1} parent=107 // pred_fallthru
          _
      $region108: #{gesture_vit_forward.1} parent=5 // pred_fallthru
        _
      %p3210 = scmp.le.s32.totalorder 2, %s51
      // Predicated region
      $region185: #{gesture_vit_forward.1} parent=5 // pred_check
        %p3211 = pneg %p3210
      $region186: #{gesture_vit_forward.1} parent=5 // pred_check_branch
        %3213 = sbr.rel (%p3211) target = $region188
      $region187: #{gesture_vit_forward.1} parent=5 // pred_region
        %s3214 = ssub.s32 %s51, 2
      $region188: #{gesture_vit_forward.1} parent=5 // pred_fallthru
        _
    $region6: #{gesture_vit_forward.1} parent=1 // loop_footer
      %s55 = sadd.s32 1, %s51
    $region7: #{gesture_vit_forward.1} parent=1 // loop_footer_branch
      %50 = sbr.rel target = $region3
    $region8: #{gesture_vit_forward.1} parent=1 // loop_exit
      _
    %3215 = vsyncpa [#allocation4], 1
    %s3216 = scalar_lea.sflag [#allocation4], 1
    %3217 = vsyncpa %s3216, 1
    %3218 = vsyncpa [#allocation7], 1
    %s3219 = scalar_lea.sflag [#allocation7], 1
    %3220 = vsyncpa %s3219, 1
    %3221 = vsyncpa [#allocation10], 1
    %s3222 = scalar_lea.sflag [#allocation10], 1
    %3223 = vsyncpa %s3222, 1
    %3224 = vsyncpa [#allocation13], 1
    %s3225 = scalar_lea.sflag [#allocation13], 1
    %3226 = vsyncpa %s3225, 1
    %3227 = vsyncpa [#allocation16], 1
    %s3228 = scalar_lea.sflag [#allocation16], 1
    %3229 = vsyncpa %s3228, 1
    %3230 = vsyncpa [#allocation19], 1
    %s3231 = scalar_lea.sflag [#allocation19], 1
    %3232 = vsyncpa %s3231, 1
    %3233 = vsyncpa [#allocation22], 1
    %3234 = vsyncpa [#allocation5], 1
    %s3235 = scalar_lea.sflag [#allocation5], 1
    %3236 = vsyncpa %s3235, 1
    %3237 = vsyncpa [#allocation26], 1

</llo_original>
